<compile_context>
chip_gen: v7x
topology: tpu7x:2x2x1
jax: 0.10.0
libtpu: 0.0.40
codegen_flags: <defaults>
</compile_context>

<pallas_src>
import functools

import jax
import jax.numpy as jnp
from jax.experimental import pallas as pl
from jax.experimental.pallas import tpu as pltpu

LANE = 128  # vreg lane width; conv output channels are padded to this.


# ----------------------------------------------------------------------------
# Pallas kernel 1: fused  out = relu(x @ w + b)   (used for both convs)
# Whole-array single-block call; w is bf16, accumulation f32, epilogue f32.
# Output N is padded to 128 lanes by the caller -> unmasked stores.
# ----------------------------------------------------------------------------
def _matmul_bias_relu_kernel(x_ref, w_ref, b_ref, o_ref):
    acc = jnp.dot(x_ref[...].astype(jnp.bfloat16), w_ref[...],
                  preferred_element_type=jnp.float32)
    acc = jnp.maximum(acc + b_ref[...], 0.0)          # (1, N) broadcasts over rows
    o_ref[...] = acc.astype(o_ref.dtype)


def conv_matmul(x, w_bf16, b_f32):
    """x: (M, K) f32, w: (K, 128) bf16, b: (1, 128) f32 -> (M, 128) f32."""
    M, K = x.shape
    K2, N = w_bf16.shape
    assert K == K2, (K, K2)
    return pl.pallas_call(
        _matmul_bias_relu_kernel,
        out_shape=jax.ShapeDtypeStruct((M, N), jnp.float32),
    )(x, w_bf16, b_f32)


# ----------------------------------------------------------------------------
# Pallas kernel 2: fused FC stack
#   out = relu(relu(x @ W1 + b1) @ W2 + b2) @ W3 + b3
# fc1 is K-tiled over the grid (reduction axis, "arbitrary"); W2/W3/biases are
# VMEM-resident across the whole grid; fc2/fc3 run in the finalize step.
# ----------------------------------------------------------------------------
def _fc_stack_kernel(x_ref, w1_ref, b1_ref, w2_ref, b2_ref, w3_ref, b3_ref,
                     o_ref, acc_ref):
    k = pl.program_id(0)

    @pl.when(k == 0)
    def _():
        acc_ref[...] = jnp.zeros_like(acc_ref)

    # fc1 partial product for this K-tile (bf16 MXU inputs, f32 accumulate)
    acc_ref[...] += jnp.dot(x_ref[...].astype(jnp.bfloat16), w1_ref[...],
                            preferred_element_type=jnp.float32)

    @pl.when(k == pl.num_programs(0) - 1)
    def _():
        h1 = jnp.maximum(acc_ref[...] + b1_ref[...], 0.0)        # (Mp, 512) f32
        h2 = jnp.dot(h1.astype(jnp.bfloat16), w2_ref[...],
                     preferred_element_type=jnp.float32) + b2_ref[...]
        h2 = jnp.maximum(h2, 0.0)                                 # (Mp, 256) f32
        h3 = jnp.dot(h2.astype(jnp.bfloat16), w3_ref[...],
                     preferred_element_type=jnp.float32) + b3_ref[...]
        o_ref[...] = h3.astype(o_ref.dtype)                       # (Mp, 128) f32


def fc_stack(x, w1, b1, w2, b2, w3, b3, *, tk=1280):
    """x: (Mp, 6400) f32; w1: (6400, 512) bf16; w2: (512, 256) bf16;
    w3: (256, 128) bf16 (zero-padded cols); biases f32 (1, N). -> (Mp, 128)."""
    Mp, K = x.shape
    N1 = w1.shape[1]
    N2 = w2.shape[1]
    N3 = w3.shape[1]
    assert K % tk == 0, (K, tk)

    return pl.pallas_call(
        _fc_stack_kernel,
        out_shape=jax.ShapeDtypeStruct((Mp, N3), jnp.float32),
        grid_spec=pltpu.PrefetchScalarGridSpec(
            num_scalar_prefetch=0,
            grid=(K // tk,),
            in_specs=[
                pl.BlockSpec((Mp, tk), lambda k: (0, k)),   # x K-tiles
                pl.BlockSpec((tk, N1), lambda k: (k, 0)),   # W1 K-tiles (streamed)
                pl.BlockSpec((1, N1), lambda k: (0, 0)),    # b1 (resident)
                pl.BlockSpec((N1, N2), lambda k: (0, 0)),   # W2 (resident)
                pl.BlockSpec((1, N2), lambda k: (0, 0)),    # b2
                pl.BlockSpec((N2, N3), lambda k: (0, 0)),   # W3 (resident, padded)
                pl.BlockSpec((1, N3), lambda k: (0, 0)),    # b3 (padded)
            ],
            out_specs=pl.BlockSpec((Mp, N3), lambda k: (0, 0)),
            scratch_shapes=[pltpu.VMEM((Mp, N1), jnp.float32)],
        ),
        compiler_params=pltpu.CompilerParams(
            dimension_semantics=("arbitrary",)),   # K is a reduction axis
    )(x, w1, b1, w2, b2, w3, b3)


# ----------------------------------------------------------------------------
# Glue: im2col patch extraction (pure reshape / strided-slice, no compute)
# ----------------------------------------------------------------------------
def im2col_nhwc(x_nhwc, ksize, stride):
    """x: (B, H, W, C) -> patches (B*OH*OW, C*ksize*ksize) with feature order
    (c_in, kh, kw) to match PyTorch's Conv2d weight.reshape(out, -1)."""
    B, H, W, C = x_nhwc.shape
    OH = (H - ksize) // stride + 1
    OW = (W - ksize) // stride + 1
    cols = []
    for kh in range(ksize):
        for kw in range(ksize):
            patch = x_nhwc[:, kh:kh + stride * (OH - 1) + 1:stride,
                              kw:kw + stride * (OW - 1) + 1:stride, :]
            cols.append(patch)                      # (B, OH, OW, C)
    p = jnp.stack(cols, axis=3)                     # (B, OH, OW, K*K, C)
    p = jnp.transpose(p, (0, 1, 2, 4, 3))           # (B, OH, OW, C, K*K)
    return p.reshape(B * OH * OW, C * ksize * ksize), OH, OW


# ----------------------------------------------------------------------------
# Parameter construction (deterministic, synthetic) + kernel-friendly prep
# ----------------------------------------------------------------------------
def init_params(key):
    ks = jax.random.split(key, 10)

    def w(k, shape, fan_in):
        return jax.random.normal(k, shape, jnp.float32) / jnp.sqrt(fan_in)

    return {
        # conv weights in PyTorch layout (out_ch, in_ch, kh, kw)
        "w1": w(ks[0], (32, 1, 8, 8), 1 * 8 * 8),
        "b1": w(ks[1], (32,), 1 * 8 * 8),
        "w2": w(ks[2], (64, 32, 4, 4), 32 * 4 * 4),
        "b2": w(ks[3], (64,), 32 * 4 * 4),
        # fc weights stored as (in, out) so forward is x @ W
        "wf1": w(ks[4], (6400, 512), 6400),
        "bf1": w(ks[5], (512,), 6400),
        "wf2": w(ks[6], (512, 256), 512),
        "bf2": w(ks[7], (256,), 512),
        "wf3": w(ks[8], (256, 3), 256),
        "bf3": w(ks[9], (3,), 256),
    }


def prepare_params(params):
    """One-time conversion to the layouts the kernels want:
    conv weights -> im2col matmul form, conv/fc3 N padded to 128 lanes,
    all weights bf16 (HBM traffic), biases kept f32 (v5e-friendly epilogue)."""
    def pad_cols(a, n):
        return jnp.pad(a, ((0, 0), (0, n - a.shape[1])))

    def pad_vec(a, n):
        return jnp.pad(a, ((0, n - a.shape[0]),))

    w1m = params["w1"].reshape(32, -1).T            # (64, 32)
    w2m = params["w2"].reshape(64, -1).T            # (512, 64)

    return {
        "w1": pad_cols(w1m, LANE).astype(jnp.bfloat16),             # (64, 128)
        "b1": pad_vec(params["b1"], LANE).reshape(1, LANE),          # (1, 128) f32
        "w2": pad_cols(w2m, LANE).astype(jnp.bfloat16),              # (512, 128)
        "b2": pad_vec(params["b2"], LANE).reshape(1, LANE),
        "wf1": params["wf1"].astype(jnp.bfloat16),                   # (6400, 512)
        "bf1": params["bf1"].reshape(1, 512),
        "wf2": params["wf2"].astype(jnp.bfloat16),                   # (512, 256)
        "bf2": params["bf2"].reshape(1, 256),
        "wf3": pad_cols(params["wf3"], LANE).astype(jnp.bfloat16),   # (256, 128)
        "bf3": pad_vec(params["bf3"], LANE).reshape(1, LANE),
    }


# ----------------------------------------------------------------------------
# Forward pass (matches QNetwork.forward on NCHW input)
# ----------------------------------------------------------------------------
def qnetwork_forward(kp, x_nchw):
    B = x_nchw.shape[0]
    x = jnp.transpose(x_nchw, (0, 2, 3, 1))                        # NCHW -> NHWC

    # conv1: 1 -> 32, k=8, s=4, + relu   (N padded to 128, sliced back)
    p1, oh1, ow1 = im2col_nhwc(x, ksize=8, stride=4)               # (B*22*22, 64)
    h1 = conv_matmul(p1, kp["w1"], kp["b1"])                       # (B*484, 128)
    h1 = h1[:, :32].reshape(B, oh1, ow1, 32)                       # NHWC

    # conv2: 32 -> 64, k=4, s=2, + relu
    p2, oh2, ow2 = im2col_nhwc(h1, ksize=4, stride=2)              # (B*100, 512)
    h2 = conv_matmul(p2, kp["w2"], kp["b2"])                       # (B*100, 128)
    h2 = h2[:, :64].reshape(B, oh2, ow2, 64)

    # flatten exactly like torch.nn.Flatten on NCHW: order (C, H, W)
    flat = jnp.transpose(h2, (0, 3, 1, 2)).reshape(B, 64 * oh2 * ow2)  # (B, 6400)

    # pad batch to a sublane multiple for the fused FC kernel
    Mp = -(-B // 8) * 8
    if Mp != B:
        flat = jnp.pad(flat, ((0, Mp - B), (0, 0)))

    # fused fc1 -> relu -> fc2 -> relu -> fc3 (single pallas_call, fc1 K-tiled)
    out = fc_stack(flat, kp["wf1"], kp["bf1"], kp["wf2"], kp["bf2"],
                   kp["wf3"], kp["bf3"])                           # (Mp, 128)
    return out[:B, :3]


if __name__ == "__main__":
    key = jax.random.PRNGKey(0)
    k_params, k_x = jax.random.split(key)

    params = init_params(k_params)
    kparams = prepare_params(params)

    # fc1's in_features=6400 pins the input to (B, 1, 92, 92); use batch=2.
    x = jax.random.normal(k_x, (2, 1, 92, 92), jnp.float32)

    out = jax.jit(qnetwork_forward)(kparams, x)
    out = jax.block_until_ready(out)
    assert out.shape == (2, 3), out.shape
    assert out.dtype == jnp.float32, out.dtype

    print("KERNEL_OK")
</pallas_src>

<mosaic_0001>
module attributes {stable_mosaic.version = 11 : i64} {
  func.func @_matmul_bias_relu_kernel(%arg0: memref<968x64xf32, #tpu.memory_space<vmem>>, %arg1: memref<64x128xbf16, #tpu.memory_space<vmem>>, %arg2: memref<1x128xf32, #tpu.memory_space<vmem>>, %arg3: memref<968x128xf32, #tpu.memory_space<vmem>>) attributes {dimension_semantics = [], scalar_prefetch = 0 : i64, scratch_operands = 0 : i64, tpu.core_type = #tpu.core_type<tc>} {
    %c0 = arith.constant 0 : index
    %c0_0 = arith.constant 0 : index
    %0 = vector.load %arg0[%c0, %c0_0] : memref<968x64xf32, #tpu.memory_space<vmem>>, vector<968x64xf32>
    %1 = arith.truncf %0 : vector<968x64xf32> to vector<968x64xbf16>
    %c0_1 = arith.constant 0 : index
    %c0_2 = arith.constant 0 : index
    %2 = vector.load %arg1[%c0_1, %c0_2] : memref<64x128xbf16, #tpu.memory_space<vmem>>, vector<64x128xbf16>
    %cst = arith.constant dense<0.000000e+00> : vector<968x128xf32>
    %3 = tpu.matmul %1, %2, %cst {dimension_numbers = #tpu.dot_dimension_numbers<[1], [0], [0], [1], [0, 0, 1, 1], [], []>} : vector<968x64xbf16>, vector<64x128xbf16>, vector<968x128xf32> -> vector<968x128xf32>
    %c0_3 = arith.constant 0 : index
    %c0_4 = arith.constant 0 : index
    %4 = vector.load %arg2[%c0_3, %c0_4] : memref<1x128xf32, #tpu.memory_space<vmem>>, vector<1x128xf32>
    %5 = vector.broadcast %4 : vector<1x128xf32> to vector<968x128xf32>
    %6 = arith.addf %3, %5 : vector<968x128xf32>
    %cst_5 = arith.constant 0.000000e+00 : f32
    %7 = vector.broadcast %cst_5 : f32 to vector<968x128xf32>
    %8 = arith.maximumf %6, %7 : vector<968x128xf32>
    %c0_6 = arith.constant 0 : index
    %c0_7 = arith.constant 0 : index
    %9 = vector.load %arg3[%c0_6, %c0_7] : memref<968x128xf32, #tpu.memory_space<vmem>>, vector<968x128xf32>
    tpu.vector_store %arg3[%c0_6, %c0_7], %8 {strides = array<i32>} : memref<968x128xf32, #tpu.memory_space<vmem>>, vector<968x128xf32>,
    return
  }
}

module attributes {stable_mosaic.version = 11 : i64} {
  func.func @_matmul_bias_relu_kernel(%arg0: memref<200x512xf32, #tpu.memory_space<vmem>>, %arg1: memref<512x128xbf16, #tpu.memory_space<vmem>>, %arg2: memref<1x128xf32, #tpu.memory_space<vmem>>, %arg3: memref<200x128xf32, #tpu.memory_space<vmem>>) attributes {dimension_semantics = [], scalar_prefetch = 0 : i64, scratch_operands = 0 : i64, tpu.core_type = #tpu.core_type<tc>} {
    %c0 = arith.constant 0 : index
    %c0_0 = arith.constant 0 : index
    %0 = vector.load %arg0[%c0, %c0_0] : memref<200x512xf32, #tpu.memory_space<vmem>>, vector<200x512xf32>
    %1 = arith.truncf %0 : vector<200x512xf32> to vector<200x512xbf16>
    %c0_1 = arith.constant 0 : index
    %c0_2 = arith.constant 0 : index
    %2 = vector.load %arg1[%c0_1, %c0_2] : memref<512x128xbf16, #tpu.memory_space<vmem>>, vector<512x128xbf16>
    %cst = arith.constant dense<0.000000e+00> : vector<200x128xf32>
    %3 = tpu.matmul %1, %2, %cst {dimension_numbers = #tpu.dot_dimension_numbers<[1], [0], [0], [1], [0, 0, 1, 1], [], []>} : vector<200x512xbf16>, vector<512x128xbf16>, vector<200x128xf32> -> vector<200x128xf32>
    %c0_3 = arith.constant 0 : index
    %c0_4 = arith.constant 0 : index
    %4 = vector.load %arg2[%c0_3, %c0_4] : memref<1x128xf32, #tpu.memory_space<vmem>>, vector<1x128xf32>
    %5 = vector.broadcast %4 : vector<1x128xf32> to vector<200x128xf32>
    %6 = arith.addf %3, %5 : vector<200x128xf32>
    %cst_5 = arith.constant 0.000000e+00 : f32
    %7 = vector.broadcast %cst_5 : f32 to vector<200x128xf32>
    %8 = arith.maximumf %6, %7 : vector<200x128xf32>
    %c0_6 = arith.constant 0 : index
    %c0_7 = arith.constant 0 : index
    %9 = vector.load %arg3[%c0_6, %c0_7] : memref<200x128xf32, #tpu.memory_space<vmem>>, vector<200x128xf32>
    tpu.vector_store %arg3[%c0_6, %c0_7], %8 {strides = array<i32>} : memref<200x128xf32, #tpu.memory_space<vmem>>, vector<200x128xf32>,
    return
  }
}

module attributes {stable_mosaic.version = 11 : i64} {
  func.func @_fc_stack_kernel(%arg0: i32, %arg1: memref<8x1280xf32, #tpu.memory_space<vmem>>, %arg2: memref<1280x512xbf16, #tpu.memory_space<vmem>>, %arg3: memref<1x512xf32, #tpu.memory_space<vmem>>, %arg4: memref<512x256xbf16, #tpu.memory_space<vmem>>, %arg5: memref<1x256xf32, #tpu.memory_space<vmem>>, %arg6: memref<256x128xbf16, #tpu.memory_space<vmem>>, %arg7: memref<1x128xf32, #tpu.memory_space<vmem>>, %arg8: memref<8x128xf32, #tpu.memory_space<vmem>>, %arg9: memref<8x512xf32, #tpu.memory_space<vmem>>) attributes {dimension_semantics = [#tpu.dimension_semantics<arbitrary>], iteration_bounds = array<i64: 5>, scalar_prefetch = 0 : i64, scratch_operands = 1 : i64, tpu.core_type = #tpu.core_type<tc>, window_params = [{transform_indices = @transform_0, window_bounds = array<i64: 8, 1280>}, {transform_indices = @transform_1, window_bounds = array<i64: 1280, 512>}, {pipeline_mode = #tpu.pipeline_mode<synchronous>, transform_indices = @transform_2, window_bounds = array<i64: 1, 512>}, {pipeline_mode = #tpu.pipeline_mode<synchronous>, transform_indices = @transform_3, window_bounds = array<i64: 512, 256>}, {pipeline_mode = #tpu.pipeline_mode<synchronous>, transform_indices = @transform_4, window_bounds = array<i64: 1, 256>}, {pipeline_mode = #tpu.pipeline_mode<synchronous>, transform_indices = @transform_5, window_bounds = array<i64: 256, 128>}, {pipeline_mode = #tpu.pipeline_mode<synchronous>, transform_indices = @transform_6, window_bounds = array<i64: 1, 128>}, {pipeline_mode = #tpu.pipeline_mode<synchronous>, transform_indices = @transform_7, window_bounds = array<i64: 8, 128>}]} {
    %c0_i32 = arith.constant 0 : i32
    %0 = arith.cmpi eq, %arg0, %c0_i32 : i32
    %1 = arith.extui %0 : i1 to i32
    %c0_i32_0 = arith.constant 0 : i32
    %2 = arith.cmpi ne, %1, %c0_i32_0 : i32
    scf.if %2 {
      %cst_9 = arith.constant 0.000000e+00 : f32
      %13 = vector.broadcast %cst_9 : f32 to vector<8x512xf32>
      %c0_10 = arith.constant 0 : index
      %c0_11 = arith.constant 0 : index
      %14 = vector.load %arg9[%c0_10, %c0_11] : memref<8x512xf32, #tpu.memory_space<vmem>>, vector<8x512xf32>
      tpu.vector_store %arg9[%c0_10, %c0_11], %13 {strides = array<i32>} : memref<8x512xf32, #tpu.memory_space<vmem>>, vector<8x512xf32>,
    } else {
    }
    %c0 = arith.constant 0 : index
    %c0_1 = arith.constant 0 : index
    %3 = vector.load %arg9[%c0, %c0_1] : memref<8x512xf32, #tpu.memory_space<vmem>>, vector<8x512xf32>
    %c0_2 = arith.constant 0 : index
    %c0_3 = arith.constant 0 : index
    %4 = vector.load %arg1[%c0_2, %c0_3] : memref<8x1280xf32, #tpu.memory_space<vmem>>, vector<8x1280xf32>
    %5 = arith.truncf %4 : vector<8x1280xf32> to vector<8x1280xbf16>
    %c0_4 = arith.constant 0 : index
    %c0_5 = arith.constant 0 : index
    %6 = vector.load %arg2[%c0_4, %c0_5] : memref<1280x512xbf16, #tpu.memory_space<vmem>>, vector<1280x512xbf16>
    %cst = arith.constant dense<0.000000e+00> : vector<8x512xf32>
    %7 = tpu.matmul %5, %6, %cst {dimension_numbers = #tpu.dot_dimension_numbers<[1], [0], [0], [1], [0, 0, 1, 1], [], []>} : vector<8x1280xbf16>, vector<1280x512xbf16>, vector<8x512xf32> -> vector<8x512xf32>
    %8 = arith.addf %3, %7 : vector<8x512xf32>
    %c0_6 = arith.constant 0 : index
    %c0_7 = arith.constant 0 : index
    %9 = vector.load %arg9[%c0_6, %c0_7] : memref<8x512xf32, #tpu.memory_space<vmem>>, vector<8x512xf32>
    tpu.vector_store %arg9[%c0_6, %c0_7], %8 {strides = array<i32>} : memref<8x512xf32, #tpu.memory_space<vmem>>, vector<8x512xf32>,
    %c4_i32 = arith.constant 4 : i32
    %10 = arith.cmpi eq, %arg0, %c4_i32 : i32
    %11 = arith.extui %10 : i1 to i32
    %c0_i32_8 = arith.constant 0 : i32
    %12 = arith.cmpi ne, %11, %c0_i32_8 : i32
    scf.if %12 {
      %c0_9 = arith.constant 0 : index
      %c0_10 = arith.constant 0 : index
      %13 = vector.load %arg9[%c0_9, %c0_10] : memref<8x512xf32, #tpu.memory_space<vmem>>, vector<8x512xf32>
      %c0_11 = arith.constant 0 : index
      %c0_12 = arith.constant 0 : index
      %14 = vector.load %arg3[%c0_11, %c0_12] : memref<1x512xf32, #tpu.memory_space<vmem>>, vector<1x512xf32>
      %15 = vector.broadcast %14 : vector<1x512xf32> to vector<8x512xf32>
      %16 = arith.addf %13, %15 : vector<8x512xf32>
      %cst_13 = arith.constant 0.000000e+00 : f32
      %17 = vector.broadcast %cst_13 : f32 to vector<8x512xf32>
      %18 = arith.maximumf %16, %17 : vector<8x512xf32>
      %19 = arith.truncf %18 : vector<8x512xf32> to vector<8x512xbf16>
      %c0_14 = arith.constant 0 : index
      %c0_15 = arith.constant 0 : index
      %20 = vector.load %arg4[%c0_14, %c0_15] : memref<512x256xbf16, #tpu.memory_space<vmem>>, vector<512x256xbf16>
      %cst_16 = arith.constant dense<0.000000e+00> : vector<8x256xf32>
      %21 = tpu.matmul %19, %20, %cst_16 {dimension_numbers = #tpu.dot_dimension_numbers<[1], [0], [0], [1], [0, 0, 1, 1], [], []>} : vector<8x512xbf16>, vector<512x256xbf16>, vector<8x256xf32> -> vector<8x256xf32>
      %c0_17 = arith.constant 0 : index
      %c0_18 = arith.constant 0 : index
      %22 = vector.load %arg5[%c0_17, %c0_18] : memref<1x256xf32, #tpu.memory_space<vmem>>, vector<1x256xf32>
      %23 = vector.broadcast %22 : vector<1x256xf32> to vector<8x256xf32>
      %24 = arith.addf %21, %23 : vector<8x256xf32>
      %cst_19 = arith.constant 0.000000e+00 : f32
      %25 = vector.broadcast %cst_19 : f32 to vector<8x256xf32>
      %26 = arith.maximumf %24, %25 : vector<8x256xf32>
      %27 = arith.truncf %26 : vector<8x256xf32> to vector<8x256xbf16>
      %c0_20 = arith.constant 0 : index
      %c0_21 = arith.constant 0 : index
      %28 = vector.load %arg6[%c0_20, %c0_21] : memref<256x128xbf16, #tpu.memory_space<vmem>>, vector<256x128xbf16>
      %cst_22 = arith.constant dense<0.000000e+00> : vector<8x128xf32>
      %29 = tpu.matmul %27, %28, %cst_22 {dimension_numbers = #tpu.dot_dimension_numbers<[1], [0], [0], [1], [0, 0, 1, 1], [], []>} : vector<8x256xbf16>, vector<256x128xbf16>, vector<8x128xf32> -> vector<8x128xf32>
      %c0_23 = arith.constant 0 : index
      %c0_24 = arith.constant 0 : index
      %30 = vector.load %arg7[%c0_23, %c0_24] : memref<1x128xf32, #tpu.memory_space<vmem>>, vector<1x128xf32>
      %31 = vector.broadcast %30 : vector<1x128xf32> to vector<8x128xf32>
      %32 = arith.addf %29, %31 : vector<8x128xf32>
      %c0_25 = arith.constant 0 : index
      %c0_26 = arith.constant 0 : index
      %33 = vector.load %arg8[%c0_25, %c0_26] : memref<8x128xf32, #tpu.memory_space<vmem>>, vector<8x128xf32>
      tpu.vector_store %arg8[%c0_25, %c0_26], %32 {strides = array<i32>} : memref<8x128xf32, #tpu.memory_space<vmem>>, vector<8x128xf32>,
    } else {
    }
    return
  }
  func.func @transform_0(%arg0: i32) -> (i32, i32) {
    %c0_i32 = arith.constant 0 : i32
    %c0_i32_0 = arith.constant 0 : i32
    return %c0_i32, %arg0 : i32, i32
  }
  func.func @transform_1(%arg0: i32) -> (i32, i32) {
    %c0_i32 = arith.constant 0 : i32
    %c0_i32_0 = arith.constant 0 : i32
    return %arg0, %c0_i32 : i32, i32
  }
  func.func @transform_2(%arg0: i32) -> (i32, i32) {
    %c0_i32 = arith.constant 0 : i32
    %c0_i32_0 = arith.constant 0 : i32
    %c0_i32_1 = arith.constant 0 : i32
    return %c0_i32, %c0_i32_0 : i32, i32
  }
  func.func @transform_3(%arg0: i32) -> (i32, i32) {
    %c0_i32 = arith.constant 0 : i32
    %c0_i32_0 = arith.constant 0 : i32
    %c0_i32_1 = arith.constant 0 : i32
    return %c0_i32, %c0_i32_0 : i32, i32
  }
  func.func @transform_4(%arg0: i32) -> (i32, i32) {
    %c0_i32 = arith.constant 0 : i32
    %c0_i32_0 = arith.constant 0 : i32
    %c0_i32_1 = arith.constant 0 : i32
    return %c0_i32, %c0_i32_0 : i32, i32
  }
  func.func @transform_5(%arg0: i32) -> (i32, i32) {
    %c0_i32 = arith.constant 0 : i32
    %c0_i32_0 = arith.constant 0 : i32
    %c0_i32_1 = arith.constant 0 : i32
    return %c0_i32, %c0_i32_0 : i32, i32
  }
  func.func @transform_6(%arg0: i32) -> (i32, i32) {
    %c0_i32 = arith.constant 0 : i32
    %c0_i32_0 = arith.constant 0 : i32
    %c0_i32_1 = arith.constant 0 : i32
    return %c0_i32, %c0_i32_0 : i32, i32
  }
  func.func @transform_7(%arg0: i32) -> (i32, i32) {
    %c0_i32 = arith.constant 0 : i32
    %c0_i32_0 = arith.constant 0 : i32
    %c0_i32_1 = arith.constant 0 : i32
    return %c0_i32, %c0_i32_0 : i32, i32
  }
}

</mosaic_0001>

<llo_original>
// kernel: qnetwork_forward.3
$region0: #{qnetwork_forward.3}
  #allocation0 [shape = 'u32[]', space=smem, size = 0x4, offset = 0x4, fixed_abs, tag = 'smem constant byte address 0x4 - core index']
  #allocation1 [shape = 'u32[144,128]{1,0:T(1,128)}', space=vmem, size = 0x12000, scoped, tag = 'internal scratch']
  %s0 = inlined_call_operand.vmem [shape: f32[968,64], index: 0, kind: input, shape index: {}]
  %s1 = inlined_call_operand.vmem [shape: bf16[64,128], index: 1, kind: input, shape index: {}]
  %s2 = inlined_call_operand.vmem [shape: f32[1,128], index: 2, kind: input, shape index: {}]
  %s3 = inlined_call_operand.vmem [shape: f32[968,128], index: 3, kind: output, shape index: {}]
  %s4 = sld [smem:[#allocation0]]
  $region22: #{qnetwork_forward.3} parent=0
    _
  %s6 = ssub.s32 1, %s4
  %s7 = scalar_select 0, %s6, %s4
  // Predicated region
  $region2: #{qnetwork_forward.3} parent=0 // pred_check
    _
  $region3: #{qnetwork_forward.3} parent=0 // pred_check_branch
    %9 = sbr.rel (0) target = $region5
  $region4: #{qnetwork_forward.3} parent=0 // pred_region
    _
  $region5: #{qnetwork_forward.3} parent=0 // pred_fallthru
    _
  // Predicated region
  $region6: #{qnetwork_forward.3} parent=0 // pred_check
    _
  $region7: #{qnetwork_forward.3} parent=0 // pred_check_branch
    %11 = sbr.rel (0) target = $region9
  $region8: #{qnetwork_forward.3} parent=0 // pred_region
    _
  $region9: #{qnetwork_forward.3} parent=0 // pred_fallthru
    _
  // Predicated region
  $region10: #{qnetwork_forward.3} parent=0 // pred_check
    _
  $region11: #{qnetwork_forward.3} parent=0 // pred_check_branch
    %13 = sbr.rel (0) target = $region13
  $region12: #{qnetwork_forward.3} parent=0 // pred_region
    _
  $region13: #{qnetwork_forward.3} parent=0 // pred_fallthru
    _
  %v15 = vld [vmem:[%s0] sm:$0xff]
  %v16 = vld [vmem:[%s0 + $0x8] sm:$0xff]
  %v17 = vld [vmem:[%s0 + $0x10] sm:$0xff]
  %v18 = vld [vmem:[%s0 + $0x18] sm:$0xff]
  %v19 = vld [vmem:[%s0 + $0x20] sm:$0xff]
  %v20 = vld [vmem:[%s0 + $0x28] sm:$0xff]
  %v21 = vld [vmem:[%s0 + $0x30] sm:$0xff]
  %v22 = vld [vmem:[%s0 + $0x38] sm:$0xff]
  %v23 = vld [vmem:[%s0 + $0x40] sm:$0xff]
  %v24 = vld [vmem:[%s0 + $0x48] sm:$0xff]
  %v25 = vld [vmem:[%s0 + $0x50] sm:$0xff]
  %v26 = vld [vmem:[%s0 + $0x58] sm:$0xff]
  %v27 = vld [vmem:[%s0 + $0x60] sm:$0xff]
  %v28 = vld [vmem:[%s0 + $0x68] sm:$0xff]
  %v29 = vld [vmem:[%s0 + $0x70] sm:$0xff]
  %v30 = vld [vmem:[%s0 + $0x78] sm:$0xff]
  %v31 = vld [vmem:[%s0 + $0x80] sm:$0xff]
  %v32 = vld [vmem:[%s0 + $0x88] sm:$0xff]
  %v33 = vld [vmem:[%s0 + $0x90] sm:$0xff]
  %v34 = vld [vmem:[%s0 + $0x98] sm:$0xff]
  %v35 = vld [vmem:[%s0 + $0xa0] sm:$0xff]
  %v36 = vld [vmem:[%s0 + $0xa8] sm:$0xff]
  %v37 = vld [vmem:[%s0 + $0xb0] sm:$0xff]
  %v38 = vld [vmem:[%s0 + $0xb8] sm:$0xff]
  %v39 = vld [vmem:[%s0 + $0xc0] sm:$0xff]
  %v40 = vld [vmem:[%s0 + $0xc8] sm:$0xff]
  %v41 = vld [vmem:[%s0 + $0xd0] sm:$0xff]
  %v42 = vld [vmem:[%s0 + $0xd8] sm:$0xff]
  %v43 = vld [vmem:[%s0 + $0xe0] sm:$0xff]
  %v44 = vld [vmem:[%s0 + $0xe8] sm:$0xff]
  %v45 = vld [vmem:[%s0 + $0xf0] sm:$0xff]
  %v46 = vld [vmem:[%s0 + $0xf8] sm:$0xff]
  %v47 = vld [vmem:[%s0 + $0x100] sm:$0xff]
  %v48 = vld [vmem:[%s0 + $0x108] sm:$0xff]
  %v49 = vld [vmem:[%s0 + $0x110] sm:$0xff]
  %v50 = vld [vmem:[%s0 + $0x118] sm:$0xff]
  %v51 = vld [vmem:[%s0 + $0x120] sm:$0xff]
  %v52 = vld [vmem:[%s0 + $0x128] sm:$0xff]
  %v53 = vld [vmem:[%s0 + $0x130] sm:$0xff]
  %v54 = vld [vmem:[%s0 + $0x138] sm:$0xff]
  %v55 = vld [vmem:[%s0 + $0x140] sm:$0xff]
  %v56 = vld [vmem:[%s0 + $0x148] sm:$0xff]
  %v57 = vld [vmem:[%s0 + $0x150] sm:$0xff]
  %v58 = vld [vmem:[%s0 + $0x158] sm:$0xff]
  %v59 = vld [vmem:[%s0 + $0x160] sm:$0xff]
  %v60 = vld [vmem:[%s0 + $0x168] sm:$0xff]
  %v61 = vld [vmem:[%s0 + $0x170] sm:$0xff]
  %v62 = vld [vmem:[%s0 + $0x178] sm:$0xff]
  %v63 = vld [vmem:[%s0 + $0x180] sm:$0xff]
  %v64 = vld [vmem:[%s0 + $0x188] sm:$0xff]
  %v65 = vld [vmem:[%s0 + $0x190] sm:$0xff]
  %v66 = vld [vmem:[%s0 + $0x198] sm:$0xff]
  %v67 = vld [vmem:[%s0 + $0x1a0] sm:$0xff]
  %v68 = vld [vmem:[%s0 + $0x1a8] sm:$0xff]
  %v69 = vld [vmem:[%s0 + $0x1b0] sm:$0xff]
  %v70 = vld [vmem:[%s0 + $0x1b8] sm:$0xff]
  %v71 = vld [vmem:[%s0 + $0x1c0] sm:$0xff]
  %v72 = vld [vmem:[%s0 + $0x1c8] sm:$0xff]
  %v73 = vld [vmem:[%s0 + $0x1d0] sm:$0xff]
  %v74 = vld [vmem:[%s0 + $0x1d8] sm:$0xff]
  %v75 = vld [vmem:[%s0 + $0x1e0] sm:$0xff]
  %v76 = vld [vmem:[%s0 + $0x1e8] sm:$0xff]
  %v77 = vld [vmem:[%s0 + $0x1f0] sm:$0xff]
  %v78 = vld [vmem:[%s0 + $0x1f8] sm:$0xff]
  %v79 = vld [vmem:[%s0 + $0x200] sm:$0xff]
  %v80 = vld [vmem:[%s0 + $0x208] sm:$0xff]
  %v81 = vld [vmem:[%s0 + $0x210] sm:$0xff]
  %v82 = vld [vmem:[%s0 + $0x218] sm:$0xff]
  %v83 = vld [vmem:[%s0 + $0x220] sm:$0xff]
  %v84 = vld [vmem:[%s0 + $0x228] sm:$0xff]
  %v85 = vld [vmem:[%s0 + $0x230] sm:$0xff]
  %v86 = vld [vmem:[%s0 + $0x238] sm:$0xff]
  %v87 = vld [vmem:[%s0 + $0x240] sm:$0xff]
  %v88 = vld [vmem:[%s0 + $0x248] sm:$0xff]
  %v89 = vld [vmem:[%s0 + $0x250] sm:$0xff]
  %v90 = vld [vmem:[%s0 + $0x258] sm:$0xff]
  %v91 = vld [vmem:[%s0 + $0x260] sm:$0xff]
  %v92 = vld [vmem:[%s0 + $0x268] sm:$0xff]
  %v93 = vld [vmem:[%s0 + $0x270] sm:$0xff]
  %v94 = vld [vmem:[%s0 + $0x278] sm:$0xff]
  %v95 = vld [vmem:[%s0 + $0x280] sm:$0xff]
  %v96 = vld [vmem:[%s0 + $0x288] sm:$0xff]
  %v97 = vld [vmem:[%s0 + $0x290] sm:$0xff]
  %v98 = vld [vmem:[%s0 + $0x298] sm:$0xff]
  %v99 = vld [vmem:[%s0 + $0x2a0] sm:$0xff]
  %v100 = vld [vmem:[%s0 + $0x2a8] sm:$0xff]
  %v101 = vld [vmem:[%s0 + $0x2b0] sm:$0xff]
  %v102 = vld [vmem:[%s0 + $0x2b8] sm:$0xff]
  %v103 = vld [vmem:[%s0 + $0x2c0] sm:$0xff]
  %v104 = vld [vmem:[%s0 + $0x2c8] sm:$0xff]
  %v105 = vld [vmem:[%s0 + $0x2d0] sm:$0xff]
  %v106 = vld [vmem:[%s0 + $0x2d8] sm:$0xff]
  %v107 = vld [vmem:[%s0 + $0x2e0] sm:$0xff]
  %v108 = vld [vmem:[%s0 + $0x2e8] sm:$0xff]
  %v109 = vld [vmem:[%s0 + $0x2f0] sm:$0xff]
  %v110 = vld [vmem:[%s0 + $0x2f8] sm:$0xff]
  %v111 = vld [vmem:[%s0 + $0x300] sm:$0xff]
  %v112 = vld [vmem:[%s0 + $0x308] sm:$0xff]
  %v113 = vld [vmem:[%s0 + $0x310] sm:$0xff]
  %v114 = vld [vmem:[%s0 + $0x318] sm:$0xff]
  %v115 = vld [vmem:[%s0 + $0x320] sm:$0xff]
  %v116 = vld [vmem:[%s0 + $0x328] sm:$0xff]
  %v117 = vld [vmem:[%s0 + $0x330] sm:$0xff]
  %v118 = vld [vmem:[%s0 + $0x338] sm:$0xff]
  %v119 = vld [vmem:[%s0 + $0x340] sm:$0xff]
  %v120 = vld [vmem:[%s0 + $0x348] sm:$0xff]
  %v121 = vld [vmem:[%s0 + $0x350] sm:$0xff]
  %v122 = vld [vmem:[%s0 + $0x358] sm:$0xff]
  %v123 = vld [vmem:[%s0 + $0x360] sm:$0xff]
  %v124 = vld [vmem:[%s0 + $0x368] sm:$0xff]
  %v125 = vld [vmem:[%s0 + $0x370] sm:$0xff]
  %v126 = vld [vmem:[%s0 + $0x378] sm:$0xff]
  %v127 = vld [vmem:[%s0 + $0x380] sm:$0xff]
  %v128 = vld [vmem:[%s0 + $0x388] sm:$0xff]
  %v129 = vld [vmem:[%s0 + $0x390] sm:$0xff]
  %v130 = vld [vmem:[%s0 + $0x398] sm:$0xff]
  %v131 = vld [vmem:[%s0 + $0x3a0] sm:$0xff]
  %v132 = vld [vmem:[%s0 + $0x3a8] sm:$0xff]
  %v133 = vld [vmem:[%s0 + $0x3b0] sm:$0xff]
  %v134 = vld [vmem:[%s0 + $0x3b8] sm:$0xff]
  %v135 = vld [vmem:[%s0 + $0x3c0] sm:$0xff]
  %v136 = vpack.c.bf16 %v16, %v15
  %v137 = vpack.c.bf16 %v18, %v17
  %v138 = vpack.c.bf16 %v20, %v19
  %v139 = vpack.c.bf16 %v22, %v21
  %v140 = vpack.c.bf16 %v24, %v23
  %v141 = vpack.c.bf16 %v26, %v25
  %v142 = vpack.c.bf16 %v28, %v27
  %v143 = vpack.c.bf16 %v30, %v29
  %v144 = vpack.c.bf16 %v32, %v31
  %v145 = vpack.c.bf16 %v34, %v33
  %v146 = vpack.c.bf16 %v36, %v35
  %v147 = vpack.c.bf16 %v38, %v37
  %v148 = vpack.c.bf16 %v40, %v39
  %v149 = vpack.c.bf16 %v42, %v41
  %v150 = vpack.c.bf16 %v44, %v43
  %v151 = vpack.c.bf16 %v46, %v45
  %v152 = vpack.c.bf16 %v48, %v47
  %v153 = vpack.c.bf16 %v50, %v49
  %v154 = vpack.c.bf16 %v52, %v51
  %v155 = vpack.c.bf16 %v54, %v53
  %v156 = vpack.c.bf16 %v56, %v55
  %v157 = vpack.c.bf16 %v58, %v57
  %v158 = vpack.c.bf16 %v60, %v59
  %v159 = vpack.c.bf16 %v62, %v61
  %v160 = vpack.c.bf16 %v64, %v63
  %v161 = vpack.c.bf16 %v66, %v65
  %v162 = vpack.c.bf16 %v68, %v67
  %v163 = vpack.c.bf16 %v70, %v69
  %v164 = vpack.c.bf16 %v72, %v71
  %v165 = vpack.c.bf16 %v74, %v73
  %v166 = vpack.c.bf16 %v76, %v75
  %v167 = vpack.c.bf16 %v78, %v77
  %v168 = vpack.c.bf16 %v80, %v79
  %v169 = vpack.c.bf16 %v82, %v81
  %v170 = vpack.c.bf16 %v84, %v83
  %v171 = vpack.c.bf16 %v86, %v85
  %v172 = vpack.c.bf16 %v88, %v87
  %v173 = vpack.c.bf16 %v90, %v89
  %v174 = vpack.c.bf16 %v92, %v91
  %v175 = vpack.c.bf16 %v94, %v93
  %v176 = vpack.c.bf16 %v96, %v95
  %v177 = vpack.c.bf16 %v98, %v97
  %v178 = vpack.c.bf16 %v100, %v99
  %v179 = vpack.c.bf16 %v102, %v101
  %v180 = vpack.c.bf16 %v104, %v103
  %v181 = vpack.c.bf16 %v106, %v105
  %v182 = vpack.c.bf16 %v108, %v107
  %v183 = vpack.c.bf16 %v110, %v109
  %v184 = vpack.c.bf16 %v112, %v111
  %v185 = vpack.c.bf16 %v114, %v113
  %v186 = vpack.c.bf16 %v116, %v115
  %v187 = vpack.c.bf16 %v118, %v117
  %v188 = vpack.c.bf16 %v120, %v119
  %v189 = vpack.c.bf16 %v122, %v121
  %v190 = vpack.c.bf16 %v124, %v123
  %v191 = vpack.c.bf16 %v126, %v125
  %v192 = vpack.c.bf16 %v128, %v127
  %v193 = vpack.c.bf16 %v130, %v129
  %v194 = vpack.c.bf16 %v132, %v131
  %v195 = vpack.c.bf16 %v134, %v133
  %v196 = vpack.c.bf16 %v135, %v135
  %v197 = vld [vmem:[%s1] sm:$0xf]
  %v198 = vld [vmem:[%s1 + $0x4] sm:$0xf]
  %v199 = vld [vmem:[%s1 + $0x8] sm:$0xf]
  %v200 = vld [vmem:[%s1 + $0xc] sm:$0xf]
  %v201 = vld [vmem:[%s1 + $0x10] sm:$0xf]
  %v202 = vld [vmem:[%s1 + $0x14] sm:$0xf]
  %v203 = vld [vmem:[%s1 + $0x18] sm:$0xf]
  %v204 = vld [vmem:[%s1 + $0x1c] sm:$0xf]
  %v205 = vld [vmem:[%s2] sm:$0x1]
  %v207 = vlaneseq
  %v208 = vshrl.u32 %v207, 7
  %v209 = vsub.s32 0, %v208
  %v210 = vrot.slane %v205, %v209
  %v220 = vunpack.c.l.b16 %v197
  %v221 = vunpack.c.l.b16 %v198
  %v222 = vunpack.c.l.b16 %v199
  %v223 = vunpack.c.l.b16 %v200
  %v224 = vunpack.c.l.b16 %v201
  %v225 = vunpack.c.l.b16 %v202
  %v226 = vunpack.c.l.b16 %v203
  %v227 = vunpack.c.l.b16 %v204
  %v228 = vpack.c.b16 %v221, %v220
  %v229 = vpack.c.b16 %v223, %v222
  %v230 = vpack.c.b16 %v225, %v224
  %v231 = vpack.c.b16 %v227, %v226
  %vm236 = vcmask 523264
  %v238 = vsel %vm236, %v136, 0
  %v241 = vsel %vm236, %v137, 0
  %v244 = vsel %vm236, %v138, 0
  %v247 = vsel %vm236, %v139, 0
  %v250 = vsel %vm236, %v140, 0
  %v253 = vsel %vm236, %v141, 0
  %v256 = vsel %vm236, %v142, 0
  %v259 = vsel %vm236, %v143, 0
  %v262 = vsel %vm236, %v144, 0
  %v265 = vsel %vm236, %v145, 0
  %v268 = vsel %vm236, %v146, 0
  %v271 = vsel %vm236, %v147, 0
  %v274 = vsel %vm236, %v148, 0
  %v277 = vsel %vm236, %v149, 0
  %v280 = vsel %vm236, %v150, 0
  %v283 = vsel %vm236, %v151, 0
  %v286 = vsel %vm236, %v152, 0
  %v289 = vsel %vm236, %v153, 0
  %v292 = vsel %vm236, %v154, 0
  %v295 = vsel %vm236, %v155, 0
  %v298 = vsel %vm236, %v156, 0
  %v301 = vsel %vm236, %v157, 0
  %v304 = vsel %vm236, %v158, 0
  %v307 = vsel %vm236, %v159, 0
  %v310 = vsel %vm236, %v160, 0
  %v313 = vsel %vm236, %v161, 0
  %v316 = vsel %vm236, %v162, 0
  %v319 = vsel %vm236, %v163, 0
  %v322 = vsel %vm236, %v164, 0
  %v325 = vsel %vm236, %v165, 0
  %v328 = vsel %vm236, %v166, 0
  %v331 = vsel %vm236, %v167, 0
  %v334 = vsel %vm236, %v168, 0
  %v337 = vsel %vm236, %v169, 0
  %v340 = vsel %vm236, %v170, 0
  %v343 = vsel %vm236, %v171, 0
  %v346 = vsel %vm236, %v172, 0
  %v349 = vsel %vm236, %v173, 0
  %v352 = vsel %vm236, %v174, 0
  %v355 = vsel %vm236, %v175, 0
  %v358 = vsel %vm236, %v176, 0
  %v361 = vsel %vm236, %v177, 0
  %v364 = vsel %vm236, %v178, 0
  %v367 = vsel %vm236, %v179, 0
  %v370 = vsel %vm236, %v180, 0
  %v373 = vsel %vm236, %v181, 0
  %v376 = vsel %vm236, %v182, 0
  %v379 = vsel %vm236, %v183, 0
  %v382 = vsel %vm236, %v184, 0
  %v385 = vsel %vm236, %v185, 0
  %v388 = vsel %vm236, %v186, 0
  %v391 = vsel %vm236, %v187, 0
  %v394 = vsel %vm236, %v188, 0
  %v397 = vsel %vm236, %v189, 0
  %v400 = vsel %vm236, %v190, 0
  %v403 = vsel %vm236, %v191, 0
  %v406 = vsel %vm236, %v192, 0
  %v409 = vsel %vm236, %v193, 0
  %v412 = vsel %vm236, %v194, 0
  %v415 = vsel %vm236, %v195, 0
  %v418 = vsel %vm236, %v196, 0
  %420 = vmatprep.subr.bf16.mxu0 0
  %421 = vmatpush1.bf16.msra.mxu0 %v228
  %422 = vmatprep.subr.bf16.mxu0 0
  %423 = vmatpush1.bf16.msra.mxu0 %v229
  %424 = vmatprep.subr.bf16.mxu0 0
  %425 = vmatpush1.bf16.msra.mxu0 %v230
  %426 = vmatprep.subr.bf16.mxu0 0
  %427 = vmatpush1.bf16.msra.mxu0 %v231
  %428 = vmatprep.subr.bf16.mxu0 0
  %429 = vmatpush1.bf16.msra.mxu0 0
  %430 = vmatprep.subr.bf16.mxu0 0
  %431 = vmatpush1.bf16.msra.mxu0 0
  %432 = vmatprep.subr.bf16.mxu0 0
  %433 = vmatpush1.bf16.msra.mxu0 0
  %434 = vmatprep.subr.bf16.mxu0 0
  %435 = vmatpush1.bf16.msra.mxu0 0
  %436 = vmatprep.subr.bf16.mxu0 0
  %437 = vmatpush1.bf16.msra.mxu0 0
  %438 = vmatprep.subr.bf16.mxu0 0
  %439 = vmatpush1.bf16.msra.mxu0 0
  %440 = vmatprep.subr.bf16.mxu0 0
  %441 = vmatpush1.bf16.msra.mxu0 0
  %442 = vmatprep.subr.bf16.mxu0 0
  %443 = vmatpush1.bf16.msra.mxu0 0
  %444 = vmatprep.subr.bf16.mxu0 0
  %445 = vmatpush1.bf16.msra.mxu0 0
  %446 = vmatprep.subr.bf16.mxu0 0
  %447 = vmatpush1.bf16.msra.mxu0 0
  %448 = vmatprep.subr.bf16.mxu0 0
  %449 = vmatpush1.bf16.msra.mxu0 0
  %450 = vmatprep.subr.bf16.mxu0 0
  %451 = vmatpush1.bf16.msra.mxu0 0
  %452 = vmatprep.mubr.bf16.mxu0 0
  %453 = vmatmul.mubr.bf16.gmra.mrb[0].mxu0 %v238
  %v454 = vpop.f32.mrb[0].mxu0
  %v455 = vadd.f32 %v210, %v454
  %v456 = vpop.f32.mrb[0].mxu0
  %v457 = vpop.f32.mrb[0].mxu0
  %v458 = vadd.f32 %v210, %v457
  %v459 = vpop.f32.mrb[0].mxu0
  %460 = vmatprep.mubr.bf16.mxu0 0
  %461 = vmatmul.mubr.bf16.gmra.mrb[0].mxu0 %v241
  %v462 = vpop.f32.mrb[0].mxu0
  %v463 = vadd.f32 %v210, %v462
  %v464 = vpop.f32.mrb[0].mxu0
  %v465 = vpop.f32.mrb[0].mxu0
  %v466 = vadd.f32 %v210, %v465
  %v467 = vpop.f32.mrb[0].mxu0
  %468 = vmatprep.mubr.bf16.mxu0 0
  %469 = vmatmul.mubr.bf16.gmra.mrb[0].mxu0 %v244
  %v470 = vpop.f32.mrb[0].mxu0
  %v471 = vadd.f32 %v210, %v470
  %v472 = vpop.f32.mrb[0].mxu0
  %v473 = vpop.f32.mrb[0].mxu0
  %v474 = vadd.f32 %v210, %v473
  %v475 = vpop.f32.mrb[0].mxu0
  %476 = vmatprep.mubr.bf16.mxu0 0
  %477 = vmatmul.mubr.bf16.gmra.mrb[0].mxu0 %v247
  %v478 = vpop.f32.mrb[0].mxu0
  %v479 = vadd.f32 %v210, %v478
  %v480 = vpop.f32.mrb[0].mxu0
  %v481 = vpop.f32.mrb[0].mxu0
  %v482 = vadd.f32 %v210, %v481
  %v483 = vpop.f32.mrb[0].mxu0
  %484 = vmatprep.mubr.bf16.mxu0 0
  %485 = vmatmul.mubr.bf16.gmra.mrb[0].mxu0 %v250
  %v486 = vpop.f32.mrb[0].mxu0
  %v487 = vadd.f32 %v210, %v486
  %v488 = vpop.f32.mrb[0].mxu0
  %v489 = vpop.f32.mrb[0].mxu0
  %v490 = vadd.f32 %v210, %v489
  %v491 = vpop.f32.mrb[0].mxu0
  %492 = vmatprep.mubr.bf16.mxu0 0
  %493 = vmatmul.mubr.bf16.gmra.mrb[0].mxu0 %v253
  %v494 = vpop.f32.mrb[0].mxu0
  %v495 = vadd.f32 %v210, %v494
  %v496 = vpop.f32.mrb[0].mxu0
  %v497 = vpop.f32.mrb[0].mxu0
  %v498 = vadd.f32 %v210, %v497
  %v499 = vpop.f32.mrb[0].mxu0
  %500 = vmatprep.mubr.bf16.mxu0 0
  %501 = vmatmul.mubr.bf16.gmra.mrb[0].mxu0 %v256
  %v502 = vpop.f32.mrb[0].mxu0
  %v503 = vadd.f32 %v210, %v502
  %v504 = vpop.f32.mrb[0].mxu0
  %v505 = vpop.f32.mrb[0].mxu0
  %v506 = vadd.f32 %v210, %v505
  %v507 = vpop.f32.mrb[0].mxu0
  %508 = vmatprep.mubr.bf16.mxu0 0
  %509 = vmatmul.mubr.bf16.gmra.mrb[0].mxu0 %v259
  %v510 = vpop.f32.mrb[0].mxu0
  %v511 = vadd.f32 %v210, %v510
  %v512 = vpop.f32.mrb[0].mxu0
  %v513 = vpop.f32.mrb[0].mxu0
  %v514 = vadd.f32 %v210, %v513
  %v515 = vpop.f32.mrb[0].mxu0
  %516 = vmatprep.mubr.bf16.mxu0 0
  %517 = vmatmul.mubr.bf16.gmra.mrb[0].mxu0 %v262
  %v518 = vpop.f32.mrb[0].mxu0
  %v519 = vadd.f32 %v210, %v518
  %v520 = vpop.f32.mrb[0].mxu0
  %v521 = vpop.f32.mrb[0].mxu0
  %v522 = vadd.f32 %v210, %v521
  %v523 = vpop.f32.mrb[0].mxu0
  %524 = vmatprep.mubr.bf16.mxu0 0
  %525 = vmatmul.mubr.bf16.gmra.mrb[0].mxu0 %v265
  %v526 = vpop.f32.mrb[0].mxu0
  %v527 = vadd.f32 %v210, %v526
  %v528 = vpop.f32.mrb[0].mxu0
  %v529 = vpop.f32.mrb[0].mxu0
  %v530 = vadd.f32 %v210, %v529
  %v531 = vpop.f32.mrb[0].mxu0
  %532 = vmatprep.mubr.bf16.mxu0 0
  %533 = vmatmul.mubr.bf16.gmra.mrb[0].mxu0 %v268
  %v534 = vpop.f32.mrb[0].mxu0
  %v535 = vadd.f32 %v210, %v534
  %v536 = vpop.f32.mrb[0].mxu0
  %v537 = vpop.f32.mrb[0].mxu0
  %v538 = vadd.f32 %v210, %v537
  %v539 = vpop.f32.mrb[0].mxu0
  %540 = vmatprep.mubr.bf16.mxu0 0
  %541 = vmatmul.mubr.bf16.gmra.mrb[0].mxu0 %v271
  %v542 = vpop.f32.mrb[0].mxu0
  %v543 = vadd.f32 %v210, %v542
  %v544 = vpop.f32.mrb[0].mxu0
  %v545 = vpop.f32.mrb[0].mxu0
  %v546 = vadd.f32 %v210, %v545
  %v547 = vpop.f32.mrb[0].mxu0
  %548 = vmatprep.mubr.bf16.mxu0 0
  %549 = vmatmul.mubr.bf16.gmra.mrb[0].mxu0 %v274
  %v550 = vpop.f32.mrb[0].mxu0
  %v551 = vadd.f32 %v210, %v550
  %v552 = vpop.f32.mrb[0].mxu0
  %v553 = vpop.f32.mrb[0].mxu0
  %v554 = vadd.f32 %v210, %v553
  %v555 = vpop.f32.mrb[0].mxu0
  %556 = vmatprep.mubr.bf16.mxu0 0
  %557 = vmatmul.mubr.bf16.gmra.mrb[0].mxu0 %v277
  %v558 = vpop.f32.mrb[0].mxu0
  %v559 = vadd.f32 %v210, %v558
  %v560 = vpop.f32.mrb[0].mxu0
  %v561 = vpop.f32.mrb[0].mxu0
  %v562 = vadd.f32 %v210, %v561
  %v563 = vpop.f32.mrb[0].mxu0
  %564 = vmatprep.mubr.bf16.mxu0 0
  %565 = vmatmul.mubr.bf16.gmra.mrb[0].mxu0 %v280
  %v566 = vpop.f32.mrb[0].mxu0
  %v567 = vadd.f32 %v210, %v566
  %v568 = vpop.f32.mrb[0].mxu0
  %v569 = vpop.f32.mrb[0].mxu0
  %v570 = vadd.f32 %v210, %v569
  %v571 = vpop.f32.mrb[0].mxu0
  %572 = vmatprep.mubr.bf16.mxu0 0
  %573 = vmatmul.mubr.bf16.gmra.mrb[0].mxu0 %v283
  %v574 = vpop.f32.mrb[0].mxu0
  %v575 = vadd.f32 %v210, %v574
  %v576 = vpop.f32.mrb[0].mxu0
  %v577 = vpop.f32.mrb[0].mxu0
  %v578 = vadd.f32 %v210, %v577
  %v579 = vpop.f32.mrb[0].mxu0
  %580 = vmatprep.mubr.bf16.mxu0 0
  %581 = vmatmul.mubr.bf16.gmra.mrb[0].mxu0 %v286
  %v582 = vpop.f32.mrb[0].mxu0
  %v583 = vadd.f32 %v210, %v582
  %v584 = vpop.f32.mrb[0].mxu0
  %v585 = vpop.f32.mrb[0].mxu0
  %v586 = vadd.f32 %v210, %v585
  %v587 = vpop.f32.mrb[0].mxu0
  %588 = vmatprep.mubr.bf16.mxu0 0
  %589 = vmatmul.mubr.bf16.gmra.mrb[0].mxu0 %v289
  %v590 = vpop.f32.mrb[0].mxu0
  %v591 = vadd.f32 %v210, %v590
  %v592 = vpop.f32.mrb[0].mxu0
  %v593 = vpop.f32.mrb[0].mxu0
  %v594 = vadd.f32 %v210, %v593
  %v595 = vpop.f32.mrb[0].mxu0
  %596 = vmatprep.mubr.bf16.mxu0 0
  %597 = vmatmul.mubr.bf16.gmra.mrb[0].mxu0 %v292
  %v598 = vpop.f32.mrb[0].mxu0
  %v599 = vadd.f32 %v210, %v598
  %v600 = vpop.f32.mrb[0].mxu0
  %v601 = vpop.f32.mrb[0].mxu0
  %v602 = vadd.f32 %v210, %v601
  %v603 = vpop.f32.mrb[0].mxu0
  %604 = vmatprep.mubr.bf16.mxu0 0
  %605 = vmatmul.mubr.bf16.gmra.mrb[0].mxu0 %v295
  %v606 = vpop.f32.mrb[0].mxu0
  %v607 = vadd.f32 %v210, %v606
  %v608 = vpop.f32.mrb[0].mxu0
  %v609 = vpop.f32.mrb[0].mxu0
  %v610 = vadd.f32 %v210, %v609
  %v611 = vpop.f32.mrb[0].mxu0
  %612 = vmatprep.mubr.bf16.mxu0 0
  %613 = vmatmul.mubr.bf16.gmra.mrb[0].mxu0 %v298
  %v614 = vpop.f32.mrb[0].mxu0
  %v615 = vadd.f32 %v210, %v614
  %v616 = vpop.f32.mrb[0].mxu0
  %v617 = vpop.f32.mrb[0].mxu0
  %v618 = vadd.f32 %v210, %v617
  %v619 = vpop.f32.mrb[0].mxu0
  %620 = vmatprep.mubr.bf16.mxu0 0
  %621 = vmatmul.mubr.bf16.gmra.mrb[0].mxu0 %v301
  %v622 = vpop.f32.mrb[0].mxu0
  %v623 = vadd.f32 %v210, %v622
  %v624 = vpop.f32.mrb[0].mxu0
  %v625 = vpop.f32.mrb[0].mxu0
  %v626 = vadd.f32 %v210, %v625
  %v627 = vpop.f32.mrb[0].mxu0
  %628 = vmatprep.mubr.bf16.mxu0 0
  %629 = vmatmul.mubr.bf16.gmra.mrb[0].mxu0 %v304
  %v630 = vpop.f32.mrb[0].mxu0
  %v631 = vadd.f32 %v210, %v630
  %v632 = vpop.f32.mrb[0].mxu0
  %v633 = vpop.f32.mrb[0].mxu0
  %v634 = vadd.f32 %v210, %v633
  %v635 = vpop.f32.mrb[0].mxu0
  %636 = vmatprep.mubr.bf16.mxu0 0
  %637 = vmatmul.mubr.bf16.gmra.mrb[0].mxu0 %v307
  %v638 = vpop.f32.mrb[0].mxu0
  %v639 = vadd.f32 %v210, %v638
  %v640 = vpop.f32.mrb[0].mxu0
  %v641 = vpop.f32.mrb[0].mxu0
  %v642 = vadd.f32 %v210, %v641
  %v643 = vpop.f32.mrb[0].mxu0
  %644 = vmatprep.mubr.bf16.mxu0 0
  %645 = vmatmul.mubr.bf16.gmra.mrb[0].mxu0 %v310
  %v646 = vpop.f32.mrb[0].mxu0
  %v647 = vadd.f32 %v210, %v646
  %v648 = vpop.f32.mrb[0].mxu0
  %v649 = vpop.f32.mrb[0].mxu0
  %v650 = vadd.f32 %v210, %v649
  %v651 = vpop.f32.mrb[0].mxu0
  %652 = vmatprep.mubr.bf16.mxu0 0
  %653 = vmatmul.mubr.bf16.gmra.mrb[0].mxu0 %v313
  %v654 = vpop.f32.mrb[0].mxu0
  %v655 = vadd.f32 %v210, %v654
  %v656 = vpop.f32.mrb[0].mxu0
  %v657 = vpop.f32.mrb[0].mxu0
  %v658 = vadd.f32 %v210, %v657
  %v659 = vpop.f32.mrb[0].mxu0
  %660 = vmatprep.mubr.bf16.mxu0 0
  %661 = vmatmul.mubr.bf16.gmra.mrb[0].mxu0 %v316
  %v662 = vpop.f32.mrb[0].mxu0
  %v663 = vadd.f32 %v210, %v662
  %v664 = vpop.f32.mrb[0].mxu0
  %v665 = vpop.f32.mrb[0].mxu0
  %v666 = vadd.f32 %v210, %v665
  %v667 = vpop.f32.mrb[0].mxu0
  %668 = vmatprep.mubr.bf16.mxu0 0
  %669 = vmatmul.mubr.bf16.gmra.mrb[0].mxu0 %v319
  %v670 = vpop.f32.mrb[0].mxu0
  %v671 = vadd.f32 %v210, %v670
  %v672 = vpop.f32.mrb[0].mxu0
  %v673 = vpop.f32.mrb[0].mxu0
  %v674 = vadd.f32 %v210, %v673
  %v675 = vpop.f32.mrb[0].mxu0
  %676 = vmatprep.mubr.bf16.mxu0 0
  %677 = vmatmul.mubr.bf16.gmra.mrb[0].mxu0 %v322
  %v678 = vpop.f32.mrb[0].mxu0
  %v679 = vadd.f32 %v210, %v678
  %v680 = vpop.f32.mrb[0].mxu0
  %v681 = vpop.f32.mrb[0].mxu0
  %v682 = vadd.f32 %v210, %v681
  %v683 = vpop.f32.mrb[0].mxu0
  %684 = vmatprep.mubr.bf16.mxu0 0
  %685 = vmatmul.mubr.bf16.gmra.mrb[0].mxu0 %v325
  %v686 = vpop.f32.mrb[0].mxu0
  %v687 = vadd.f32 %v210, %v686
  %v688 = vpop.f32.mrb[0].mxu0
  %v689 = vpop.f32.mrb[0].mxu0
  %v690 = vadd.f32 %v210, %v689
  %v691 = vpop.f32.mrb[0].mxu0
  %692 = vmatprep.mubr.bf16.mxu0 0
  %693 = vmatmul.mubr.bf16.gmra.mrb[0].mxu0 %v328
  %v694 = vpop.f32.mrb[0].mxu0
  %v695 = vadd.f32 %v210, %v694
  %v696 = vpop.f32.mrb[0].mxu0
  %v697 = vpop.f32.mrb[0].mxu0
  %v698 = vadd.f32 %v210, %v697
  %v699 = vpop.f32.mrb[0].mxu0
  %700 = vmatprep.mubr.bf16.mxu0 0
  %701 = vmatmul.mubr.bf16.gmra.mrb[0].mxu0 %v331
  %v702 = vpop.f32.mrb[0].mxu0
  %v703 = vadd.f32 %v210, %v702
  %v704 = vpop.f32.mrb[0].mxu0
  %v705 = vpop.f32.mrb[0].mxu0
  %v706 = vadd.f32 %v210, %v705
  %v707 = vpop.f32.mrb[0].mxu0
  %708 = vmatprep.mubr.bf16.mxu0 0
  %709 = vmatmul.mubr.bf16.gmra.mrb[0].mxu0 %v334
  %v710 = vpop.f32.mrb[0].mxu0
  %v711 = vadd.f32 %v210, %v710
  %v712 = vpop.f32.mrb[0].mxu0
  %v713 = vpop.f32.mrb[0].mxu0
  %v714 = vadd.f32 %v210, %v713
  %v715 = vpop.f32.mrb[0].mxu0
  %716 = vmatprep.mubr.bf16.mxu0 0
  %717 = vmatmul.mubr.bf16.gmra.mrb[0].mxu0 %v337
  %v718 = vpop.f32.mrb[0].mxu0
  %v719 = vadd.f32 %v210, %v718
  %v720 = vpop.f32.mrb[0].mxu0
  %v721 = vpop.f32.mrb[0].mxu0
  %v722 = vadd.f32 %v210, %v721
  %v723 = vpop.f32.mrb[0].mxu0
  %724 = vmatprep.mubr.bf16.mxu0 0
  %725 = vmatmul.mubr.bf16.gmra.mrb[0].mxu0 %v340
  %v726 = vpop.f32.mrb[0].mxu0
  %v727 = vadd.f32 %v210, %v726
  %v728 = vpop.f32.mrb[0].mxu0
  %v729 = vpop.f32.mrb[0].mxu0
  %v730 = vadd.f32 %v210, %v729
  %v731 = vpop.f32.mrb[0].mxu0
  %732 = vmatprep.mubr.bf16.mxu0 0
  %733 = vmatmul.mubr.bf16.gmra.mrb[0].mxu0 %v343
  %v734 = vpop.f32.mrb[0].mxu0
  %v735 = vadd.f32 %v210, %v734
  %v736 = vpop.f32.mrb[0].mxu0
  %v737 = vpop.f32.mrb[0].mxu0
  %v738 = vadd.f32 %v210, %v737
  %v739 = vpop.f32.mrb[0].mxu0
  %740 = vmatprep.mubr.bf16.mxu0 0
  %741 = vmatmul.mubr.bf16.gmra.mrb[0].mxu0 %v346
  %v742 = vpop.f32.mrb[0].mxu0
  %v743 = vadd.f32 %v210, %v742
  %v744 = vpop.f32.mrb[0].mxu0
  %v745 = vpop.f32.mrb[0].mxu0
  %v746 = vadd.f32 %v210, %v745
  %v747 = vpop.f32.mrb[0].mxu0
  %748 = vmatprep.mubr.bf16.mxu0 0
  %749 = vmatmul.mubr.bf16.gmra.mrb[0].mxu0 %v349
  %v750 = vpop.f32.mrb[0].mxu0
  %v751 = vadd.f32 %v210, %v750
  %v752 = vpop.f32.mrb[0].mxu0
  %v753 = vpop.f32.mrb[0].mxu0
  %v754 = vadd.f32 %v210, %v753
  %v755 = vpop.f32.mrb[0].mxu0
  %756 = vmatprep.mubr.bf16.mxu0 0
  %757 = vmatmul.mubr.bf16.gmra.mrb[0].mxu0 %v352
  %v758 = vpop.f32.mrb[0].mxu0
  %v759 = vadd.f32 %v210, %v758
  %v760 = vpop.f32.mrb[0].mxu0
  %v761 = vpop.f32.mrb[0].mxu0
  %v762 = vadd.f32 %v210, %v761
  %v763 = vpop.f32.mrb[0].mxu0
  %764 = vmatprep.mubr.bf16.mxu0 0
  %765 = vmatmul.mubr.bf16.gmra.mrb[0].mxu0 %v355
  %v766 = vpop.f32.mrb[0].mxu0
  %v767 = vadd.f32 %v210, %v766
  %v768 = vpop.f32.mrb[0].mxu0
  %v769 = vpop.f32.mrb[0].mxu0
  %v770 = vadd.f32 %v210, %v769
  %v771 = vpop.f32.mrb[0].mxu0
  %772 = vmatprep.mubr.bf16.mxu0 0
  %773 = vmatmul.mubr.bf16.gmra.mrb[0].mxu0 %v358
  %v774 = vpop.f32.mrb[0].mxu0
  %v775 = vadd.f32 %v210, %v774
  %v776 = vpop.f32.mrb[0].mxu0
  %v777 = vpop.f32.mrb[0].mxu0
  %v778 = vadd.f32 %v210, %v777
  %v779 = vpop.f32.mrb[0].mxu0
  %780 = vmatprep.mubr.bf16.mxu0 0
  %781 = vmatmul.mubr.bf16.gmra.mrb[0].mxu0 %v361
  %v782 = vpop.f32.mrb[0].mxu0
  %v783 = vadd.f32 %v210, %v782
  %v784 = vpop.f32.mrb[0].mxu0
  %v785 = vpop.f32.mrb[0].mxu0
  %v786 = vadd.f32 %v210, %v785
  %v787 = vpop.f32.mrb[0].mxu0
  %788 = vmatprep.mubr.bf16.mxu0 0
  %789 = vmatmul.mubr.bf16.gmra.mrb[0].mxu0 %v364
  %v790 = vpop.f32.mrb[0].mxu0
  %v791 = vadd.f32 %v210, %v790
  %v792 = vpop.f32.mrb[0].mxu0
  %v793 = vpop.f32.mrb[0].mxu0
  %v794 = vadd.f32 %v210, %v793
  %v795 = vpop.f32.mrb[0].mxu0
  %796 = vmatprep.mubr.bf16.mxu0 0
  %797 = vmatmul.mubr.bf16.gmra.mrb[0].mxu0 %v367
  %v798 = vpop.f32.mrb[0].mxu0
  %v799 = vadd.f32 %v210, %v798
  %v800 = vpop.f32.mrb[0].mxu0
  %v801 = vpop.f32.mrb[0].mxu0
  %v802 = vadd.f32 %v210, %v801
  %v803 = vpop.f32.mrb[0].mxu0
  %804 = vmatprep.mubr.bf16.mxu0 0
  %805 = vmatmul.mubr.bf16.gmra.mrb[0].mxu0 %v370
  %v806 = vpop.f32.mrb[0].mxu0
  %v807 = vadd.f32 %v210, %v806
  %v808 = vpop.f32.mrb[0].mxu0
  %v809 = vpop.f32.mrb[0].mxu0
  %v810 = vadd.f32 %v210, %v809
  %v811 = vpop.f32.mrb[0].mxu0
  %812 = vmatprep.mubr.bf16.mxu0 0
  %813 = vmatmul.mubr.bf16.gmra.mrb[0].mxu0 %v373
  %v814 = vpop.f32.mrb[0].mxu0
  %v815 = vadd.f32 %v210, %v814
  %v816 = vpop.f32.mrb[0].mxu0
  %v817 = vpop.f32.mrb[0].mxu0
  %v818 = vadd.f32 %v210, %v817
  %v819 = vpop.f32.mrb[0].mxu0
  %820 = vmatprep.mubr.bf16.mxu0 0
  %821 = vmatmul.mubr.bf16.gmra.mrb[0].mxu0 %v376
  %v822 = vpop.f32.mrb[0].mxu0
  %v823 = vadd.f32 %v210, %v822
  %v824 = vpop.f32.mrb[0].mxu0
  %v825 = vpop.f32.mrb[0].mxu0
  %v826 = vadd.f32 %v210, %v825
  %v827 = vpop.f32.mrb[0].mxu0
  %828 = vmatprep.mubr.bf16.mxu0 0
  %829 = vmatmul.mubr.bf16.gmra.mrb[0].mxu0 %v379
  %v830 = vpop.f32.mrb[0].mxu0
  %v831 = vadd.f32 %v210, %v830
  %v832 = vpop.f32.mrb[0].mxu0
  %v833 = vpop.f32.mrb[0].mxu0
  %v834 = vadd.f32 %v210, %v833
  %v835 = vpop.f32.mrb[0].mxu0
  %836 = vmatprep.mubr.bf16.mxu0 0
  %837 = vmatmul.mubr.bf16.gmra.mrb[0].mxu0 %v382
  %v838 = vpop.f32.mrb[0].mxu0
  %v839 = vadd.f32 %v210, %v838
  %v840 = vpop.f32.mrb[0].mxu0
  %v841 = vpop.f32.mrb[0].mxu0
  %v842 = vadd.f32 %v210, %v841
  %v843 = vpop.f32.mrb[0].mxu0
  %844 = vmatprep.mubr.bf16.mxu0 0
  %845 = vmatmul.mubr.bf16.gmra.mrb[0].mxu0 %v385
  %v846 = vpop.f32.mrb[0].mxu0
  %v847 = vadd.f32 %v210, %v846
  %v848 = vpop.f32.mrb[0].mxu0
  %v849 = vpop.f32.mrb[0].mxu0
  %v850 = vadd.f32 %v210, %v849
  %v851 = vpop.f32.mrb[0].mxu0
  %852 = vmatprep.mubr.bf16.mxu0 0
  %853 = vmatmul.mubr.bf16.gmra.mrb[0].mxu0 %v388
  %v854 = vpop.f32.mrb[0].mxu0
  %v855 = vadd.f32 %v210, %v854
  %v856 = vpop.f32.mrb[0].mxu0
  %v857 = vpop.f32.mrb[0].mxu0
  %v858 = vadd.f32 %v210, %v857
  %v859 = vpop.f32.mrb[0].mxu0
  %860 = vmatprep.mubr.bf16.mxu0 0
  %861 = vmatmul.mubr.bf16.gmra.mrb[0].mxu0 %v391
  %v862 = vpop.f32.mrb[0].mxu0
  %v863 = vadd.f32 %v210, %v862
  %v864 = vpop.f32.mrb[0].mxu0
  %v865 = vpop.f32.mrb[0].mxu0
  %v866 = vadd.f32 %v210, %v865
  %v867 = vpop.f32.mrb[0].mxu0
  %868 = vmatprep.mubr.bf16.mxu0 0
  %869 = vmatmul.mubr.bf16.gmra.mrb[0].mxu0 %v394
  %v870 = vpop.f32.mrb[0].mxu0
  %v871 = vadd.f32 %v210, %v870
  %v872 = vpop.f32.mrb[0].mxu0
  %v873 = vpop.f32.mrb[0].mxu0
  %v874 = vadd.f32 %v210, %v873
  %v875 = vpop.f32.mrb[0].mxu0
  %876 = vmatprep.mubr.bf16.mxu0 0
  %877 = vmatmul.mubr.bf16.gmra.mrb[0].mxu0 %v397
  %v878 = vpop.f32.mrb[0].mxu0
  %v879 = vadd.f32 %v210, %v878
  %v880 = vpop.f32.mrb[0].mxu0
  %v881 = vpop.f32.mrb[0].mxu0
  %v882 = vadd.f32 %v210, %v881
  %v883 = vpop.f32.mrb[0].mxu0
  %884 = vmatprep.mubr.bf16.mxu0 0
  %885 = vmatmul.mubr.bf16.gmra.mrb[0].mxu0 %v400
  %v886 = vpop.f32.mrb[0].mxu0
  %v887 = vadd.f32 %v210, %v886
  %v888 = vpop.f32.mrb[0].mxu0
  %v889 = vpop.f32.mrb[0].mxu0
  %v890 = vadd.f32 %v210, %v889
  %v891 = vpop.f32.mrb[0].mxu0
  %892 = vmatprep.mubr.bf16.mxu0 0
  %893 = vmatmul.mubr.bf16.gmra.mrb[0].mxu0 %v403
  %v894 = vpop.f32.mrb[0].mxu0
  %v895 = vadd.f32 %v210, %v894
  %v896 = vpop.f32.mrb[0].mxu0
  %v897 = vpop.f32.mrb[0].mxu0
  %v898 = vadd.f32 %v210, %v897
  %v899 = vpop.f32.mrb[0].mxu0
  %900 = vmatprep.mubr.bf16.mxu0 0
  %901 = vmatmul.mubr.bf16.gmra.mrb[0].mxu0 %v406
  %v902 = vpop.f32.mrb[0].mxu0
  %v903 = vadd.f32 %v210, %v902
  %v904 = vpop.f32.mrb[0].mxu0
  %v905 = vpop.f32.mrb[0].mxu0
  %v906 = vadd.f32 %v210, %v905
  %v907 = vpop.f32.mrb[0].mxu0
  %908 = vmatprep.mubr.bf16.mxu0 0
  %909 = vmatmul.mubr.bf16.gmra.mrb[0].mxu0 %v409
  %v910 = vpop.f32.mrb[0].mxu0
  %v911 = vadd.f32 %v210, %v910
  %v912 = vpop.f32.mrb[0].mxu0
  %v913 = vpop.f32.mrb[0].mxu0
  %v914 = vadd.f32 %v210, %v913
  %v915 = vpop.f32.mrb[0].mxu0
  %916 = vmatprep.mubr.bf16.mxu0 0
  %917 = vmatmul.mubr.bf16.gmra.mrb[0].mxu0 %v412
  %v918 = vpop.f32.mrb[0].mxu0
  %v919 = vadd.f32 %v210, %v918
  %v920 = vpop.f32.mrb[0].mxu0
  %v921 = vpop.f32.mrb[0].mxu0
  %v922 = vadd.f32 %v210, %v921
  %v923 = vpop.f32.mrb[0].mxu0
  %924 = vmatprep.mubr.bf16.mxu0 0
  %925 = vmatmul.mubr.bf16.gmra.mrb[0].mxu0 %v415
  %v926 = vpop.f32.mrb[0].mxu0
  %v927 = vadd.f32 %v210, %v926
  %v928 = vpop.f32.mrb[0].mxu0
  %v929 = vpop.f32.mrb[0].mxu0
  %v930 = vadd.f32 %v210, %v929
  %v931 = vpop.f32.mrb[0].mxu0
  %932 = vmatprep.mubr.bf16.mxu0 0
  %933 = vmatmul.mubr.bf16.gmra.mrb[0].mxu0 %v418
  %v934 = vpop.f32.mrb[0].mxu0
  %v935 = vadd.f32 %v210, %v934
  %v936 = vpop.f32.mrb[0].mxu0
  %v937 = vpop.f32.mrb[0].mxu0
  %v938 = vpop.f32.mrb[0].mxu0
  %939 = vdwg.mxu0
  %v940 = vmax.f32 %v455, 0.0
  %v941 = vmax.f32 %v458, 0.0
  %v942 = vmax.f32 %v463, 0.0
  %v943 = vmax.f32 %v466, 0.0
  %v944 = vmax.f32 %v471, 0.0
  %v945 = vmax.f32 %v474, 0.0
  %v946 = vmax.f32 %v479, 0.0
  %v947 = vmax.f32 %v482, 0.0
  %v948 = vmax.f32 %v487, 0.0
  %v949 = vmax.f32 %v490, 0.0
  %v950 = vmax.f32 %v495, 0.0
  %v951 = vmax.f32 %v498, 0.0
  %v952 = vmax.f32 %v503, 0.0
  %v953 = vmax.f32 %v506, 0.0
  %v954 = vmax.f32 %v511, 0.0
  %v955 = vmax.f32 %v514, 0.0
  %v956 = vmax.f32 %v519, 0.0
  %v957 = vmax.f32 %v522, 0.0
  %v958 = vmax.f32 %v527, 0.0
  %v959 = vmax.f32 %v530, 0.0
  %v960 = vmax.f32 %v535, 0.0
  %v961 = vmax.f32 %v538, 0.0
  %v962 = vmax.f32 %v543, 0.0
  %v963 = vmax.f32 %v546, 0.0
  %v964 = vmax.f32 %v551, 0.0
  %v965 = vmax.f32 %v554, 0.0
  %v966 = vmax.f32 %v559, 0.0
  %v967 = vmax.f32 %v562, 0.0
  %v968 = vmax.f32 %v567, 0.0
  %v969 = vmax.f32 %v570, 0.0
  %v970 = vmax.f32 %v575, 0.0
  %v971 = vmax.f32 %v578, 0.0
  %v972 = vmax.f32 %v583, 0.0
  %v973 = vmax.f32 %v586, 0.0
  %v974 = vmax.f32 %v591, 0.0
  %v975 = vmax.f32 %v594, 0.0
  %v976 = vmax.f32 %v599, 0.0
  %v977 = vmax.f32 %v602, 0.0
  %v978 = vmax.f32 %v607, 0.0
  %v979 = vmax.f32 %v610, 0.0
  %v980 = vmax.f32 %v615, 0.0
  %v981 = vmax.f32 %v618, 0.0
  %v982 = vmax.f32 %v623, 0.0
  %v983 = vmax.f32 %v626, 0.0
  %v984 = vmax.f32 %v631, 0.0
  %v985 = vmax.f32 %v634, 0.0
  %v986 = vmax.f32 %v639, 0.0
  %v987 = vmax.f32 %v642, 0.0
  %v988 = vmax.f32 %v647, 0.0
  %v989 = vmax.f32 %v650, 0.0
  %v990 = vmax.f32 %v655, 0.0
  %v991 = vmax.f32 %v658, 0.0
  %v992 = vmax.f32 %v663, 0.0
  %v993 = vmax.f32 %v666, 0.0
  %v994 = vmax.f32 %v671, 0.0
  %v995 = vmax.f32 %v674, 0.0
  %v996 = vmax.f32 %v679, 0.0
  %v997 = vmax.f32 %v682, 0.0
  %v998 = vmax.f32 %v687, 0.0
  %v999 = vmax.f32 %v690, 0.0
  %v1000 = vmax.f32 %v695, 0.0
  %v1001 = vmax.f32 %v698, 0.0
  %v1002 = vmax.f32 %v703, 0.0
  %v1003 = vmax.f32 %v706, 0.0
  %v1004 = vmax.f32 %v711, 0.0
  %v1005 = vmax.f32 %v714, 0.0
  %v1006 = vmax.f32 %v719, 0.0
  %v1007 = vmax.f32 %v722, 0.0
  %v1008 = vmax.f32 %v727, 0.0
  %v1009 = vmax.f32 %v730, 0.0
  %v1010 = vmax.f32 %v735, 0.0
  %v1011 = vmax.f32 %v738, 0.0
  %v1012 = vmax.f32 %v743, 0.0
  %v1013 = vmax.f32 %v746, 0.0
  %v1014 = vmax.f32 %v751, 0.0
  %v1015 = vmax.f32 %v754, 0.0
  %v1016 = vmax.f32 %v759, 0.0
  %v1017 = vmax.f32 %v762, 0.0
  %v1018 = vmax.f32 %v767, 0.0
  %v1019 = vmax.f32 %v770, 0.0
  %v1020 = vmax.f32 %v775, 0.0
  %v1021 = vmax.f32 %v778, 0.0
  %v1022 = vmax.f32 %v783, 0.0
  %v1023 = vmax.f32 %v786, 0.0
  %v1024 = vmax.f32 %v791, 0.0
  %v1025 = vmax.f32 %v794, 0.0
  %v1026 = vmax.f32 %v799, 0.0
  %v1027 = vmax.f32 %v802, 0.0
  %v1028 = vmax.f32 %v807, 0.0
  %v1029 = vmax.f32 %v810, 0.0
  %v1030 = vmax.f32 %v815, 0.0
  %v1031 = vmax.f32 %v818, 0.0
  %v1032 = vmax.f32 %v823, 0.0
  %v1033 = vmax.f32 %v826, 0.0
  %v1034 = vmax.f32 %v831, 0.0
  %v1035 = vmax.f32 %v834, 0.0
  %v1036 = vmax.f32 %v839, 0.0
  %v1037 = vmax.f32 %v842, 0.0
  %v1038 = vmax.f32 %v847, 0.0
  %v1039 = vmax.f32 %v850, 0.0
  %v1040 = vmax.f32 %v855, 0.0
  %v1041 = vmax.f32 %v858, 0.0
  %v1042 = vmax.f32 %v863, 0.0
  %v1043 = vmax.f32 %v866, 0.0
  %v1044 = vmax.f32 %v871, 0.0
  %v1045 = vmax.f32 %v874, 0.0
  %v1046 = vmax.f32 %v879, 0.0
  %v1047 = vmax.f32 %v882, 0.0
  %v1048 = vmax.f32 %v887, 0.0
  %v1049 = vmax.f32 %v890, 0.0
  %v1050 = vmax.f32 %v895, 0.0
  %v1051 = vmax.f32 %v898, 0.0
  %v1052 = vmax.f32 %v903, 0.0
  %v1053 = vmax.f32 %v906, 0.0
  %v1054 = vmax.f32 %v911, 0.0
  %v1055 = vmax.f32 %v914, 0.0
  %v1056 = vmax.f32 %v919, 0.0
  %v1057 = vmax.f32 %v922, 0.0
  %v1058 = vmax.f32 %v927, 0.0
  %v1059 = vmax.f32 %v930, 0.0
  %v1060 = vmax.f32 %v935, 0.0
  %1061 = vst [vmem:[%s3] sm:$0xff] %v940
  %1062 = vst [vmem:[%s3 + $0x8] sm:$0xff] %v941
  %1063 = vst [vmem:[%s3 + $0x10] sm:$0xff] %v942
  %1064 = vst [vmem:[%s3 + $0x18] sm:$0xff] %v943
  %1065 = vst [vmem:[%s3 + $0x20] sm:$0xff] %v944
  %1066 = vst [vmem:[%s3 + $0x28] sm:$0xff] %v945
  %1067 = vst [vmem:[%s3 + $0x30] sm:$0xff] %v946
  %1068 = vst [vmem:[%s3 + $0x38] sm:$0xff] %v947
  %1069 = vst [vmem:[%s3 + $0x40] sm:$0xff] %v948
  %1070 = vst [vmem:[%s3 + $0x48] sm:$0xff] %v949
  %1071 = vst [vmem:[%s3 + $0x50] sm:$0xff] %v950
  %1072 = vst [vmem:[%s3 + $0x58] sm:$0xff] %v951
  %1073 = vst [vmem:[%s3 + $0x60] sm:$0xff] %v952
  %1074 = vst [vmem:[%s3 + $0x68] sm:$0xff] %v953
  %1075 = vst [vmem:[%s3 + $0x70] sm:$0xff] %v954
  %1076 = vst [vmem:[%s3 + $0x78] sm:$0xff] %v955
  %1077 = vst [vmem:[%s3 + $0x80] sm:$0xff] %v956
  %1078 = vst [vmem:[%s3 + $0x88] sm:$0xff] %v957
  %1079 = vst [vmem:[%s3 + $0x90] sm:$0xff] %v958
  %1080 = vst [vmem:[%s3 + $0x98] sm:$0xff] %v959
  %1081 = vst [vmem:[%s3 + $0xa0] sm:$0xff] %v960
  %1082 = vst [vmem:[%s3 + $0xa8] sm:$0xff] %v961
  %1083 = vst [vmem:[%s3 + $0xb0] sm:$0xff] %v962
  %1084 = vst [vmem:[%s3 + $0xb8] sm:$0xff] %v963
  %1085 = vst [vmem:[%s3 + $0xc0] sm:$0xff] %v964
  %1086 = vst [vmem:[%s3 + $0xc8] sm:$0xff] %v965
  %1087 = vst [vmem:[%s3 + $0xd0] sm:$0xff] %v966
  %1088 = vst [vmem:[%s3 + $0xd8] sm:$0xff] %v967
  %1089 = vst [vmem:[%s3 + $0xe0] sm:$0xff] %v968
  %1090 = vst [vmem:[%s3 + $0xe8] sm:$0xff] %v969
  %1091 = vst [vmem:[%s3 + $0xf0] sm:$0xff] %v970
  %1092 = vst [vmem:[%s3 + $0xf8] sm:$0xff] %v971
  %1093 = vst [vmem:[%s3 + $0x100] sm:$0xff] %v972
  %1094 = vst [vmem:[%s3 + $0x108] sm:$0xff] %v973
  %1095 = vst [vmem:[%s3 + $0x110] sm:$0xff] %v974
  %1096 = vst [vmem:[%s3 + $0x118] sm:$0xff] %v975
  %1097 = vst [vmem:[%s3 + $0x120] sm:$0xff] %v976
  %1098 = vst [vmem:[%s3 + $0x128] sm:$0xff] %v977
  %1099 = vst [vmem:[%s3 + $0x130] sm:$0xff] %v978
  %1100 = vst [vmem:[%s3 + $0x138] sm:$0xff] %v979
  %1101 = vst [vmem:[%s3 + $0x140] sm:$0xff] %v980
  %1102 = vst [vmem:[%s3 + $0x148] sm:$0xff] %v981
  %1103 = vst [vmem:[%s3 + $0x150] sm:$0xff] %v982
  %1104 = vst [vmem:[%s3 + $0x158] sm:$0xff] %v983
  %1105 = vst [vmem:[%s3 + $0x160] sm:$0xff] %v984
  %1106 = vst [vmem:[%s3 + $0x168] sm:$0xff] %v985
  %1107 = vst [vmem:[%s3 + $0x170] sm:$0xff] %v986
  %1108 = vst [vmem:[%s3 + $0x178] sm:$0xff] %v987
  %1109 = vst [vmem:[%s3 + $0x180] sm:$0xff] %v988
  %1110 = vst [vmem:[%s3 + $0x188] sm:$0xff] %v989
  %1111 = vst [vmem:[%s3 + $0x190] sm:$0xff] %v990
  %1112 = vst [vmem:[%s3 + $0x198] sm:$0xff] %v991
  %1113 = vst [vmem:[%s3 + $0x1a0] sm:$0xff] %v992
  %1114 = vst [vmem:[%s3 + $0x1a8] sm:$0xff] %v993
  %1115 = vst [vmem:[%s3 + $0x1b0] sm:$0xff] %v994
  %1116 = vst [vmem:[%s3 + $0x1b8] sm:$0xff] %v995
  %1117 = vst [vmem:[%s3 + $0x1c0] sm:$0xff] %v996
  %1118 = vst [vmem:[%s3 + $0x1c8] sm:$0xff] %v997
  %1119 = vst [vmem:[%s3 + $0x1d0] sm:$0xff] %v998
  %1120 = vst [vmem:[%s3 + $0x1d8] sm:$0xff] %v999
  %1121 = vst [vmem:[%s3 + $0x1e0] sm:$0xff] %v1000
  %1122 = vst [vmem:[%s3 + $0x1e8] sm:$0xff] %v1001
  %1123 = vst [vmem:[%s3 + $0x1f0] sm:$0xff] %v1002
  %1124 = vst [vmem:[%s3 + $0x1f8] sm:$0xff] %v1003
  %1125 = vst [vmem:[%s3 + $0x200] sm:$0xff] %v1004
  %1126 = vst [vmem:[%s3 + $0x208] sm:$0xff] %v1005
  %1127 = vst [vmem:[%s3 + $0x210] sm:$0xff] %v1006
  %1128 = vst [vmem:[%s3 + $0x218] sm:$0xff] %v1007
  %1129 = vst [vmem:[%s3 + $0x220] sm:$0xff] %v1008
  %1130 = vst [vmem:[%s3 + $0x228] sm:$0xff] %v1009
  %1131 = vst [vmem:[%s3 + $0x230] sm:$0xff] %v1010
  %1132 = vst [vmem:[%s3 + $0x238] sm:$0xff] %v1011
  %1133 = vst [vmem:[%s3 + $0x240] sm:$0xff] %v1012
  %1134 = vst [vmem:[%s3 + $0x248] sm:$0xff] %v1013
  %1135 = vst [vmem:[%s3 + $0x250] sm:$0xff] %v1014
  %1136 = vst [vmem:[%s3 + $0x258] sm:$0xff] %v1015
  %1137 = vst [vmem:[%s3 + $0x260] sm:$0xff] %v1016
  %1138 = vst [vmem:[%s3 + $0x268] sm:$0xff] %v1017
  %1139 = vst [vmem:[%s3 + $0x270] sm:$0xff] %v1018
  %1140 = vst [vmem:[%s3 + $0x278] sm:$0xff] %v1019
  %1141 = vst [vmem:[%s3 + $0x280] sm:$0xff] %v1020
  %1142 = vst [vmem:[%s3 + $0x288] sm:$0xff] %v1021
  %1143 = vst [vmem:[%s3 + $0x290] sm:$0xff] %v1022
  %1144 = vst [vmem:[%s3 + $0x298] sm:$0xff] %v1023
  %1145 = vst [vmem:[%s3 + $0x2a0] sm:$0xff] %v1024
  %1146 = vst [vmem:[%s3 + $0x2a8] sm:$0xff] %v1025
  %1147 = vst [vmem:[%s3 + $0x2b0] sm:$0xff] %v1026
  %1148 = vst [vmem:[%s3 + $0x2b8] sm:$0xff] %v1027
  %1149 = vst [vmem:[%s3 + $0x2c0] sm:$0xff] %v1028
  %1150 = vst [vmem:[%s3 + $0x2c8] sm:$0xff] %v1029
  %1151 = vst [vmem:[%s3 + $0x2d0] sm:$0xff] %v1030
  %1152 = vst [vmem:[%s3 + $0x2d8] sm:$0xff] %v1031
  %1153 = vst [vmem:[%s3 + $0x2e0] sm:$0xff] %v1032
  %1154 = vst [vmem:[%s3 + $0x2e8] sm:$0xff] %v1033
  %1155 = vst [vmem:[%s3 + $0x2f0] sm:$0xff] %v1034
  %1156 = vst [vmem:[%s3 + $0x2f8] sm:$0xff] %v1035
  %1157 = vst [vmem:[%s3 + $0x300] sm:$0xff] %v1036
  %1158 = vst [vmem:[%s3 + $0x308] sm:$0xff] %v1037
  %1159 = vst [vmem:[%s3 + $0x310] sm:$0xff] %v1038
  %1160 = vst [vmem:[%s3 + $0x318] sm:$0xff] %v1039
  %1161 = vst [vmem:[%s3 + $0x320] sm:$0xff] %v1040
  %1162 = vst [vmem:[%s3 + $0x328] sm:$0xff] %v1041
  %1163 = vst [vmem:[%s3 + $0x330] sm:$0xff] %v1042
  %1164 = vst [vmem:[%s3 + $0x338] sm:$0xff] %v1043
  %1165 = vst [vmem:[%s3 + $0x340] sm:$0xff] %v1044
  %1166 = vst [vmem:[%s3 + $0x348] sm:$0xff] %v1045
  %1167 = vst [vmem:[%s3 + $0x350] sm:$0xff] %v1046
  %1168 = vst [vmem:[%s3 + $0x358] sm:$0xff] %v1047
  %1169 = vst [vmem:[%s3 + $0x360] sm:$0xff] %v1048
  %1170 = vst [vmem:[%s3 + $0x368] sm:$0xff] %v1049
  %1171 = vst [vmem:[%s3 + $0x370] sm:$0xff] %v1050
  %1172 = vst [vmem:[%s3 + $0x378] sm:$0xff] %v1051
  %1173 = vst [vmem:[%s3 + $0x380] sm:$0xff] %v1052
  %1174 = vst [vmem:[%s3 + $0x388] sm:$0xff] %v1053
  %1175 = vst [vmem:[%s3 + $0x390] sm:$0xff] %v1054
  %1176 = vst [vmem:[%s3 + $0x398] sm:$0xff] %v1055
  %1177 = vst [vmem:[%s3 + $0x3a0] sm:$0xff] %v1056
  %1178 = vst [vmem:[%s3 + $0x3a8] sm:$0xff] %v1057
  %1179 = vst [vmem:[%s3 + $0x3b0] sm:$0xff] %v1058
  %1180 = vst [vmem:[%s3 + $0x3b8] sm:$0xff] %v1059
  %1181 = vst [vmem:[%s3 + $0x3c0] sm:$0xff] %v1060
  // Predicated region
  $region14: #{qnetwork_forward.3} parent=0 // pred_check
    _
  $region15: #{qnetwork_forward.3} parent=0 // pred_check_branch
    %1183 = sbr.rel (0) target = $region17
  $region16: #{qnetwork_forward.3} parent=0 // pred_region
    _
  $region17: #{qnetwork_forward.3} parent=0 // pred_fallthru
    _
  // Predicated region
  $region18: #{qnetwork_forward.3} parent=0 // pred_check
    _
  $region19: #{qnetwork_forward.3} parent=0 // pred_check_branch
    %1185 = sbr.rel (0) target = $region21
  $region20: #{qnetwork_forward.3} parent=0 // pred_region
    _
  $region21: #{qnetwork_forward.3} parent=0 // pred_fallthru
    _

// kernel: qnetwork_forward.4
$region0: #{qnetwork_forward.4}
  #allocation0 [shape = 'u32[]', space=smem, size = 0x4, offset = 0x4, fixed_abs, tag = 'smem constant byte address 0x4 - core index']
  #allocation1 [shape = 'u32[144,128]{1,0:T(1,128)}', space=vmem, size = 0x12000, scoped, tag = 'internal scratch']
  %s0 = inlined_call_operand.vmem [shape: f32[200,512], index: 0, kind: input, shape index: {}]
  %s1 = inlined_call_operand.vmem [shape: bf16[512,128], index: 1, kind: input, shape index: {}]
  %s2 = inlined_call_operand.vmem [shape: f32[1,128], index: 2, kind: input, shape index: {}]
  %s3 = inlined_call_operand.vmem [shape: f32[200,128], index: 3, kind: output, shape index: {}]
  %s4 = sld [smem:[#allocation0]]
  $region22: #{qnetwork_forward.4} parent=0
    _
  %s6 = ssub.s32 1, %s4
  %s7 = scalar_select 0, %s6, %s4
  // Predicated region
  $region2: #{qnetwork_forward.4} parent=0 // pred_check
    _
  $region3: #{qnetwork_forward.4} parent=0 // pred_check_branch
    %9 = sbr.rel (0) target = $region5
  $region4: #{qnetwork_forward.4} parent=0 // pred_region
    _
  $region5: #{qnetwork_forward.4} parent=0 // pred_fallthru
    _
  // Predicated region
  $region6: #{qnetwork_forward.4} parent=0 // pred_check
    _
  $region7: #{qnetwork_forward.4} parent=0 // pred_check_branch
    %11 = sbr.rel (0) target = $region9
  $region8: #{qnetwork_forward.4} parent=0 // pred_region
    _
  $region9: #{qnetwork_forward.4} parent=0 // pred_fallthru
    _
  // Predicated region
  $region10: #{qnetwork_forward.4} parent=0 // pred_check
    _
  $region11: #{qnetwork_forward.4} parent=0 // pred_check_branch
    %13 = sbr.rel (0) target = $region13
  $region12: #{qnetwork_forward.4} parent=0 // pred_region
    _
  $region13: #{qnetwork_forward.4} parent=0 // pred_fallthru
    _
  %v15 = vld [vmem:[%s0] sm:$0xff]
  %v16 = vld [vmem:[%s0 + $0x8] sm:$0xff]
  %v17 = vld [vmem:[%s0 + $0x10] sm:$0xff]
  %v18 = vld [vmem:[%s0 + $0x18] sm:$0xff]
  %v19 = vld [vmem:[%s0 + $0x20] sm:$0xff]
  %v20 = vld [vmem:[%s0 + $0x28] sm:$0xff]
  %v21 = vld [vmem:[%s0 + $0x30] sm:$0xff]
  %v22 = vld [vmem:[%s0 + $0x38] sm:$0xff]
  %v23 = vld [vmem:[%s0 + $0x40] sm:$0xff]
  %v24 = vld [vmem:[%s0 + $0x48] sm:$0xff]
  %v25 = vld [vmem:[%s0 + $0x50] sm:$0xff]
  %v26 = vld [vmem:[%s0 + $0x58] sm:$0xff]
  %v27 = vld [vmem:[%s0 + $0x60] sm:$0xff]
  %v28 = vld [vmem:[%s0 + $0x68] sm:$0xff]
  %v29 = vld [vmem:[%s0 + $0x70] sm:$0xff]
  %v30 = vld [vmem:[%s0 + $0x78] sm:$0xff]
  %v31 = vld [vmem:[%s0 + $0x80] sm:$0xff]
  %v32 = vld [vmem:[%s0 + $0x88] sm:$0xff]
  %v33 = vld [vmem:[%s0 + $0x90] sm:$0xff]
  %v34 = vld [vmem:[%s0 + $0x98] sm:$0xff]
  %v35 = vld [vmem:[%s0 + $0xa0] sm:$0xff]
  %v36 = vld [vmem:[%s0 + $0xa8] sm:$0xff]
  %v37 = vld [vmem:[%s0 + $0xb0] sm:$0xff]
  %v38 = vld [vmem:[%s0 + $0xb8] sm:$0xff]
  %v39 = vld [vmem:[%s0 + $0xc0] sm:$0xff]
  %v40 = vld [vmem:[%s0 + $0xc8] sm:$0xff]
  %v41 = vld [vmem:[%s0 + $0xd0] sm:$0xff]
  %v42 = vld [vmem:[%s0 + $0xd8] sm:$0xff]
  %v43 = vld [vmem:[%s0 + $0xe0] sm:$0xff]
  %v44 = vld [vmem:[%s0 + $0xe8] sm:$0xff]
  %v45 = vld [vmem:[%s0 + $0xf0] sm:$0xff]
  %v46 = vld [vmem:[%s0 + $0xf8] sm:$0xff]
  %v47 = vld [vmem:[%s0 + $0x100] sm:$0xff]
  %v48 = vld [vmem:[%s0 + $0x108] sm:$0xff]
  %v49 = vld [vmem:[%s0 + $0x110] sm:$0xff]
  %v50 = vld [vmem:[%s0 + $0x118] sm:$0xff]
  %v51 = vld [vmem:[%s0 + $0x120] sm:$0xff]
  %v52 = vld [vmem:[%s0 + $0x128] sm:$0xff]
  %v53 = vld [vmem:[%s0 + $0x130] sm:$0xff]
  %v54 = vld [vmem:[%s0 + $0x138] sm:$0xff]
  %v55 = vld [vmem:[%s0 + $0x140] sm:$0xff]
  %v56 = vld [vmem:[%s0 + $0x148] sm:$0xff]
  %v57 = vld [vmem:[%s0 + $0x150] sm:$0xff]
  %v58 = vld [vmem:[%s0 + $0x158] sm:$0xff]
  %v59 = vld [vmem:[%s0 + $0x160] sm:$0xff]
  %v60 = vld [vmem:[%s0 + $0x168] sm:$0xff]
  %v61 = vld [vmem:[%s0 + $0x170] sm:$0xff]
  %v62 = vld [vmem:[%s0 + $0x178] sm:$0xff]
  %v63 = vld [vmem:[%s0 + $0x180] sm:$0xff]
  %v64 = vld [vmem:[%s0 + $0x188] sm:$0xff]
  %v65 = vld [vmem:[%s0 + $0x190] sm:$0xff]
  %v66 = vld [vmem:[%s0 + $0x198] sm:$0xff]
  %v67 = vld [vmem:[%s0 + $0x1a0] sm:$0xff]
  %v68 = vld [vmem:[%s0 + $0x1a8] sm:$0xff]
  %v69 = vld [vmem:[%s0 + $0x1b0] sm:$0xff]
  %v70 = vld [vmem:[%s0 + $0x1b8] sm:$0xff]
  %v71 = vld [vmem:[%s0 + $0x1c0] sm:$0xff]
  %v72 = vld [vmem:[%s0 + $0x1c8] sm:$0xff]
  %v73 = vld [vmem:[%s0 + $0x1d0] sm:$0xff]
  %v74 = vld [vmem:[%s0 + $0x1d8] sm:$0xff]
  %v75 = vld [vmem:[%s0 + $0x1e0] sm:$0xff]
  %v76 = vld [vmem:[%s0 + $0x1e8] sm:$0xff]
  %v77 = vld [vmem:[%s0 + $0x1f0] sm:$0xff]
  %v78 = vld [vmem:[%s0 + $0x1f8] sm:$0xff]
  %v79 = vld [vmem:[%s0 + $0x200] sm:$0xff]
  %v80 = vld [vmem:[%s0 + $0x208] sm:$0xff]
  %v81 = vld [vmem:[%s0 + $0x210] sm:$0xff]
  %v82 = vld [vmem:[%s0 + $0x218] sm:$0xff]
  %v83 = vld [vmem:[%s0 + $0x220] sm:$0xff]
  %v84 = vld [vmem:[%s0 + $0x228] sm:$0xff]
  %v85 = vld [vmem:[%s0 + $0x230] sm:$0xff]
  %v86 = vld [vmem:[%s0 + $0x238] sm:$0xff]
  %v87 = vld [vmem:[%s0 + $0x240] sm:$0xff]
  %v88 = vld [vmem:[%s0 + $0x248] sm:$0xff]
  %v89 = vld [vmem:[%s0 + $0x250] sm:$0xff]
  %v90 = vld [vmem:[%s0 + $0x258] sm:$0xff]
  %v91 = vld [vmem:[%s0 + $0x260] sm:$0xff]
  %v92 = vld [vmem:[%s0 + $0x268] sm:$0xff]
  %v93 = vld [vmem:[%s0 + $0x270] sm:$0xff]
  %v94 = vld [vmem:[%s0 + $0x278] sm:$0xff]
  %v95 = vld [vmem:[%s0 + $0x280] sm:$0xff]
  %v96 = vld [vmem:[%s0 + $0x288] sm:$0xff]
  %v97 = vld [vmem:[%s0 + $0x290] sm:$0xff]
  %v98 = vld [vmem:[%s0 + $0x298] sm:$0xff]
  %v99 = vld [vmem:[%s0 + $0x2a0] sm:$0xff]
  %v100 = vld [vmem:[%s0 + $0x2a8] sm:$0xff]
  %v101 = vld [vmem:[%s0 + $0x2b0] sm:$0xff]
  %v102 = vld [vmem:[%s0 + $0x2b8] sm:$0xff]
  %v103 = vld [vmem:[%s0 + $0x2c0] sm:$0xff]
  %v104 = vld [vmem:[%s0 + $0x2c8] sm:$0xff]
  %v105 = vld [vmem:[%s0 + $0x2d0] sm:$0xff]
  %v106 = vld [vmem:[%s0 + $0x2d8] sm:$0xff]
  %v107 = vld [vmem:[%s0 + $0x2e0] sm:$0xff]
  %v108 = vld [vmem:[%s0 + $0x2e8] sm:$0xff]
  %v109 = vld [vmem:[%s0 + $0x2f0] sm:$0xff]
  %v110 = vld [vmem:[%s0 + $0x2f8] sm:$0xff]
  %v111 = vld [vmem:[%s0 + $0x300] sm:$0xff]
  %v112 = vld [vmem:[%s0 + $0x308] sm:$0xff]
  %v113 = vld [vmem:[%s0 + $0x310] sm:$0xff]
  %v114 = vld [vmem:[%s0 + $0x318] sm:$0xff]
  %v115 = vpack.c.bf16 %v19, %v15
  %v116 = vpack.c.bf16 %v20, %v16
  %v117 = vpack.c.bf16 %v21, %v17
  %v118 = vpack.c.bf16 %v22, %v18
  %v119 = vpack.c.bf16 %v27, %v23
  %v120 = vpack.c.bf16 %v28, %v24
  %v121 = vpack.c.bf16 %v29, %v25
  %v122 = vpack.c.bf16 %v30, %v26
  %v123 = vpack.c.bf16 %v35, %v31
  %v124 = vpack.c.bf16 %v36, %v32
  %v125 = vpack.c.bf16 %v37, %v33
  %v126 = vpack.c.bf16 %v38, %v34
  %v127 = vpack.c.bf16 %v43, %v39
  %v128 = vpack.c.bf16 %v44, %v40
  %v129 = vpack.c.bf16 %v45, %v41
  %v130 = vpack.c.bf16 %v46, %v42
  %v131 = vpack.c.bf16 %v51, %v47
  %v132 = vpack.c.bf16 %v52, %v48
  %v133 = vpack.c.bf16 %v53, %v49
  %v134 = vpack.c.bf16 %v54, %v50
  %v135 = vpack.c.bf16 %v59, %v55
  %v136 = vpack.c.bf16 %v60, %v56
  %v137 = vpack.c.bf16 %v61, %v57
  %v138 = vpack.c.bf16 %v62, %v58
  %v139 = vpack.c.bf16 %v67, %v63
  %v140 = vpack.c.bf16 %v68, %v64
  %v141 = vpack.c.bf16 %v69, %v65
  %v142 = vpack.c.bf16 %v70, %v66
  %v143 = vpack.c.bf16 %v75, %v71
  %v144 = vpack.c.bf16 %v76, %v72
  %v145 = vpack.c.bf16 %v77, %v73
  %v146 = vpack.c.bf16 %v78, %v74
  %v147 = vpack.c.bf16 %v83, %v79
  %v148 = vpack.c.bf16 %v84, %v80
  %v149 = vpack.c.bf16 %v85, %v81
  %v150 = vpack.c.bf16 %v86, %v82
  %v151 = vpack.c.bf16 %v91, %v87
  %v152 = vpack.c.bf16 %v92, %v88
  %v153 = vpack.c.bf16 %v93, %v89
  %v154 = vpack.c.bf16 %v94, %v90
  %v155 = vpack.c.bf16 %v99, %v95
  %v156 = vpack.c.bf16 %v100, %v96
  %v157 = vpack.c.bf16 %v101, %v97
  %v158 = vpack.c.bf16 %v102, %v98
  %v159 = vpack.c.bf16 %v107, %v103
  %v160 = vpack.c.bf16 %v108, %v104
  %v161 = vpack.c.bf16 %v109, %v105
  %v162 = vpack.c.bf16 %v110, %v106
  %v163 = vpack.c.bf16 %v111, %v111
  %v164 = vpack.c.bf16 %v112, %v112
  %v165 = vpack.c.bf16 %v113, %v113
  %v166 = vpack.c.bf16 %v114, %v114
  %v167 = vld [vmem:[%s1] sm:$0xf]
  %v168 = vld [vmem:[%s1 + $0x4] sm:$0xf]
  %v169 = vld [vmem:[%s1 + $0x8] sm:$0xf]
  %v170 = vld [vmem:[%s1 + $0xc] sm:$0xf]
  %v171 = vld [vmem:[%s1 + $0x10] sm:$0xf]
  %v172 = vld [vmem:[%s1 + $0x14] sm:$0xf]
  %v173 = vld [vmem:[%s1 + $0x18] sm:$0xf]
  %v174 = vld [vmem:[%s1 + $0x1c] sm:$0xf]
  %v175 = vld [vmem:[%s1 + $0x20] sm:$0xf]
  %v176 = vld [vmem:[%s1 + $0x24] sm:$0xf]
  %v177 = vld [vmem:[%s1 + $0x28] sm:$0xf]
  %v178 = vld [vmem:[%s1 + $0x2c] sm:$0xf]
  %v179 = vld [vmem:[%s1 + $0x30] sm:$0xf]
  %v180 = vld [vmem:[%s1 + $0x34] sm:$0xf]
  %v181 = vld [vmem:[%s1 + $0x38] sm:$0xf]
  %v182 = vld [vmem:[%s1 + $0x3c] sm:$0xf]
  %v183 = vld [vmem:[%s1 + $0x40] sm:$0xf]
  %v184 = vld [vmem:[%s1 + $0x44] sm:$0xf]
  %v185 = vld [vmem:[%s1 + $0x48] sm:$0xf]
  %v186 = vld [vmem:[%s1 + $0x4c] sm:$0xf]
  %v187 = vld [vmem:[%s1 + $0x50] sm:$0xf]
  %v188 = vld [vmem:[%s1 + $0x54] sm:$0xf]
  %v189 = vld [vmem:[%s1 + $0x58] sm:$0xf]
  %v190 = vld [vmem:[%s1 + $0x5c] sm:$0xf]
  %v191 = vld [vmem:[%s1 + $0x60] sm:$0xf]
  %v192 = vld [vmem:[%s1 + $0x64] sm:$0xf]
  %v193 = vld [vmem:[%s1 + $0x68] sm:$0xf]
  %v194 = vld [vmem:[%s1 + $0x6c] sm:$0xf]
  %v195 = vld [vmem:[%s1 + $0x70] sm:$0xf]
  %v196 = vld [vmem:[%s1 + $0x74] sm:$0xf]
  %v197 = vld [vmem:[%s1 + $0x78] sm:$0xf]
  %v198 = vld [vmem:[%s1 + $0x7c] sm:$0xf]
  %v199 = vld [vmem:[%s1 + $0x80] sm:$0xf]
  %v200 = vld [vmem:[%s1 + $0x84] sm:$0xf]
  %v201 = vld [vmem:[%s1 + $0x88] sm:$0xf]
  %v202 = vld [vmem:[%s1 + $0x8c] sm:$0xf]
  %v203 = vld [vmem:[%s1 + $0x90] sm:$0xf]
  %v204 = vld [vmem:[%s1 + $0x94] sm:$0xf]
  %v205 = vld [vmem:[%s1 + $0x98] sm:$0xf]
  %v206 = vld [vmem:[%s1 + $0x9c] sm:$0xf]
  %v207 = vld [vmem:[%s1 + $0xa0] sm:$0xf]
  %v208 = vld [vmem:[%s1 + $0xa4] sm:$0xf]
  %v209 = vld [vmem:[%s1 + $0xa8] sm:$0xf]
  %v210 = vld [vmem:[%s1 + $0xac] sm:$0xf]
  %v211 = vld [vmem:[%s1 + $0xb0] sm:$0xf]
  %v212 = vld [vmem:[%s1 + $0xb4] sm:$0xf]
  %v213 = vld [vmem:[%s1 + $0xb8] sm:$0xf]
  %v214 = vld [vmem:[%s1 + $0xbc] sm:$0xf]
  %v215 = vld [vmem:[%s1 + $0xc0] sm:$0xf]
  %v216 = vld [vmem:[%s1 + $0xc4] sm:$0xf]
  %v217 = vld [vmem:[%s1 + $0xc8] sm:$0xf]
  %v218 = vld [vmem:[%s1 + $0xcc] sm:$0xf]
  %v219 = vld [vmem:[%s1 + $0xd0] sm:$0xf]
  %v220 = vld [vmem:[%s1 + $0xd4] sm:$0xf]
  %v221 = vld [vmem:[%s1 + $0xd8] sm:$0xf]
  %v222 = vld [vmem:[%s1 + $0xdc] sm:$0xf]
  %v223 = vld [vmem:[%s1 + $0xe0] sm:$0xf]
  %v224 = vld [vmem:[%s1 + $0xe4] sm:$0xf]
  %v225 = vld [vmem:[%s1 + $0xe8] sm:$0xf]
  %v226 = vld [vmem:[%s1 + $0xec] sm:$0xf]
  %v227 = vld [vmem:[%s1 + $0xf0] sm:$0xf]
  %v228 = vld [vmem:[%s1 + $0xf4] sm:$0xf]
  %v229 = vld [vmem:[%s1 + $0xf8] sm:$0xf]
  %v230 = vld [vmem:[%s1 + $0xfc] sm:$0xf]
  %v231 = vld [vmem:[%s2] sm:$0x1]
  %v233 = vlaneseq
  %v234 = vshrl.u32 %v233, 7
  %v235 = vsub.s32 0, %v234
  %v236 = vrot.slane %v231, %v235
  %v302 = vunpack.c.l.b16 %v167
  %v303 = vunpack.c.l.b16 %v168
  %v304 = vunpack.c.l.b16 %v169
  %v305 = vunpack.c.l.b16 %v170
  %v306 = vunpack.c.l.b16 %v171
  %v307 = vunpack.c.l.b16 %v172
  %v308 = vunpack.c.l.b16 %v173
  %v309 = vunpack.c.l.b16 %v174
  %v310 = vunpack.c.l.b16 %v175
  %v311 = vunpack.c.l.b16 %v176
  %v312 = vunpack.c.l.b16 %v177
  %v313 = vunpack.c.l.b16 %v178
  %v314 = vunpack.c.l.b16 %v179
  %v315 = vunpack.c.l.b16 %v180
  %v316 = vunpack.c.l.b16 %v181
  %v317 = vunpack.c.l.b16 %v182
  %v318 = vunpack.c.l.b16 %v183
  %v319 = vunpack.c.l.b16 %v184
  %v320 = vunpack.c.l.b16 %v185
  %v321 = vunpack.c.l.b16 %v186
  %v322 = vunpack.c.l.b16 %v187
  %v323 = vunpack.c.l.b16 %v188
  %v324 = vunpack.c.l.b16 %v189
  %v325 = vunpack.c.l.b16 %v190
  %v326 = vunpack.c.l.b16 %v191
  %v327 = vunpack.c.l.b16 %v192
  %v328 = vunpack.c.l.b16 %v193
  %v329 = vunpack.c.l.b16 %v194
  %v330 = vunpack.c.l.b16 %v195
  %v331 = vunpack.c.l.b16 %v196
  %v332 = vunpack.c.l.b16 %v197
  %v333 = vunpack.c.l.b16 %v198
  %v334 = vunpack.c.l.b16 %v199
  %v335 = vunpack.c.l.b16 %v200
  %v336 = vunpack.c.l.b16 %v201
  %v337 = vunpack.c.l.b16 %v202
  %v338 = vunpack.c.l.b16 %v203
  %v339 = vunpack.c.l.b16 %v204
  %v340 = vunpack.c.l.b16 %v205
  %v341 = vunpack.c.l.b16 %v206
  %v342 = vunpack.c.l.b16 %v207
  %v343 = vunpack.c.l.b16 %v208
  %v344 = vunpack.c.l.b16 %v209
  %v345 = vunpack.c.l.b16 %v210
  %v346 = vunpack.c.l.b16 %v211
  %v347 = vunpack.c.l.b16 %v212
  %v348 = vunpack.c.l.b16 %v213
  %v349 = vunpack.c.l.b16 %v214
  %v350 = vunpack.c.l.b16 %v215
  %v351 = vunpack.c.l.b16 %v216
  %v352 = vunpack.c.l.b16 %v217
  %v353 = vunpack.c.l.b16 %v218
  %v354 = vunpack.c.l.b16 %v219
  %v355 = vunpack.c.l.b16 %v220
  %v356 = vunpack.c.l.b16 %v221
  %v357 = vunpack.c.l.b16 %v222
  %v358 = vunpack.c.l.b16 %v223
  %v359 = vunpack.c.l.b16 %v224
  %v360 = vunpack.c.l.b16 %v225
  %v361 = vunpack.c.l.b16 %v226
  %v362 = vunpack.c.l.b16 %v227
  %v363 = vunpack.c.l.b16 %v228
  %v364 = vunpack.c.l.b16 %v229
  %v365 = vunpack.c.l.b16 %v230
  %v366 = vpack.c.b16 %v303, %v302
  %v367 = vpack.c.b16 %v305, %v304
  %v368 = vpack.c.b16 %v307, %v306
  %v369 = vpack.c.b16 %v309, %v308
  %v370 = vpack.c.b16 %v311, %v310
  %v371 = vpack.c.b16 %v313, %v312
  %v372 = vpack.c.b16 %v315, %v314
  %v373 = vpack.c.b16 %v317, %v316
  %v374 = vpack.c.b16 %v319, %v318
  %v375 = vpack.c.b16 %v321, %v320
  %v376 = vpack.c.b16 %v323, %v322
  %v377 = vpack.c.b16 %v325, %v324
  %v378 = vpack.c.b16 %v327, %v326
  %v379 = vpack.c.b16 %v329, %v328
  %v380 = vpack.c.b16 %v331, %v330
  %v381 = vpack.c.b16 %v333, %v332
  %v382 = vpack.c.b16 %v335, %v334
  %v383 = vpack.c.b16 %v337, %v336
  %v384 = vpack.c.b16 %v339, %v338
  %v385 = vpack.c.b16 %v341, %v340
  %v386 = vpack.c.b16 %v343, %v342
  %v387 = vpack.c.b16 %v345, %v344
  %v388 = vpack.c.b16 %v347, %v346
  %v389 = vpack.c.b16 %v349, %v348
  %v390 = vpack.c.b16 %v351, %v350
  %v391 = vpack.c.b16 %v353, %v352
  %v392 = vpack.c.b16 %v355, %v354
  %v393 = vpack.c.b16 %v357, %v356
  %v394 = vpack.c.b16 %v359, %v358
  %v395 = vpack.c.b16 %v361, %v360
  %v396 = vpack.c.b16 %v363, %v362
  %v397 = vpack.c.b16 %v365, %v364
  %430 = vmatprep.subr.bf16.mxu0 0
  %431 = vmatpush1.bf16.msra.mxu0 %v366
  %432 = vmatprep.subr.bf16.mxu0 0
  %433 = vmatpush1.bf16.msra.mxu0 %v367
  %434 = vmatprep.subr.bf16.mxu0 0
  %435 = vmatpush1.bf16.msra.mxu0 %v368
  %436 = vmatprep.subr.bf16.mxu0 0
  %437 = vmatpush1.bf16.msra.mxu0 %v369
  %438 = vmatprep.subr.bf16.mxu0 0
  %439 = vmatpush1.bf16.msra.mxu0 %v370
  %440 = vmatprep.subr.bf16.mxu0 0
  %441 = vmatpush1.bf16.msra.mxu0 %v371
  %442 = vmatprep.subr.bf16.mxu0 0
  %443 = vmatpush1.bf16.msra.mxu0 %v372
  %444 = vmatprep.subr.bf16.mxu0 0
  %445 = vmatpush1.bf16.msra.mxu0 %v373
  %446 = vmatprep.subr.bf16.mxu0 0
  %447 = vmatpush1.bf16.msra.mxu0 %v374
  %448 = vmatprep.subr.bf16.mxu0 0
  %449 = vmatpush1.bf16.msra.mxu0 %v375
  %450 = vmatprep.subr.bf16.mxu0 0
  %451 = vmatpush1.bf16.msra.mxu0 %v376
  %452 = vmatprep.subr.bf16.mxu0 0
  %453 = vmatpush1.bf16.msra.mxu0 %v377
  %454 = vmatprep.subr.bf16.mxu0 0
  %455 = vmatpush1.bf16.msra.mxu0 %v378
  %456 = vmatprep.subr.bf16.mxu0 0
  %457 = vmatpush1.bf16.msra.mxu0 %v379
  %458 = vmatprep.subr.bf16.mxu0 0
  %459 = vmatpush1.bf16.msra.mxu0 %v380
  %460 = vmatprep.subr.bf16.mxu0 0
  %461 = vmatpush1.bf16.msra.mxu0 %v381
  %462 = vmatprep.mubr.bf16.mxu0 %v116
  %463 = vmatmul.mubr.bf16.gmra.mrb[0].mxu0 %v115
  %v464 = vpop.f32.mrb[0].mxu0
  %v465 = vadd.f32 %v236, %v464
  %v466 = vpop.f32.mrb[0].mxu0
  %v467 = vpop.f32.mrb[0].mxu0
  %v468 = vadd.f32 %v236, %v467
  %v469 = vpop.f32.mrb[0].mxu0
  %470 = vmatprep.mubr.bf16.mxu0 %v120
  %471 = vmatmul.mubr.bf16.gmra.mrb[0].mxu0 %v119
  %v472 = vpop.f32.mrb[0].mxu0
  %v473 = vadd.f32 %v236, %v472
  %v474 = vpop.f32.mrb[0].mxu0
  %v475 = vpop.f32.mrb[0].mxu0
  %v476 = vadd.f32 %v236, %v475
  %v477 = vpop.f32.mrb[0].mxu0
  %478 = vmatprep.mubr.bf16.mxu0 %v124
  %479 = vmatmul.mubr.bf16.gmra.mrb[0].mxu0 %v123
  %v480 = vpop.f32.mrb[0].mxu0
  %v481 = vadd.f32 %v236, %v480
  %v482 = vpop.f32.mrb[0].mxu0
  %v483 = vpop.f32.mrb[0].mxu0
  %v484 = vadd.f32 %v236, %v483
  %v485 = vpop.f32.mrb[0].mxu0
  %486 = vmatprep.mubr.bf16.mxu0 %v128
  %487 = vmatmul.mubr.bf16.gmra.mrb[0].mxu0 %v127
  %v488 = vpop.f32.mrb[0].mxu0
  %v489 = vadd.f32 %v236, %v488
  %v490 = vpop.f32.mrb[0].mxu0
  %v491 = vpop.f32.mrb[0].mxu0
  %v492 = vadd.f32 %v236, %v491
  %v493 = vpop.f32.mrb[0].mxu0
  %494 = vmatprep.mubr.bf16.mxu0 %v132
  %495 = vmatmul.mubr.bf16.gmra.mrb[0].mxu0 %v131
  %v496 = vpop.f32.mrb[0].mxu0
  %v497 = vadd.f32 %v236, %v496
  %v498 = vpop.f32.mrb[0].mxu0
  %v499 = vpop.f32.mrb[0].mxu0
  %v500 = vadd.f32 %v236, %v499
  %v501 = vpop.f32.mrb[0].mxu0
  %502 = vmatprep.mubr.bf16.mxu0 %v136
  %503 = vmatmul.mubr.bf16.gmra.mrb[0].mxu0 %v135
  %v504 = vpop.f32.mrb[0].mxu0
  %v505 = vadd.f32 %v236, %v504
  %v506 = vpop.f32.mrb[0].mxu0
  %v507 = vpop.f32.mrb[0].mxu0
  %v508 = vadd.f32 %v236, %v507
  %v509 = vpop.f32.mrb[0].mxu0
  %510 = vmatprep.mubr.bf16.mxu0 %v140
  %511 = vmatmul.mubr.bf16.gmra.mrb[0].mxu0 %v139
  %v512 = vpop.f32.mrb[0].mxu0
  %v513 = vadd.f32 %v236, %v512
  %v514 = vpop.f32.mrb[0].mxu0
  %v515 = vpop.f32.mrb[0].mxu0
  %v516 = vadd.f32 %v236, %v515
  %v517 = vpop.f32.mrb[0].mxu0
  %518 = vmatprep.mubr.bf16.mxu0 %v144
  %519 = vmatmul.mubr.bf16.gmra.mrb[0].mxu0 %v143
  %v520 = vpop.f32.mrb[0].mxu0
  %v521 = vadd.f32 %v236, %v520
  %v522 = vpop.f32.mrb[0].mxu0
  %v523 = vpop.f32.mrb[0].mxu0
  %v524 = vadd.f32 %v236, %v523
  %v525 = vpop.f32.mrb[0].mxu0
  %526 = vmatprep.mubr.bf16.mxu0 %v148
  %527 = vmatmul.mubr.bf16.gmra.mrb[0].mxu0 %v147
  %v528 = vpop.f32.mrb[0].mxu0
  %v529 = vadd.f32 %v236, %v528
  %v530 = vpop.f32.mrb[0].mxu0
  %v531 = vpop.f32.mrb[0].mxu0
  %v532 = vadd.f32 %v236, %v531
  %v533 = vpop.f32.mrb[0].mxu0
  %534 = vmatprep.mubr.bf16.mxu0 %v152
  %535 = vmatmul.mubr.bf16.gmra.mrb[0].mxu0 %v151
  %v536 = vpop.f32.mrb[0].mxu0
  %v537 = vadd.f32 %v236, %v536
  %v538 = vpop.f32.mrb[0].mxu0
  %v539 = vpop.f32.mrb[0].mxu0
  %v540 = vadd.f32 %v236, %v539
  %v541 = vpop.f32.mrb[0].mxu0
  %542 = vmatprep.mubr.bf16.mxu0 %v156
  %543 = vmatmul.mubr.bf16.gmra.mrb[0].mxu0 %v155
  %v544 = vpop.f32.mrb[0].mxu0
  %v545 = vadd.f32 %v236, %v544
  %v546 = vpop.f32.mrb[0].mxu0
  %v547 = vpop.f32.mrb[0].mxu0
  %v548 = vadd.f32 %v236, %v547
  %v549 = vpop.f32.mrb[0].mxu0
  %550 = vmatprep.mubr.bf16.mxu0 %v160
  %551 = vmatmul.mubr.bf16.gmra.mrb[0].mxu0 %v159
  %v552 = vpop.f32.mrb[0].mxu0
  %v553 = vadd.f32 %v236, %v552
  %v554 = vpop.f32.mrb[0].mxu0
  %v555 = vpop.f32.mrb[0].mxu0
  %v556 = vadd.f32 %v236, %v555
  %v557 = vpop.f32.mrb[0].mxu0
  %558 = vmatprep.mubr.bf16.mxu0 %v164
  %559 = vmatmul.mubr.bf16.gmra.mrb[0].mxu0 %v163
  %v560 = vpop.f32.mrb[0].mxu0
  %v561 = vadd.f32 %v236, %v560
  %v562 = vpop.f32.mrb[0].mxu0
  %v563 = vpop.f32.mrb[0].mxu0
  %v564 = vpop.f32.mrb[0].mxu0
  %565 = vdwg.mxu0
  %566 = vmatprep.subr.bf16.mxu0 0
  %567 = vmatpush1.bf16.msra.mxu0 %v382
  %568 = vmatprep.subr.bf16.mxu0 0
  %569 = vmatpush1.bf16.msra.mxu0 %v383
  %570 = vmatprep.subr.bf16.mxu0 0
  %571 = vmatpush1.bf16.msra.mxu0 %v384
  %572 = vmatprep.subr.bf16.mxu0 0
  %573 = vmatpush1.bf16.msra.mxu0 %v385
  %574 = vmatprep.subr.bf16.mxu0 0
  %575 = vmatpush1.bf16.msra.mxu0 %v386
  %576 = vmatprep.subr.bf16.mxu0 0
  %577 = vmatpush1.bf16.msra.mxu0 %v387
  %578 = vmatprep.subr.bf16.mxu0 0
  %579 = vmatpush1.bf16.msra.mxu0 %v388
  %580 = vmatprep.subr.bf16.mxu0 0
  %581 = vmatpush1.bf16.msra.mxu0 %v389
  %582 = vmatprep.subr.bf16.mxu0 0
  %583 = vmatpush1.bf16.msra.mxu0 %v390
  %584 = vmatprep.subr.bf16.mxu0 0
  %585 = vmatpush1.bf16.msra.mxu0 %v391
  %586 = vmatprep.subr.bf16.mxu0 0
  %587 = vmatpush1.bf16.msra.mxu0 %v392
  %588 = vmatprep.subr.bf16.mxu0 0
  %589 = vmatpush1.bf16.msra.mxu0 %v393
  %590 = vmatprep.subr.bf16.mxu0 0
  %591 = vmatpush1.bf16.msra.mxu0 %v394
  %592 = vmatprep.subr.bf16.mxu0 0
  %593 = vmatpush1.bf16.msra.mxu0 %v395
  %594 = vmatprep.subr.bf16.mxu0 0
  %595 = vmatpush1.bf16.msra.mxu0 %v396
  %596 = vmatprep.subr.bf16.mxu0 0
  %597 = vmatpush1.bf16.msra.mxu0 %v397
  %598 = vmatprep.mubr.bf16.mxu0 %v118
  %599 = vmatmul.mubr.bf16.gmra.mrb[0].mxu0 %v117
  %v600 = vpop.f32.mrb[0].mxu0
  %v601 = vadd.f32 %v465, %v600
  %v602 = vpop.f32.mrb[0].mxu0
  %v603 = vpop.f32.mrb[0].mxu0
  %v604 = vadd.f32 %v468, %v603
  %v605 = vpop.f32.mrb[0].mxu0
  %606 = vmatprep.mubr.bf16.mxu0 %v122
  %607 = vmatmul.mubr.bf16.gmra.mrb[0].mxu0 %v121
  %v608 = vpop.f32.mrb[0].mxu0
  %v609 = vadd.f32 %v473, %v608
  %v610 = vpop.f32.mrb[0].mxu0
  %v611 = vpop.f32.mrb[0].mxu0
  %v612 = vadd.f32 %v476, %v611
  %v613 = vpop.f32.mrb[0].mxu0
  %614 = vmatprep.mubr.bf16.mxu0 %v126
  %615 = vmatmul.mubr.bf16.gmra.mrb[0].mxu0 %v125
  %v616 = vpop.f32.mrb[0].mxu0
  %v617 = vadd.f32 %v481, %v616
  %v618 = vpop.f32.mrb[0].mxu0
  %v619 = vpop.f32.mrb[0].mxu0
  %v620 = vadd.f32 %v484, %v619
  %v621 = vpop.f32.mrb[0].mxu0
  %622 = vmatprep.mubr.bf16.mxu0 %v130
  %623 = vmatmul.mubr.bf16.gmra.mrb[0].mxu0 %v129
  %v624 = vpop.f32.mrb[0].mxu0
  %v625 = vadd.f32 %v489, %v624
  %v626 = vpop.f32.mrb[0].mxu0
  %v627 = vpop.f32.mrb[0].mxu0
  %v628 = vadd.f32 %v492, %v627
  %v629 = vpop.f32.mrb[0].mxu0
  %630 = vmatprep.mubr.bf16.mxu0 %v134
  %631 = vmatmul.mubr.bf16.gmra.mrb[0].mxu0 %v133
  %v632 = vpop.f32.mrb[0].mxu0
  %v633 = vadd.f32 %v497, %v632
  %v634 = vpop.f32.mrb[0].mxu0
  %v635 = vpop.f32.mrb[0].mxu0
  %v636 = vadd.f32 %v500, %v635
  %v637 = vpop.f32.mrb[0].mxu0
  %638 = vmatprep.mubr.bf16.mxu0 %v138
  %639 = vmatmul.mubr.bf16.gmra.mrb[0].mxu0 %v137
  %v640 = vpop.f32.mrb[0].mxu0
  %v641 = vadd.f32 %v505, %v640
  %v642 = vpop.f32.mrb[0].mxu0
  %v643 = vpop.f32.mrb[0].mxu0
  %v644 = vadd.f32 %v508, %v643
  %v645 = vpop.f32.mrb[0].mxu0
  %646 = vmatprep.mubr.bf16.mxu0 %v142
  %647 = vmatmul.mubr.bf16.gmra.mrb[0].mxu0 %v141
  %v648 = vpop.f32.mrb[0].mxu0
  %v649 = vadd.f32 %v513, %v648
  %v650 = vpop.f32.mrb[0].mxu0
  %v651 = vpop.f32.mrb[0].mxu0
  %v652 = vadd.f32 %v516, %v651
  %v653 = vpop.f32.mrb[0].mxu0
  %654 = vmatprep.mubr.bf16.mxu0 %v146
  %655 = vmatmul.mubr.bf16.gmra.mrb[0].mxu0 %v145
  %v656 = vpop.f32.mrb[0].mxu0
  %v657 = vadd.f32 %v521, %v656
  %v658 = vpop.f32.mrb[0].mxu0
  %v659 = vpop.f32.mrb[0].mxu0
  %v660 = vadd.f32 %v524, %v659
  %v661 = vpop.f32.mrb[0].mxu0
  %662 = vmatprep.mubr.bf16.mxu0 %v150
  %663 = vmatmul.mubr.bf16.gmra.mrb[0].mxu0 %v149
  %v664 = vpop.f32.mrb[0].mxu0
  %v665 = vadd.f32 %v529, %v664
  %v666 = vpop.f32.mrb[0].mxu0
  %v667 = vpop.f32.mrb[0].mxu0
  %v668 = vadd.f32 %v532, %v667
  %v669 = vpop.f32.mrb[0].mxu0
  %670 = vmatprep.mubr.bf16.mxu0 %v154
  %671 = vmatmul.mubr.bf16.gmra.mrb[0].mxu0 %v153
  %v672 = vpop.f32.mrb[0].mxu0
  %v673 = vadd.f32 %v537, %v672
  %v674 = vpop.f32.mrb[0].mxu0
  %v675 = vpop.f32.mrb[0].mxu0
  %v676 = vadd.f32 %v540, %v675
  %v677 = vpop.f32.mrb[0].mxu0
  %678 = vmatprep.mubr.bf16.mxu0 %v158
  %679 = vmatmul.mubr.bf16.gmra.mrb[0].mxu0 %v157
  %v680 = vpop.f32.mrb[0].mxu0
  %v681 = vadd.f32 %v545, %v680
  %v682 = vpop.f32.mrb[0].mxu0
  %v683 = vpop.f32.mrb[0].mxu0
  %v684 = vadd.f32 %v548, %v683
  %v685 = vpop.f32.mrb[0].mxu0
  %686 = vmatprep.mubr.bf16.mxu0 %v162
  %687 = vmatmul.mubr.bf16.gmra.mrb[0].mxu0 %v161
  %v688 = vpop.f32.mrb[0].mxu0
  %v689 = vadd.f32 %v553, %v688
  %v690 = vpop.f32.mrb[0].mxu0
  %v691 = vpop.f32.mrb[0].mxu0
  %v692 = vadd.f32 %v556, %v691
  %v693 = vpop.f32.mrb[0].mxu0
  %694 = vmatprep.mubr.bf16.mxu0 %v166
  %695 = vmatmul.mubr.bf16.gmra.mrb[0].mxu0 %v165
  %v696 = vpop.f32.mrb[0].mxu0
  %v697 = vadd.f32 %v561, %v696
  %v698 = vpop.f32.mrb[0].mxu0
  %v699 = vpop.f32.mrb[0].mxu0
  %v700 = vpop.f32.mrb[0].mxu0
  %701 = vdwg.mxu0
  %v702 = vmax.f32 %v601, 0.0
  %v703 = vmax.f32 %v604, 0.0
  %v704 = vmax.f32 %v609, 0.0
  %v705 = vmax.f32 %v612, 0.0
  %v706 = vmax.f32 %v617, 0.0
  %v707 = vmax.f32 %v620, 0.0
  %v708 = vmax.f32 %v625, 0.0
  %v709 = vmax.f32 %v628, 0.0
  %v710 = vmax.f32 %v633, 0.0
  %v711 = vmax.f32 %v636, 0.0
  %v712 = vmax.f32 %v641, 0.0
  %v713 = vmax.f32 %v644, 0.0
  %v714 = vmax.f32 %v649, 0.0
  %v715 = vmax.f32 %v652, 0.0
  %v716 = vmax.f32 %v657, 0.0
  %v717 = vmax.f32 %v660, 0.0
  %v718 = vmax.f32 %v665, 0.0
  %v719 = vmax.f32 %v668, 0.0
  %v720 = vmax.f32 %v673, 0.0
  %v721 = vmax.f32 %v676, 0.0
  %v722 = vmax.f32 %v681, 0.0
  %v723 = vmax.f32 %v684, 0.0
  %v724 = vmax.f32 %v689, 0.0
  %v725 = vmax.f32 %v692, 0.0
  %v726 = vmax.f32 %v697, 0.0
  %727 = vst [vmem:[%s3] sm:$0xff] %v702
  %728 = vst [vmem:[%s3 + $0x8] sm:$0xff] %v703
  %729 = vst [vmem:[%s3 + $0x10] sm:$0xff] %v704
  %730 = vst [vmem:[%s3 + $0x18] sm:$0xff] %v705
  %731 = vst [vmem:[%s3 + $0x20] sm:$0xff] %v706
  %732 = vst [vmem:[%s3 + $0x28] sm:$0xff] %v707
  %733 = vst [vmem:[%s3 + $0x30] sm:$0xff] %v708
  %734 = vst [vmem:[%s3 + $0x38] sm:$0xff] %v709
  %735 = vst [vmem:[%s3 + $0x40] sm:$0xff] %v710
  %736 = vst [vmem:[%s3 + $0x48] sm:$0xff] %v711
  %737 = vst [vmem:[%s3 + $0x50] sm:$0xff] %v712
  %738 = vst [vmem:[%s3 + $0x58] sm:$0xff] %v713
  %739 = vst [vmem:[%s3 + $0x60] sm:$0xff] %v714
  %740 = vst [vmem:[%s3 + $0x68] sm:$0xff] %v715
  %741 = vst [vmem:[%s3 + $0x70] sm:$0xff] %v716
  %742 = vst [vmem:[%s3 + $0x78] sm:$0xff] %v717
  %743 = vst [vmem:[%s3 + $0x80] sm:$0xff] %v718
  %744 = vst [vmem:[%s3 + $0x88] sm:$0xff] %v719
  %745 = vst [vmem:[%s3 + $0x90] sm:$0xff] %v720
  %746 = vst [vmem:[%s3 + $0x98] sm:$0xff] %v721
  %747 = vst [vmem:[%s3 + $0xa0] sm:$0xff] %v722
  %748 = vst [vmem:[%s3 + $0xa8] sm:$0xff] %v723
  %749 = vst [vmem:[%s3 + $0xb0] sm:$0xff] %v724
  %750 = vst [vmem:[%s3 + $0xb8] sm:$0xff] %v725
  %751 = vst [vmem:[%s3 + $0xc0] sm:$0xff] %v726
  // Predicated region
  $region14: #{qnetwork_forward.4} parent=0 // pred_check
    _
  $region15: #{qnetwork_forward.4} parent=0 // pred_check_branch
    %753 = sbr.rel (0) target = $region17
  $region16: #{qnetwork_forward.4} parent=0 // pred_region
    _
  $region17: #{qnetwork_forward.4} parent=0 // pred_fallthru
    _
  // Predicated region
  $region18: #{qnetwork_forward.4} parent=0 // pred_check
    _
  $region19: #{qnetwork_forward.4} parent=0 // pred_check_branch
    %755 = sbr.rel (0) target = $region21
  $region20: #{qnetwork_forward.4} parent=0 // pred_region
    _
  $region21: #{qnetwork_forward.4} parent=0 // pred_fallthru
    _

// kernel: qnetwork_forward.5
$region0: #{qnetwork_forward.5}
  #allocation0 [shape = 'u32[]', space=smem, size = 0x4, offset = 0x4, fixed_abs, tag = 'smem constant byte address 0x4 - core index']
  #allocation1 [shape = 'u32[144,128]{1,0:T(1,128)}', space=vmem, size = 0x12000, scoped, tag = 'internal scratch']
  #allocation2 [shape = 'f32[8,512]{1,0:T(8,128)}', space=vmem, size = 0x4000, scoped, tag = 'scratch operand']
  %s0 = inlined_call_operand.vmem [shape: f32[8,6400], index: 0, kind: input, shape index: {}]
  %s1 = inlined_call_operand.vmem [shape: bf16[6400,512], index: 1, kind: input, shape index: {}]
  %s2 = inlined_call_operand.vmem [shape: f32[1,512], index: 2, kind: input, shape index: {}]
  %s3 = inlined_call_operand.vmem [shape: bf16[512,256], index: 3, kind: input, shape index: {}]
  %s4 = inlined_call_operand.vmem [shape: f32[1,256], index: 4, kind: input, shape index: {}]
  %s5 = inlined_call_operand.vmem [shape: bf16[256,128], index: 5, kind: input, shape index: {}]
  %s6 = inlined_call_operand.vmem [shape: f32[1,128], index: 6, kind: input, shape index: {}]
  %s7 = inlined_call_operand.vmem [shape: f32[8,128], index: 7, kind: output, shape index: {}]
  %s8 = sld [smem:[#allocation0]]
  $region69: #{qnetwork_forward.5} parent=0
    _
  %s10 = ssub.s32 1, %s8
  %s11 = scalar_select 0, %s10, %s8
  loop: start=0, step=1, limit=7
  $region2: #{qnetwork_forward.5} parent=0 // loop_pre_header
    _
  $region3: #{qnetwork_forward.5} parent=0 // loop_header
    %s13 = sphi 0, %s17
    %p14 = scmp.ge.s32.totalorder %s13, 7
    %s23 = sphi 0, %s25
    %s26 = sphi 0, %s23
    %s27 = sphi 0, %s26
    %s43 = sphi 0, %s27
    %s49 = sphi 0, %s51
    %s52 = sphi 0, %s49
    %s53 = sphi 0, %s52
    %s69 = sphi 0, %s53
    %s73 = sphi 0, %s73
    %s75 = sphi 0, %s73
    %s76 = sphi 0, %s75
    %s90 = sphi 0, %s76
    %s94 = sphi 0, %s94
    %s96 = sphi 0, %s94
    %s97 = sphi 0, %s96
    %s111 = sphi 0, %s97
    %s115 = sphi 0, %s115
    %s117 = sphi 0, %s115
    %s118 = sphi 0, %s117
    %s132 = sphi 0, %s118
    %s136 = sphi 0, %s136
    %s138 = sphi 0, %s136
    %s139 = sphi 0, %s138
    %s153 = sphi 0, %s139
    %s157 = sphi 0, %s157
    %s159 = sphi 0, %s157
    %s160 = sphi 0, %s159
    %s174 = sphi 0, %s160
    %s178 = sphi 0, %s178
    %s180 = sphi 0, %s178
    %s181 = sphi 0, %s180
    %s195 = sphi 0, %s181
  $region4: #{qnetwork_forward.5} parent=0 // loop_header_branch
    %16 = sbr.rel (%p14) target = $region8
  $region5: #{qnetwork_forward.5} parent=0 // loop_body
    %s18 = ssub.s32 %s13, 1
    %s19 = ssub.s32 %s13, 2
    %s20 = sadd.s32 %s13, 1
    %s21 = ssub.s32 %s13, %s20
    %p22 = scmp.eq.s32.totalorder %s21, 0
    %s24 = sadd.s32 %s23, 1
    %s25 = scalar_select %p22, %s23, %s24
    %p28 = pneg %p22
    %p29 = scmp.eq.s32.totalorder %s13, 4
    %p30 = por %p28, %p29
    %p31 = scmp.ne.s32.totalorder %s23, %s26
    %p32 = scmp.eq.s32.totalorder %s13, 0
    %p33 = por %p31, %p32
    %p34 = scmp.ne.s32.totalorder %s23, %s26
    %p35 = scmp.eq.s32.totalorder %s18, 4
    %p36 = por %p34, %p35
    %p37 = scmp.ne.s32.totalorder %s26, %s27
    %p38 = scmp.eq.s32.totalorder %s18, 0
    %p39 = por %p37, %p38
    %p40 = scmp.ne.s32.totalorder %s26, %s27
    %p41 = scmp.eq.s32.totalorder %s19, 4
    %p42 = por %p40, %p41
    %p44 = scmp.ne.s32.totalorder %s27, %s43
    %p45 = scmp.eq.s32.totalorder %s19, 0
    %p46 = por %p44, %p45
    %s47 = ssub.s32 %s13, %s20
    %p48 = scmp.eq.s32.totalorder %s47, 0
    %s50 = sadd.s32 %s49, 1
    %s51 = scalar_select %p48, %s49, %s50
    %p54 = pneg %p48
    %p55 = scmp.eq.s32.totalorder %s13, 4
    %p56 = por %p54, %p55
    %p57 = scmp.ne.s32.totalorder %s49, %s52
    %p58 = scmp.eq.s32.totalorder %s13, 0
    %p59 = por %p57, %p58
    %p60 = scmp.ne.s32.totalorder %s49, %s52
    %p61 = scmp.eq.s32.totalorder %s18, 4
    %p62 = por %p60, %p61
    %p63 = scmp.ne.s32.totalorder %s52, %s53
    %p64 = scmp.eq.s32.totalorder %s18, 0
    %p65 = por %p63, %p64
    %p66 = scmp.ne.s32.totalorder %s52, %s53
    %p67 = scmp.eq.s32.totalorder %s19, 4
    %p68 = por %p66, %p67
    %p70 = scmp.ne.s32.totalorder %s53, %s69
    %p71 = scmp.eq.s32.totalorder %s19, 0
    %p72 = por %p70, %p71
    %s74 = sadd.s32 %s73, 1
    %p77 = scmp.eq.s32.totalorder %s13, 4
    %p78 = scmp.ne.s32.totalorder %s73, %s75
    %p79 = scmp.eq.s32.totalorder %s13, 0
    %p80 = por %p78, %p79
    %p81 = scmp.ne.s32.totalorder %s73, %s75
    %p82 = scmp.eq.s32.totalorder %s18, 4
    %p83 = por %p81, %p82
    %p84 = scmp.ne.s32.totalorder %s75, %s76
    %p85 = scmp.eq.s32.totalorder %s18, 0
    %p86 = por %p84, %p85
    %p87 = scmp.ne.s32.totalorder %s75, %s76
    %p88 = scmp.eq.s32.totalorder %s19, 4
    %p89 = por %p87, %p88
    %p91 = scmp.ne.s32.totalorder %s76, %s90
    %p92 = scmp.eq.s32.totalorder %s19, 0
    %p93 = por %p91, %p92
    %s95 = sadd.s32 %s94, 1
    %p98 = scmp.eq.s32.totalorder %s13, 4
    %p99 = scmp.ne.s32.totalorder %s94, %s96
    %p100 = scmp.eq.s32.totalorder %s13, 0
    %p101 = por %p99, %p100
    %p102 = scmp.ne.s32.totalorder %s94, %s96
    %p103 = scmp.eq.s32.totalorder %s18, 4
    %p104 = por %p102, %p103
    %p105 = scmp.ne.s32.totalorder %s96, %s97
    %p106 = scmp.eq.s32.totalorder %s18, 0
    %p107 = por %p105, %p106
    %p108 = scmp.ne.s32.totalorder %s96, %s97
    %p109 = scmp.eq.s32.totalorder %s19, 4
    %p110 = por %p108, %p109
    %p112 = scmp.ne.s32.totalorder %s97, %s111
    %p113 = scmp.eq.s32.totalorder %s19, 0
    %p114 = por %p112, %p113
    %s116 = sadd.s32 %s115, 1
    %p119 = scmp.eq.s32.totalorder %s13, 4
    %p120 = scmp.ne.s32.totalorder %s115, %s117
    %p121 = scmp.eq.s32.totalorder %s13, 0
    %p122 = por %p120, %p121
    %p123 = scmp.ne.s32.totalorder %s115, %s117
    %p124 = scmp.eq.s32.totalorder %s18, 4
    %p125 = por %p123, %p124
    %p126 = scmp.ne.s32.totalorder %s117, %s118
    %p127 = scmp.eq.s32.totalorder %s18, 0
    %p128 = por %p126, %p127
    %p129 = scmp.ne.s32.totalorder %s117, %s118
    %p130 = scmp.eq.s32.totalorder %s19, 4
    %p131 = por %p129, %p130
    %p133 = scmp.ne.s32.totalorder %s118, %s132
    %p134 = scmp.eq.s32.totalorder %s19, 0
    %p135 = por %p133, %p134
    %s137 = sadd.s32 %s136, 1
    %p140 = scmp.eq.s32.totalorder %s13, 4
    %p141 = scmp.ne.s32.totalorder %s136, %s138
    %p142 = scmp.eq.s32.totalorder %s13, 0
    %p143 = por %p141, %p142
    %p144 = scmp.ne.s32.totalorder %s136, %s138
    %p145 = scmp.eq.s32.totalorder %s18, 4
    %p146 = por %p144, %p145
    %p147 = scmp.ne.s32.totalorder %s138, %s139
    %p148 = scmp.eq.s32.totalorder %s18, 0
    %p149 = por %p147, %p148
    %p150 = scmp.ne.s32.totalorder %s138, %s139
    %p151 = scmp.eq.s32.totalorder %s19, 4
    %p152 = por %p150, %p151
    %p154 = scmp.ne.s32.totalorder %s139, %s153
    %p155 = scmp.eq.s32.totalorder %s19, 0
    %p156 = por %p154, %p155
    %s158 = sadd.s32 %s157, 1
    %p161 = scmp.eq.s32.totalorder %s13, 4
    %p162 = scmp.ne.s32.totalorder %s157, %s159
    %p163 = scmp.eq.s32.totalorder %s13, 0
    %p164 = por %p162, %p163
    %p165 = scmp.ne.s32.totalorder %s157, %s159
    %p166 = scmp.eq.s32.totalorder %s18, 4
    %p167 = por %p165, %p166
    %p168 = scmp.ne.s32.totalorder %s159, %s160
    %p169 = scmp.eq.s32.totalorder %s18, 0
    %p170 = por %p168, %p169
    %p171 = scmp.ne.s32.totalorder %s159, %s160
    %p172 = scmp.eq.s32.totalorder %s19, 4
    %p173 = por %p171, %p172
    %p175 = scmp.ne.s32.totalorder %s160, %s174
    %p176 = scmp.eq.s32.totalorder %s19, 0
    %p177 = por %p175, %p176
    %s179 = sadd.s32 %s178, 1
    %p182 = scmp.eq.s32.totalorder %s13, 4
    %p183 = scmp.ne.s32.totalorder %s178, %s180
    %p184 = scmp.eq.s32.totalorder %s13, 0
    %p185 = por %p183, %p184
    %p186 = scmp.ne.s32.totalorder %s178, %s180
    %p187 = scmp.eq.s32.totalorder %s18, 4
    %p188 = por %p186, %p187
    %p189 = scmp.ne.s32.totalorder %s180, %s181
    %p190 = scmp.eq.s32.totalorder %s18, 0
    %p191 = por %p189, %p190
    %p192 = scmp.ne.s32.totalorder %s180, %s181
    %p193 = scmp.eq.s32.totalorder %s19, 4
    %p194 = por %p192, %p193
    %p196 = scmp.ne.s32.totalorder %s181, %s195
    %p197 = scmp.eq.s32.totalorder %s19, 0
    %p198 = por %p196, %p197
    %p199 = scmp.le.s32.totalorder 1, %s13
    %p200 = scmp.lt.s32.totalorder %s13, 6
    %p201 = pnand %p199, %p200
    %p202 = pneg %p201
    // Predicated region
    $region9: #{qnetwork_forward.5} parent=5 // pred_check
      _
    $region10: #{qnetwork_forward.5} parent=5 // pred_check_branch
      %204 = sbr.rel (%p201) target = $region12
    $region11: #{qnetwork_forward.5} parent=5 // pred_region
      %s205 = ssub.s32 %s13, 1
      // Predicated region
      $region13: #{qnetwork_forward.5} parent=11 // pred_check
        %p206 = pneg %p86
      $region14: #{qnetwork_forward.5} parent=11 // pred_check_branch
        %208 = sbr.rel (%p206) target = $region16
      $region15: #{qnetwork_forward.5} parent=11 // pred_region
        _
      $region16: #{qnetwork_forward.5} parent=11 // pred_fallthru
        _
      // Predicated region
      $region17: #{qnetwork_forward.5} parent=11 // pred_check
        %p209 = pneg %p107
      $region18: #{qnetwork_forward.5} parent=11 // pred_check_branch
        %211 = sbr.rel (%p209) target = $region20
      $region19: #{qnetwork_forward.5} parent=11 // pred_region
        _
      $region20: #{qnetwork_forward.5} parent=11 // pred_fallthru
        _
      // Predicated region
      $region21: #{qnetwork_forward.5} parent=11 // pred_check
        %p212 = pneg %p128
      $region22: #{qnetwork_forward.5} parent=11 // pred_check_branch
        %214 = sbr.rel (%p212) target = $region24
      $region23: #{qnetwork_forward.5} parent=11 // pred_region
        _
      $region24: #{qnetwork_forward.5} parent=11 // pred_fallthru
        _
      // Predicated region
      $region25: #{qnetwork_forward.5} parent=11 // pred_check
        %p215 = pneg %p149
      $region26: #{qnetwork_forward.5} parent=11 // pred_check_branch
        %217 = sbr.rel (%p215) target = $region28
      $region27: #{qnetwork_forward.5} parent=11 // pred_region
        _
      $region28: #{qnetwork_forward.5} parent=11 // pred_fallthru
        _
      // Predicated region
      $region29: #{qnetwork_forward.5} parent=11 // pred_check
        %p218 = pneg %p170
      $region30: #{qnetwork_forward.5} parent=11 // pred_check_branch
        %220 = sbr.rel (%p218) target = $region32
      $region31: #{qnetwork_forward.5} parent=11 // pred_region
        _
      $region32: #{qnetwork_forward.5} parent=11 // pred_fallthru
        _
    $region12: #{qnetwork_forward.5} parent=5 // pred_fallthru
      _
    %p221 = scmp.lt.s32.totalorder %s13, 5
    // Predicated region
    $region33: #{qnetwork_forward.5} parent=5 // pred_check
      %p222 = pneg %p221
    $region34: #{qnetwork_forward.5} parent=5 // pred_check_branch
      %224 = sbr.rel (%p222) target = $region36
    $region35: #{qnetwork_forward.5} parent=5 // pred_region
      // Predicated region
      $region37: #{qnetwork_forward.5} parent=35 // pred_check
        %p225 = pneg %p33
      $region38: #{qnetwork_forward.5} parent=35 // pred_check_branch
        %227 = sbr.rel (%p225) target = $region40
      $region39: #{qnetwork_forward.5} parent=35 // pred_region
        %s228 = smul.u32 10, %s13
        %p229 = scmp.lt.s32.totalorder %s228, 49
        %s230 = scalar_select %p229, %s228, 49
        %s231 = smul.addr %s230, 8
        %s232 = scalar_lea.vmem %s0, %s231
        %s233 = smul.u32 10, %s13
      $region40: #{qnetwork_forward.5} parent=35 // pred_fallthru
        _
      // Predicated region
      $region41: #{qnetwork_forward.5} parent=35 // pred_check
        %p234 = pneg %p59
      $region42: #{qnetwork_forward.5} parent=35 // pred_check_branch
        %236 = sbr.rel (%p234) target = $region44
      $region43: #{qnetwork_forward.5} parent=35 // pred_region
        %s237 = smul.u32 160, %s13
        %p238 = scmp.lt.s32.totalorder %s237, 799
        %s239 = scalar_select %p238, %s237, 799
        %s240 = smul.addr %s239, 4
        %s241 = smul.addr %s240, 4
        %s242 = scalar_lea.vmem %s1, %s241
        %s243 = smul.u32 160, %s13
      $region44: #{qnetwork_forward.5} parent=35 // pred_fallthru
        _
    $region36: #{qnetwork_forward.5} parent=5 // pred_fallthru
      _
    %p244 = scmp.le.s32.totalorder 1, %s13
    %p245 = scmp.lt.s32.totalorder %s13, 6
    %p246 = pnand %p244, %p245
    %p247 = pneg %p246
    // Predicated region
    $region45: #{qnetwork_forward.5} parent=5 // pred_check
      _
    $region46: #{qnetwork_forward.5} parent=5 // pred_check_branch
      %249 = sbr.rel (%p246) target = $region48
    $region47: #{qnetwork_forward.5} parent=5 // pred_region
      %s250 = ssub.s32 %s13, 1
      %s251 = smul.u32 10, %s18
      %p252 = scmp.lt.s32.totalorder %s251, 49
      %s253 = scalar_select %p252, %s251, 49
      %s254 = smul.addr %s253, 8
      %s255 = scalar_lea.vmem %s0, %s254
      %p256 = pneg %p39
      %p257 = pneg %p36
      %s258 = smul.u32 160, %s18
      %p259 = scmp.lt.s32.totalorder %s258, 799
      %s260 = scalar_select %p259, %s258, 799
      %s261 = smul.addr %s260, 4
      %s262 = smul.addr %s261, 4
      %s263 = scalar_lea.vmem %s1, %s262
      %p264 = pneg %p65
      %p265 = pneg %p62
      %p266 = pneg %p86
      %p267 = pneg %p83
      %p268 = pneg %p107
      %p269 = pneg %p104
      %p270 = pneg %p128
      %p271 = pneg %p125
      %p272 = pneg %p149
      %p273 = pneg %p146
      %p274 = pneg %p170
      %p275 = pneg %p167
      %p276 = pneg %p191
      %p277 = pneg %p188
      %s278 = smul.u32 10, %s18
      %p279 = scmp.lt.s32.totalorder %s278, 49
      %s280 = scalar_select %p279, %s278, 49
      %s281 = smul.addr %s280, 8
      %s282 = scalar_lea.vmem %s0, %s281
      %s283 = smul.u32 10, %s18
      %s284 = smul.u32 160, %s18
      %p285 = scmp.lt.s32.totalorder %s284, 799
      %s286 = scalar_select %p285, %s284, 799
      %s287 = smul.addr %s286, 4
      %s288 = smul.addr %s287, 4
      %s289 = scalar_lea.vmem %s1, %s288
      %s290 = smul.u32 160, %s18
      %p292 = scmp.eq.s32.totalorder %s18, 0
      // Predicated region
      $region49: #{qnetwork_forward.5} parent=47 // pred_check
        %p293 = pneg %p292
      $region50: #{qnetwork_forward.5} parent=47 // pred_check_branch
        %295 = sbr.rel (%p293) target = $region52
      $region51: #{qnetwork_forward.5} parent=47 // pred_region
        %296 = vst [vmem:[#allocation2] sm:$0xff] 0.0
        %297 = vst [vmem:[#allocation2 + $0x8] sm:$0xff] 0.0
        %298 = vst [vmem:[#allocation2 + $0x10] sm:$0xff] 0.0
        %299 = vst [vmem:[#allocation2 + $0x18] sm:$0xff] 0.0
      $region52: #{qnetwork_forward.5} parent=47 // pred_fallthru
        _
      %v300 = vld [vmem:[#allocation2] sm:$0xff]
      %v301 = vld [vmem:[#allocation2 + $0x8] sm:$0xff]
      %v302 = vld [vmem:[#allocation2 + $0x10] sm:$0xff]
      %v303 = vld [vmem:[#allocation2 + $0x18] sm:$0xff]
      %v304 = vld [vmem:[%s282] sm:$0xff]
      %v305 = vld [vmem:[%s282 + $0x8] sm:$0xff]
      %v306 = vld [vmem:[%s282 + $0x10] sm:$0xff]
      %v307 = vld [vmem:[%s282 + $0x18] sm:$0xff]
      %v308 = vld [vmem:[%s282 + $0x20] sm:$0xff]
      %v309 = vld [vmem:[%s282 + $0x28] sm:$0xff]
      %v310 = vld [vmem:[%s282 + $0x30] sm:$0xff]
      %v311 = vld [vmem:[%s282 + $0x38] sm:$0xff]
      %v312 = vld [vmem:[%s282 + $0x40] sm:$0xff]
      %v313 = vld [vmem:[%s282 + $0x48] sm:$0xff]
      %v314 = vpack.c.bf16 %v304, %v304
      %v315 = vpack.c.bf16 %v305, %v305
      %v316 = vpack.c.bf16 %v306, %v306
      %v317 = vpack.c.bf16 %v307, %v307
      %v318 = vpack.c.bf16 %v308, %v308
      %v319 = vpack.c.bf16 %v309, %v309
      %v320 = vpack.c.bf16 %v310, %v310
      %v321 = vpack.c.bf16 %v311, %v311
      %v322 = vpack.c.bf16 %v312, %v312
      %v323 = vpack.c.bf16 %v313, %v313
      %v324 = vld [vmem:[%s289] sm:$0xff]
      %v325 = vld [vmem:[%s289 + $0x8] sm:$0xff]
      %v326 = vld [vmem:[%s289 + $0x10] sm:$0xff]
      %v327 = vld [vmem:[%s289 + $0x18] sm:$0xff]
      %v328 = vld [vmem:[%s289 + $0x20] sm:$0xff]
      %v329 = vld [vmem:[%s289 + $0x28] sm:$0xff]
      %v330 = vld [vmem:[%s289 + $0x30] sm:$0xff]
      %v331 = vld [vmem:[%s289 + $0x38] sm:$0xff]
      %v332 = vld [vmem:[%s289 + $0x40] sm:$0xff]
      %v333 = vld [vmem:[%s289 + $0x48] sm:$0xff]
      %v334 = vld [vmem:[%s289 + $0x50] sm:$0xff]
      %v335 = vld [vmem:[%s289 + $0x58] sm:$0xff]
      %v336 = vld [vmem:[%s289 + $0x60] sm:$0xff]
      %v337 = vld [vmem:[%s289 + $0x68] sm:$0xff]
      %v338 = vld [vmem:[%s289 + $0x70] sm:$0xff]
      %v339 = vld [vmem:[%s289 + $0x78] sm:$0xff]
      %v340 = vld [vmem:[%s289 + $0x80] sm:$0xff]
      %v341 = vld [vmem:[%s289 + $0x88] sm:$0xff]
      %v342 = vld [vmem:[%s289 + $0x90] sm:$0xff]
      %v343 = vld [vmem:[%s289 + $0x98] sm:$0xff]
      %v344 = vld [vmem:[%s289 + $0xa0] sm:$0xff]
      %v345 = vld [vmem:[%s289 + $0xa8] sm:$0xff]
      %v346 = vld [vmem:[%s289 + $0xb0] sm:$0xff]
      %v347 = vld [vmem:[%s289 + $0xb8] sm:$0xff]
      %v348 = vld [vmem:[%s289 + $0xc0] sm:$0xff]
      %v349 = vld [vmem:[%s289 + $0xc8] sm:$0xff]
      %v350 = vld [vmem:[%s289 + $0xd0] sm:$0xff]
      %v351 = vld [vmem:[%s289 + $0xd8] sm:$0xff]
      %v352 = vld [vmem:[%s289 + $0xe0] sm:$0xff]
      %v353 = vld [vmem:[%s289 + $0xe8] sm:$0xff]
      %v354 = vld [vmem:[%s289 + $0xf0] sm:$0xff]
      %v355 = vld [vmem:[%s289 + $0xf8] sm:$0xff]
      %v356 = vld [vmem:[%s289 + $0x100] sm:$0xff]
      %v357 = vld [vmem:[%s289 + $0x108] sm:$0xff]
      %v358 = vld [vmem:[%s289 + $0x110] sm:$0xff]
      %v359 = vld [vmem:[%s289 + $0x118] sm:$0xff]
      %v360 = vld [vmem:[%s289 + $0x120] sm:$0xff]
      %v361 = vld [vmem:[%s289 + $0x128] sm:$0xff]
      %v362 = vld [vmem:[%s289 + $0x130] sm:$0xff]
      %v363 = vld [vmem:[%s289 + $0x138] sm:$0xff]
      %v364 = vld [vmem:[%s289 + $0x140] sm:$0xff]
      %v365 = vld [vmem:[%s289 + $0x148] sm:$0xff]
      %v366 = vld [vmem:[%s289 + $0x150] sm:$0xff]
      %v367 = vld [vmem:[%s289 + $0x158] sm:$0xff]
      %v368 = vld [vmem:[%s289 + $0x160] sm:$0xff]
      %v369 = vld [vmem:[%s289 + $0x168] sm:$0xff]
      %v370 = vld [vmem:[%s289 + $0x170] sm:$0xff]
      %v371 = vld [vmem:[%s289 + $0x178] sm:$0xff]
      %v372 = vld [vmem:[%s289 + $0x180] sm:$0xff]
      %v373 = vld [vmem:[%s289 + $0x188] sm:$0xff]
      %v374 = vld [vmem:[%s289 + $0x190] sm:$0xff]
      %v375 = vld [vmem:[%s289 + $0x198] sm:$0xff]
      %v376 = vld [vmem:[%s289 + $0x1a0] sm:$0xff]
      %v377 = vld [vmem:[%s289 + $0x1a8] sm:$0xff]
      %v378 = vld [vmem:[%s289 + $0x1b0] sm:$0xff]
      %v379 = vld [vmem:[%s289 + $0x1b8] sm:$0xff]
      %v380 = vld [vmem:[%s289 + $0x1c0] sm:$0xff]
      %v381 = vld [vmem:[%s289 + $0x1c8] sm:$0xff]
      %v382 = vld [vmem:[%s289 + $0x1d0] sm:$0xff]
      %v383 = vld [vmem:[%s289 + $0x1d8] sm:$0xff]
      %v384 = vld [vmem:[%s289 + $0x1e0] sm:$0xff]
      %v385 = vld [vmem:[%s289 + $0x1e8] sm:$0xff]
      %v386 = vld [vmem:[%s289 + $0x1f0] sm:$0xff]
      %v387 = vld [vmem:[%s289 + $0x1f8] sm:$0xff]
      %v388 = vld [vmem:[%s289 + $0x200] sm:$0xff]
      %v389 = vld [vmem:[%s289 + $0x208] sm:$0xff]
      %v390 = vld [vmem:[%s289 + $0x210] sm:$0xff]
      %v391 = vld [vmem:[%s289 + $0x218] sm:$0xff]
      %v392 = vld [vmem:[%s289 + $0x220] sm:$0xff]
      %v393 = vld [vmem:[%s289 + $0x228] sm:$0xff]
      %v394 = vld [vmem:[%s289 + $0x230] sm:$0xff]
      %v395 = vld [vmem:[%s289 + $0x238] sm:$0xff]
      %v396 = vld [vmem:[%s289 + $0x240] sm:$0xff]
      %v397 = vld [vmem:[%s289 + $0x248] sm:$0xff]
      %v398 = vld [vmem:[%s289 + $0x250] sm:$0xff]
      %v399 = vld [vmem:[%s289 + $0x258] sm:$0xff]
      %v400 = vld [vmem:[%s289 + $0x260] sm:$0xff]
      %v401 = vld [vmem:[%s289 + $0x268] sm:$0xff]
      %v402 = vld [vmem:[%s289 + $0x270] sm:$0xff]
      %v403 = vld [vmem:[%s289 + $0x278] sm:$0xff]
      %v404 = vld [vmem:[%s289 + $0x280] sm:$0xff]
      %v405 = vld [vmem:[%s289 + $0x288] sm:$0xff]
      %v406 = vld [vmem:[%s289 + $0x290] sm:$0xff]
      %v407 = vld [vmem:[%s289 + $0x298] sm:$0xff]
      %v408 = vld [vmem:[%s289 + $0x2a0] sm:$0xff]
      %v409 = vld [vmem:[%s289 + $0x2a8] sm:$0xff]
      %v410 = vld [vmem:[%s289 + $0x2b0] sm:$0xff]
      %v411 = vld [vmem:[%s289 + $0x2b8] sm:$0xff]
      %v412 = vld [vmem:[%s289 + $0x2c0] sm:$0xff]
      %v413 = vld [vmem:[%s289 + $0x2c8] sm:$0xff]
      %v414 = vld [vmem:[%s289 + $0x2d0] sm:$0xff]
      %v415 = vld [vmem:[%s289 + $0x2d8] sm:$0xff]
      %v416 = vld [vmem:[%s289 + $0x2e0] sm:$0xff]
      %v417 = vld [vmem:[%s289 + $0x2e8] sm:$0xff]
      %v418 = vld [vmem:[%s289 + $0x2f0] sm:$0xff]
      %v419 = vld [vmem:[%s289 + $0x2f8] sm:$0xff]
      %v420 = vld [vmem:[%s289 + $0x300] sm:$0xff]
      %v421 = vld [vmem:[%s289 + $0x308] sm:$0xff]
      %v422 = vld [vmem:[%s289 + $0x310] sm:$0xff]
      %v423 = vld [vmem:[%s289 + $0x318] sm:$0xff]
      %v424 = vld [vmem:[%s289 + $0x320] sm:$0xff]
      %v425 = vld [vmem:[%s289 + $0x328] sm:$0xff]
      %v426 = vld [vmem:[%s289 + $0x330] sm:$0xff]
      %v427 = vld [vmem:[%s289 + $0x338] sm:$0xff]
      %v428 = vld [vmem:[%s289 + $0x340] sm:$0xff]
      %v429 = vld [vmem:[%s289 + $0x348] sm:$0xff]
      %v430 = vld [vmem:[%s289 + $0x350] sm:$0xff]
      %v431 = vld [vmem:[%s289 + $0x358] sm:$0xff]
      %v432 = vld [vmem:[%s289 + $0x360] sm:$0xff]
      %v433 = vld [vmem:[%s289 + $0x368] sm:$0xff]
      %v434 = vld [vmem:[%s289 + $0x370] sm:$0xff]
      %v435 = vld [vmem:[%s289 + $0x378] sm:$0xff]
      %v436 = vld [vmem:[%s289 + $0x380] sm:$0xff]
      %v437 = vld [vmem:[%s289 + $0x388] sm:$0xff]
      %v438 = vld [vmem:[%s289 + $0x390] sm:$0xff]
      %v439 = vld [vmem:[%s289 + $0x398] sm:$0xff]
      %v440 = vld [vmem:[%s289 + $0x3a0] sm:$0xff]
      %v441 = vld [vmem:[%s289 + $0x3a8] sm:$0xff]
      %v442 = vld [vmem:[%s289 + $0x3b0] sm:$0xff]
      %v443 = vld [vmem:[%s289 + $0x3b8] sm:$0xff]
      %v444 = vld [vmem:[%s289 + $0x3c0] sm:$0xff]
      %v445 = vld [vmem:[%s289 + $0x3c8] sm:$0xff]
      %v446 = vld [vmem:[%s289 + $0x3d0] sm:$0xff]
      %v447 = vld [vmem:[%s289 + $0x3d8] sm:$0xff]
      %v448 = vld [vmem:[%s289 + $0x3e0] sm:$0xff]
      %v449 = vld [vmem:[%s289 + $0x3e8] sm:$0xff]
      %v450 = vld [vmem:[%s289 + $0x3f0] sm:$0xff]
      %v451 = vld [vmem:[%s289 + $0x3f8] sm:$0xff]
      %v452 = vld [vmem:[%s289 + $0x400] sm:$0xff]
      %v453 = vld [vmem:[%s289 + $0x408] sm:$0xff]
      %v454 = vld [vmem:[%s289 + $0x410] sm:$0xff]
      %v455 = vld [vmem:[%s289 + $0x418] sm:$0xff]
      %v456 = vld [vmem:[%s289 + $0x420] sm:$0xff]
      %v457 = vld [vmem:[%s289 + $0x428] sm:$0xff]
      %v458 = vld [vmem:[%s289 + $0x430] sm:$0xff]
      %v459 = vld [vmem:[%s289 + $0x438] sm:$0xff]
      %v460 = vld [vmem:[%s289 + $0x440] sm:$0xff]
      %v461 = vld [vmem:[%s289 + $0x448] sm:$0xff]
      %v462 = vld [vmem:[%s289 + $0x450] sm:$0xff]
      %v463 = vld [vmem:[%s289 + $0x458] sm:$0xff]
      %v464 = vld [vmem:[%s289 + $0x460] sm:$0xff]
      %v465 = vld [vmem:[%s289 + $0x468] sm:$0xff]
      %v466 = vld [vmem:[%s289 + $0x470] sm:$0xff]
      %v467 = vld [vmem:[%s289 + $0x478] sm:$0xff]
      %v468 = vld [vmem:[%s289 + $0x480] sm:$0xff]
      %v469 = vld [vmem:[%s289 + $0x488] sm:$0xff]
      %v470 = vld [vmem:[%s289 + $0x490] sm:$0xff]
      %v471 = vld [vmem:[%s289 + $0x498] sm:$0xff]
      %v472 = vld [vmem:[%s289 + $0x4a0] sm:$0xff]
      %v473 = vld [vmem:[%s289 + $0x4a8] sm:$0xff]
      %v474 = vld [vmem:[%s289 + $0x4b0] sm:$0xff]
      %v475 = vld [vmem:[%s289 + $0x4b8] sm:$0xff]
      %v476 = vld [vmem:[%s289 + $0x4c0] sm:$0xff]
      %v477 = vld [vmem:[%s289 + $0x4c8] sm:$0xff]
      %v478 = vld [vmem:[%s289 + $0x4d0] sm:$0xff]
      %v479 = vld [vmem:[%s289 + $0x4d8] sm:$0xff]
      %v480 = vld [vmem:[%s289 + $0x4e0] sm:$0xff]
      %v481 = vld [vmem:[%s289 + $0x4e8] sm:$0xff]
      %v482 = vld [vmem:[%s289 + $0x4f0] sm:$0xff]
      %v483 = vld [vmem:[%s289 + $0x4f8] sm:$0xff]
      %v484 = vld [vmem:[%s289 + $0x500] sm:$0xff]
      %v485 = vld [vmem:[%s289 + $0x508] sm:$0xff]
      %v486 = vld [vmem:[%s289 + $0x510] sm:$0xff]
      %v487 = vld [vmem:[%s289 + $0x518] sm:$0xff]
      %v488 = vld [vmem:[%s289 + $0x520] sm:$0xff]
      %v489 = vld [vmem:[%s289 + $0x528] sm:$0xff]
      %v490 = vld [vmem:[%s289 + $0x530] sm:$0xff]
      %v491 = vld [vmem:[%s289 + $0x538] sm:$0xff]
      %v492 = vld [vmem:[%s289 + $0x540] sm:$0xff]
      %v493 = vld [vmem:[%s289 + $0x548] sm:$0xff]
      %v494 = vld [vmem:[%s289 + $0x550] sm:$0xff]
      %v495 = vld [vmem:[%s289 + $0x558] sm:$0xff]
      %v496 = vld [vmem:[%s289 + $0x560] sm:$0xff]
      %v497 = vld [vmem:[%s289 + $0x568] sm:$0xff]
      %v498 = vld [vmem:[%s289 + $0x570] sm:$0xff]
      %v499 = vld [vmem:[%s289 + $0x578] sm:$0xff]
      %v500 = vld [vmem:[%s289 + $0x580] sm:$0xff]
      %v501 = vld [vmem:[%s289 + $0x588] sm:$0xff]
      %v502 = vld [vmem:[%s289 + $0x590] sm:$0xff]
      %v503 = vld [vmem:[%s289 + $0x598] sm:$0xff]
      %v504 = vld [vmem:[%s289 + $0x5a0] sm:$0xff]
      %v505 = vld [vmem:[%s289 + $0x5a8] sm:$0xff]
      %v506 = vld [vmem:[%s289 + $0x5b0] sm:$0xff]
      %v507 = vld [vmem:[%s289 + $0x5b8] sm:$0xff]
      %v508 = vld [vmem:[%s289 + $0x5c0] sm:$0xff]
      %v509 = vld [vmem:[%s289 + $0x5c8] sm:$0xff]
      %v510 = vld [vmem:[%s289 + $0x5d0] sm:$0xff]
      %v511 = vld [vmem:[%s289 + $0x5d8] sm:$0xff]
      %v512 = vld [vmem:[%s289 + $0x5e0] sm:$0xff]
      %v513 = vld [vmem:[%s289 + $0x5e8] sm:$0xff]
      %v514 = vld [vmem:[%s289 + $0x5f0] sm:$0xff]
      %v515 = vld [vmem:[%s289 + $0x5f8] sm:$0xff]
      %v516 = vld [vmem:[%s289 + $0x600] sm:$0xff]
      %v517 = vld [vmem:[%s289 + $0x608] sm:$0xff]
      %v518 = vld [vmem:[%s289 + $0x610] sm:$0xff]
      %v519 = vld [vmem:[%s289 + $0x618] sm:$0xff]
      %v520 = vld [vmem:[%s289 + $0x620] sm:$0xff]
      %v521 = vld [vmem:[%s289 + $0x628] sm:$0xff]
      %v522 = vld [vmem:[%s289 + $0x630] sm:$0xff]
      %v523 = vld [vmem:[%s289 + $0x638] sm:$0xff]
      %v524 = vld [vmem:[%s289 + $0x640] sm:$0xff]
      %v525 = vld [vmem:[%s289 + $0x648] sm:$0xff]
      %v526 = vld [vmem:[%s289 + $0x650] sm:$0xff]
      %v527 = vld [vmem:[%s289 + $0x658] sm:$0xff]
      %v528 = vld [vmem:[%s289 + $0x660] sm:$0xff]
      %v529 = vld [vmem:[%s289 + $0x668] sm:$0xff]
      %v530 = vld [vmem:[%s289 + $0x670] sm:$0xff]
      %v531 = vld [vmem:[%s289 + $0x678] sm:$0xff]
      %v532 = vld [vmem:[%s289 + $0x680] sm:$0xff]
      %v533 = vld [vmem:[%s289 + $0x688] sm:$0xff]
      %v534 = vld [vmem:[%s289 + $0x690] sm:$0xff]
      %v535 = vld [vmem:[%s289 + $0x698] sm:$0xff]
      %v536 = vld [vmem:[%s289 + $0x6a0] sm:$0xff]
      %v537 = vld [vmem:[%s289 + $0x6a8] sm:$0xff]
      %v538 = vld [vmem:[%s289 + $0x6b0] sm:$0xff]
      %v539 = vld [vmem:[%s289 + $0x6b8] sm:$0xff]
      %v540 = vld [vmem:[%s289 + $0x6c0] sm:$0xff]
      %v541 = vld [vmem:[%s289 + $0x6c8] sm:$0xff]
      %v542 = vld [vmem:[%s289 + $0x6d0] sm:$0xff]
      %v543 = vld [vmem:[%s289 + $0x6d8] sm:$0xff]
      %v544 = vld [vmem:[%s289 + $0x6e0] sm:$0xff]
      %v545 = vld [vmem:[%s289 + $0x6e8] sm:$0xff]
      %v546 = vld [vmem:[%s289 + $0x6f0] sm:$0xff]
      %v547 = vld [vmem:[%s289 + $0x6f8] sm:$0xff]
      %v548 = vld [vmem:[%s289 + $0x700] sm:$0xff]
      %v549 = vld [vmem:[%s289 + $0x708] sm:$0xff]
      %v550 = vld [vmem:[%s289 + $0x710] sm:$0xff]
      %v551 = vld [vmem:[%s289 + $0x718] sm:$0xff]
      %v552 = vld [vmem:[%s289 + $0x720] sm:$0xff]
      %v553 = vld [vmem:[%s289 + $0x728] sm:$0xff]
      %v554 = vld [vmem:[%s289 + $0x730] sm:$0xff]
      %v555 = vld [vmem:[%s289 + $0x738] sm:$0xff]
      %v556 = vld [vmem:[%s289 + $0x740] sm:$0xff]
      %v557 = vld [vmem:[%s289 + $0x748] sm:$0xff]
      %v558 = vld [vmem:[%s289 + $0x750] sm:$0xff]
      %v559 = vld [vmem:[%s289 + $0x758] sm:$0xff]
      %v560 = vld [vmem:[%s289 + $0x760] sm:$0xff]
      %v561 = vld [vmem:[%s289 + $0x768] sm:$0xff]
      %v562 = vld [vmem:[%s289 + $0x770] sm:$0xff]
      %v563 = vld [vmem:[%s289 + $0x778] sm:$0xff]
      %v564 = vld [vmem:[%s289 + $0x780] sm:$0xff]
      %v565 = vld [vmem:[%s289 + $0x788] sm:$0xff]
      %v566 = vld [vmem:[%s289 + $0x790] sm:$0xff]
      %v567 = vld [vmem:[%s289 + $0x798] sm:$0xff]
      %v568 = vld [vmem:[%s289 + $0x7a0] sm:$0xff]
      %v569 = vld [vmem:[%s289 + $0x7a8] sm:$0xff]
      %v570 = vld [vmem:[%s289 + $0x7b0] sm:$0xff]
      %v571 = vld [vmem:[%s289 + $0x7b8] sm:$0xff]
      %v572 = vld [vmem:[%s289 + $0x7c0] sm:$0xff]
      %v573 = vld [vmem:[%s289 + $0x7c8] sm:$0xff]
      %v574 = vld [vmem:[%s289 + $0x7d0] sm:$0xff]
      %v575 = vld [vmem:[%s289 + $0x7d8] sm:$0xff]
      %v576 = vld [vmem:[%s289 + $0x7e0] sm:$0xff]
      %v577 = vld [vmem:[%s289 + $0x7e8] sm:$0xff]
      %v578 = vld [vmem:[%s289 + $0x7f0] sm:$0xff]
      %v579 = vld [vmem:[%s289 + $0x7f8] sm:$0xff]
      %v580 = vld [vmem:[%s289 + $0x800] sm:$0xff]
      %v581 = vld [vmem:[%s289 + $0x808] sm:$0xff]
      %v582 = vld [vmem:[%s289 + $0x810] sm:$0xff]
      %v583 = vld [vmem:[%s289 + $0x818] sm:$0xff]
      %v584 = vld [vmem:[%s289 + $0x820] sm:$0xff]
      %v585 = vld [vmem:[%s289 + $0x828] sm:$0xff]
      %v586 = vld [vmem:[%s289 + $0x830] sm:$0xff]
      %v587 = vld [vmem:[%s289 + $0x838] sm:$0xff]
      %v588 = vld [vmem:[%s289 + $0x840] sm:$0xff]
      %v589 = vld [vmem:[%s289 + $0x848] sm:$0xff]
      %v590 = vld [vmem:[%s289 + $0x850] sm:$0xff]
      %v591 = vld [vmem:[%s289 + $0x858] sm:$0xff]
      %v592 = vld [vmem:[%s289 + $0x860] sm:$0xff]
      %v593 = vld [vmem:[%s289 + $0x868] sm:$0xff]
      %v594 = vld [vmem:[%s289 + $0x870] sm:$0xff]
      %v595 = vld [vmem:[%s289 + $0x878] sm:$0xff]
      %v596 = vld [vmem:[%s289 + $0x880] sm:$0xff]
      %v597 = vld [vmem:[%s289 + $0x888] sm:$0xff]
      %v598 = vld [vmem:[%s289 + $0x890] sm:$0xff]
      %v599 = vld [vmem:[%s289 + $0x898] sm:$0xff]
      %v600 = vld [vmem:[%s289 + $0x8a0] sm:$0xff]
      %v601 = vld [vmem:[%s289 + $0x8a8] sm:$0xff]
      %v602 = vld [vmem:[%s289 + $0x8b0] sm:$0xff]
      %v603 = vld [vmem:[%s289 + $0x8b8] sm:$0xff]
      %v604 = vld [vmem:[%s289 + $0x8c0] sm:$0xff]
      %v605 = vld [vmem:[%s289 + $0x8c8] sm:$0xff]
      %v606 = vld [vmem:[%s289 + $0x8d0] sm:$0xff]
      %v607 = vld [vmem:[%s289 + $0x8d8] sm:$0xff]
      %v608 = vld [vmem:[%s289 + $0x8e0] sm:$0xff]
      %v609 = vld [vmem:[%s289 + $0x8e8] sm:$0xff]
      %v610 = vld [vmem:[%s289 + $0x8f0] sm:$0xff]
      %v611 = vld [vmem:[%s289 + $0x8f8] sm:$0xff]
      %v612 = vld [vmem:[%s289 + $0x900] sm:$0xff]
      %v613 = vld [vmem:[%s289 + $0x908] sm:$0xff]
      %v614 = vld [vmem:[%s289 + $0x910] sm:$0xff]
      %v615 = vld [vmem:[%s289 + $0x918] sm:$0xff]
      %v616 = vld [vmem:[%s289 + $0x920] sm:$0xff]
      %v617 = vld [vmem:[%s289 + $0x928] sm:$0xff]
      %v618 = vld [vmem:[%s289 + $0x930] sm:$0xff]
      %v619 = vld [vmem:[%s289 + $0x938] sm:$0xff]
      %v620 = vld [vmem:[%s289 + $0x940] sm:$0xff]
      %v621 = vld [vmem:[%s289 + $0x948] sm:$0xff]
      %v622 = vld [vmem:[%s289 + $0x950] sm:$0xff]
      %v623 = vld [vmem:[%s289 + $0x958] sm:$0xff]
      %v624 = vld [vmem:[%s289 + $0x960] sm:$0xff]
      %v625 = vld [vmem:[%s289 + $0x968] sm:$0xff]
      %v626 = vld [vmem:[%s289 + $0x970] sm:$0xff]
      %v627 = vld [vmem:[%s289 + $0x978] sm:$0xff]
      %v628 = vld [vmem:[%s289 + $0x980] sm:$0xff]
      %v629 = vld [vmem:[%s289 + $0x988] sm:$0xff]
      %v630 = vld [vmem:[%s289 + $0x990] sm:$0xff]
      %v631 = vld [vmem:[%s289 + $0x998] sm:$0xff]
      %v632 = vld [vmem:[%s289 + $0x9a0] sm:$0xff]
      %v633 = vld [vmem:[%s289 + $0x9a8] sm:$0xff]
      %v634 = vld [vmem:[%s289 + $0x9b0] sm:$0xff]
      %v635 = vld [vmem:[%s289 + $0x9b8] sm:$0xff]
      %v636 = vld [vmem:[%s289 + $0x9c0] sm:$0xff]
      %v637 = vld [vmem:[%s289 + $0x9c8] sm:$0xff]
      %v638 = vld [vmem:[%s289 + $0x9d0] sm:$0xff]
      %v639 = vld [vmem:[%s289 + $0x9d8] sm:$0xff]
      %v640 = vld [vmem:[%s289 + $0x9e0] sm:$0xff]
      %v641 = vld [vmem:[%s289 + $0x9e8] sm:$0xff]
      %v642 = vld [vmem:[%s289 + $0x9f0] sm:$0xff]
      %v643 = vld [vmem:[%s289 + $0x9f8] sm:$0xff]
      %v964 = vunpack.c.l.b16 %v324
      %v965 = vunpack.c.h.b16 %v324
      %v966 = vunpack.c.l.b16 %v325
      %v967 = vunpack.c.h.b16 %v325
      %v968 = vunpack.c.l.b16 %v326
      %v969 = vunpack.c.h.b16 %v326
      %v970 = vunpack.c.l.b16 %v327
      %v971 = vunpack.c.h.b16 %v327
      %v972 = vunpack.c.l.b16 %v328
      %v973 = vunpack.c.h.b16 %v328
      %v974 = vunpack.c.l.b16 %v329
      %v975 = vunpack.c.h.b16 %v329
      %v976 = vunpack.c.l.b16 %v330
      %v977 = vunpack.c.h.b16 %v330
      %v978 = vunpack.c.l.b16 %v331
      %v979 = vunpack.c.h.b16 %v331
      %v980 = vunpack.c.l.b16 %v332
      %v981 = vunpack.c.h.b16 %v332
      %v982 = vunpack.c.l.b16 %v333
      %v983 = vunpack.c.h.b16 %v333
      %v984 = vunpack.c.l.b16 %v334
      %v985 = vunpack.c.h.b16 %v334
      %v986 = vunpack.c.l.b16 %v335
      %v987 = vunpack.c.h.b16 %v335
      %v988 = vunpack.c.l.b16 %v336
      %v989 = vunpack.c.h.b16 %v336
      %v990 = vunpack.c.l.b16 %v337
      %v991 = vunpack.c.h.b16 %v337
      %v992 = vunpack.c.l.b16 %v338
      %v993 = vunpack.c.h.b16 %v338
      %v994 = vunpack.c.l.b16 %v339
      %v995 = vunpack.c.h.b16 %v339
      %v996 = vunpack.c.l.b16 %v340
      %v997 = vunpack.c.h.b16 %v340
      %v998 = vunpack.c.l.b16 %v341
      %v999 = vunpack.c.h.b16 %v341
      %v1000 = vunpack.c.l.b16 %v342
      %v1001 = vunpack.c.h.b16 %v342
      %v1002 = vunpack.c.l.b16 %v343
      %v1003 = vunpack.c.h.b16 %v343
      %v1004 = vunpack.c.l.b16 %v344
      %v1005 = vunpack.c.h.b16 %v344
      %v1006 = vunpack.c.l.b16 %v345
      %v1007 = vunpack.c.h.b16 %v345
      %v1008 = vunpack.c.l.b16 %v346
      %v1009 = vunpack.c.h.b16 %v346
      %v1010 = vunpack.c.l.b16 %v347
      %v1011 = vunpack.c.h.b16 %v347
      %v1012 = vunpack.c.l.b16 %v348
      %v1013 = vunpack.c.h.b16 %v348
      %v1014 = vunpack.c.l.b16 %v349
      %v1015 = vunpack.c.h.b16 %v349
      %v1016 = vunpack.c.l.b16 %v350
      %v1017 = vunpack.c.h.b16 %v350
      %v1018 = vunpack.c.l.b16 %v351
      %v1019 = vunpack.c.h.b16 %v351
      %v1020 = vunpack.c.l.b16 %v352
      %v1021 = vunpack.c.h.b16 %v352
      %v1022 = vunpack.c.l.b16 %v353
      %v1023 = vunpack.c.h.b16 %v353
      %v1024 = vunpack.c.l.b16 %v354
      %v1025 = vunpack.c.h.b16 %v354
      %v1026 = vunpack.c.l.b16 %v355
      %v1027 = vunpack.c.h.b16 %v355
      %v1028 = vunpack.c.l.b16 %v356
      %v1029 = vunpack.c.h.b16 %v356
      %v1030 = vunpack.c.l.b16 %v357
      %v1031 = vunpack.c.h.b16 %v357
      %v1032 = vunpack.c.l.b16 %v358
      %v1033 = vunpack.c.h.b16 %v358
      %v1034 = vunpack.c.l.b16 %v359
      %v1035 = vunpack.c.h.b16 %v359
      %v1036 = vunpack.c.l.b16 %v360
      %v1037 = vunpack.c.h.b16 %v360
      %v1038 = vunpack.c.l.b16 %v361
      %v1039 = vunpack.c.h.b16 %v361
      %v1040 = vunpack.c.l.b16 %v362
      %v1041 = vunpack.c.h.b16 %v362
      %v1042 = vunpack.c.l.b16 %v363
      %v1043 = vunpack.c.h.b16 %v363
      %v1044 = vunpack.c.l.b16 %v364
      %v1045 = vunpack.c.h.b16 %v364
      %v1046 = vunpack.c.l.b16 %v365
      %v1047 = vunpack.c.h.b16 %v365
      %v1048 = vunpack.c.l.b16 %v366
      %v1049 = vunpack.c.h.b16 %v366
      %v1050 = vunpack.c.l.b16 %v367
      %v1051 = vunpack.c.h.b16 %v367
      %v1052 = vunpack.c.l.b16 %v368
      %v1053 = vunpack.c.h.b16 %v368
      %v1054 = vunpack.c.l.b16 %v369
      %v1055 = vunpack.c.h.b16 %v369
      %v1056 = vunpack.c.l.b16 %v370
      %v1057 = vunpack.c.h.b16 %v370
      %v1058 = vunpack.c.l.b16 %v371
      %v1059 = vunpack.c.h.b16 %v371
      %v1060 = vunpack.c.l.b16 %v372
      %v1061 = vunpack.c.h.b16 %v372
      %v1062 = vunpack.c.l.b16 %v373
      %v1063 = vunpack.c.h.b16 %v373
      %v1064 = vunpack.c.l.b16 %v374
      %v1065 = vunpack.c.h.b16 %v374
      %v1066 = vunpack.c.l.b16 %v375
      %v1067 = vunpack.c.h.b16 %v375
      %v1068 = vunpack.c.l.b16 %v376
      %v1069 = vunpack.c.h.b16 %v376
      %v1070 = vunpack.c.l.b16 %v377
      %v1071 = vunpack.c.h.b16 %v377
      %v1072 = vunpack.c.l.b16 %v378
      %v1073 = vunpack.c.h.b16 %v378
      %v1074 = vunpack.c.l.b16 %v379
      %v1075 = vunpack.c.h.b16 %v379
      %v1076 = vunpack.c.l.b16 %v380
      %v1077 = vunpack.c.h.b16 %v380
      %v1078 = vunpack.c.l.b16 %v381
      %v1079 = vunpack.c.h.b16 %v381
      %v1080 = vunpack.c.l.b16 %v382
      %v1081 = vunpack.c.h.b16 %v382
      %v1082 = vunpack.c.l.b16 %v383
      %v1083 = vunpack.c.h.b16 %v383
      %v1084 = vunpack.c.l.b16 %v384
      %v1085 = vunpack.c.h.b16 %v384
      %v1086 = vunpack.c.l.b16 %v385
      %v1087 = vunpack.c.h.b16 %v385
      %v1088 = vunpack.c.l.b16 %v386
      %v1089 = vunpack.c.h.b16 %v386
      %v1090 = vunpack.c.l.b16 %v387
      %v1091 = vunpack.c.h.b16 %v387
      %v1092 = vunpack.c.l.b16 %v388
      %v1093 = vunpack.c.h.b16 %v388
      %v1094 = vunpack.c.l.b16 %v389
      %v1095 = vunpack.c.h.b16 %v389
      %v1096 = vunpack.c.l.b16 %v390
      %v1097 = vunpack.c.h.b16 %v390
      %v1098 = vunpack.c.l.b16 %v391
      %v1099 = vunpack.c.h.b16 %v391
      %v1100 = vunpack.c.l.b16 %v392
      %v1101 = vunpack.c.h.b16 %v392
      %v1102 = vunpack.c.l.b16 %v393
      %v1103 = vunpack.c.h.b16 %v393
      %v1104 = vunpack.c.l.b16 %v394
      %v1105 = vunpack.c.h.b16 %v394
      %v1106 = vunpack.c.l.b16 %v395
      %v1107 = vunpack.c.h.b16 %v395
      %v1108 = vunpack.c.l.b16 %v396
      %v1109 = vunpack.c.h.b16 %v396
      %v1110 = vunpack.c.l.b16 %v397
      %v1111 = vunpack.c.h.b16 %v397
      %v1112 = vunpack.c.l.b16 %v398
      %v1113 = vunpack.c.h.b16 %v398
      %v1114 = vunpack.c.l.b16 %v399
      %v1115 = vunpack.c.h.b16 %v399
      %v1116 = vunpack.c.l.b16 %v400
      %v1117 = vunpack.c.h.b16 %v400
      %v1118 = vunpack.c.l.b16 %v401
      %v1119 = vunpack.c.h.b16 %v401
      %v1120 = vunpack.c.l.b16 %v402
      %v1121 = vunpack.c.h.b16 %v402
      %v1122 = vunpack.c.l.b16 %v403
      %v1123 = vunpack.c.h.b16 %v403
      %v1124 = vunpack.c.l.b16 %v404
      %v1125 = vunpack.c.h.b16 %v404
      %v1126 = vunpack.c.l.b16 %v405
      %v1127 = vunpack.c.h.b16 %v405
      %v1128 = vunpack.c.l.b16 %v406
      %v1129 = vunpack.c.h.b16 %v406
      %v1130 = vunpack.c.l.b16 %v407
      %v1131 = vunpack.c.h.b16 %v407
      %v1132 = vunpack.c.l.b16 %v408
      %v1133 = vunpack.c.h.b16 %v408
      %v1134 = vunpack.c.l.b16 %v409
      %v1135 = vunpack.c.h.b16 %v409
      %v1136 = vunpack.c.l.b16 %v410
      %v1137 = vunpack.c.h.b16 %v410
      %v1138 = vunpack.c.l.b16 %v411
      %v1139 = vunpack.c.h.b16 %v411
      %v1140 = vunpack.c.l.b16 %v412
      %v1141 = vunpack.c.h.b16 %v412
      %v1142 = vunpack.c.l.b16 %v413
      %v1143 = vunpack.c.h.b16 %v413
      %v1144 = vunpack.c.l.b16 %v414
      %v1145 = vunpack.c.h.b16 %v414
      %v1146 = vunpack.c.l.b16 %v415
      %v1147 = vunpack.c.h.b16 %v415
      %v1148 = vunpack.c.l.b16 %v416
      %v1149 = vunpack.c.h.b16 %v416
      %v1150 = vunpack.c.l.b16 %v417
      %v1151 = vunpack.c.h.b16 %v417
      %v1152 = vunpack.c.l.b16 %v418
      %v1153 = vunpack.c.h.b16 %v418
      %v1154 = vunpack.c.l.b16 %v419
      %v1155 = vunpack.c.h.b16 %v419
      %v1156 = vunpack.c.l.b16 %v420
      %v1157 = vunpack.c.h.b16 %v420
      %v1158 = vunpack.c.l.b16 %v421
      %v1159 = vunpack.c.h.b16 %v421
      %v1160 = vunpack.c.l.b16 %v422
      %v1161 = vunpack.c.h.b16 %v422
      %v1162 = vunpack.c.l.b16 %v423
      %v1163 = vunpack.c.h.b16 %v423
      %v1164 = vunpack.c.l.b16 %v424
      %v1165 = vunpack.c.h.b16 %v424
      %v1166 = vunpack.c.l.b16 %v425
      %v1167 = vunpack.c.h.b16 %v425
      %v1168 = vunpack.c.l.b16 %v426
      %v1169 = vunpack.c.h.b16 %v426
      %v1170 = vunpack.c.l.b16 %v427
      %v1171 = vunpack.c.h.b16 %v427
      %v1172 = vunpack.c.l.b16 %v428
      %v1173 = vunpack.c.h.b16 %v428
      %v1174 = vunpack.c.l.b16 %v429
      %v1175 = vunpack.c.h.b16 %v429
      %v1176 = vunpack.c.l.b16 %v430
      %v1177 = vunpack.c.h.b16 %v430
      %v1178 = vunpack.c.l.b16 %v431
      %v1179 = vunpack.c.h.b16 %v431
      %v1180 = vunpack.c.l.b16 %v432
      %v1181 = vunpack.c.h.b16 %v432
      %v1182 = vunpack.c.l.b16 %v433
      %v1183 = vunpack.c.h.b16 %v433
      %v1184 = vunpack.c.l.b16 %v434
      %v1185 = vunpack.c.h.b16 %v434
      %v1186 = vunpack.c.l.b16 %v435
      %v1187 = vunpack.c.h.b16 %v435
      %v1188 = vunpack.c.l.b16 %v436
      %v1189 = vunpack.c.h.b16 %v436
      %v1190 = vunpack.c.l.b16 %v437
      %v1191 = vunpack.c.h.b16 %v437
      %v1192 = vunpack.c.l.b16 %v438
      %v1193 = vunpack.c.h.b16 %v438
      %v1194 = vunpack.c.l.b16 %v439
      %v1195 = vunpack.c.h.b16 %v439
      %v1196 = vunpack.c.l.b16 %v440
      %v1197 = vunpack.c.h.b16 %v440
      %v1198 = vunpack.c.l.b16 %v441
      %v1199 = vunpack.c.h.b16 %v441
      %v1200 = vunpack.c.l.b16 %v442
      %v1201 = vunpack.c.h.b16 %v442
      %v1202 = vunpack.c.l.b16 %v443
      %v1203 = vunpack.c.h.b16 %v443
      %v1204 = vunpack.c.l.b16 %v444
      %v1205 = vunpack.c.h.b16 %v444
      %v1206 = vunpack.c.l.b16 %v445
      %v1207 = vunpack.c.h.b16 %v445
      %v1208 = vunpack.c.l.b16 %v446
      %v1209 = vunpack.c.h.b16 %v446
      %v1210 = vunpack.c.l.b16 %v447
      %v1211 = vunpack.c.h.b16 %v447
      %v1212 = vunpack.c.l.b16 %v448
      %v1213 = vunpack.c.h.b16 %v448
      %v1214 = vunpack.c.l.b16 %v449
      %v1215 = vunpack.c.h.b16 %v449
      %v1216 = vunpack.c.l.b16 %v450
      %v1217 = vunpack.c.h.b16 %v450
      %v1218 = vunpack.c.l.b16 %v451
      %v1219 = vunpack.c.h.b16 %v451
      %v1220 = vunpack.c.l.b16 %v452
      %v1221 = vunpack.c.h.b16 %v452
      %v1222 = vunpack.c.l.b16 %v453
      %v1223 = vunpack.c.h.b16 %v453
      %v1224 = vunpack.c.l.b16 %v454
      %v1225 = vunpack.c.h.b16 %v454
      %v1226 = vunpack.c.l.b16 %v455
      %v1227 = vunpack.c.h.b16 %v455
      %v1228 = vunpack.c.l.b16 %v456
      %v1229 = vunpack.c.h.b16 %v456
      %v1230 = vunpack.c.l.b16 %v457
      %v1231 = vunpack.c.h.b16 %v457
      %v1232 = vunpack.c.l.b16 %v458
      %v1233 = vunpack.c.h.b16 %v458
      %v1234 = vunpack.c.l.b16 %v459
      %v1235 = vunpack.c.h.b16 %v459
      %v1236 = vunpack.c.l.b16 %v460
      %v1237 = vunpack.c.h.b16 %v460
      %v1238 = vunpack.c.l.b16 %v461
      %v1239 = vunpack.c.h.b16 %v461
      %v1240 = vunpack.c.l.b16 %v462
      %v1241 = vunpack.c.h.b16 %v462
      %v1242 = vunpack.c.l.b16 %v463
      %v1243 = vunpack.c.h.b16 %v463
      %v1244 = vunpack.c.l.b16 %v464
      %v1245 = vunpack.c.h.b16 %v464
      %v1246 = vunpack.c.l.b16 %v465
      %v1247 = vunpack.c.h.b16 %v465
      %v1248 = vunpack.c.l.b16 %v466
      %v1249 = vunpack.c.h.b16 %v466
      %v1250 = vunpack.c.l.b16 %v467
      %v1251 = vunpack.c.h.b16 %v467
      %v1252 = vunpack.c.l.b16 %v468
      %v1253 = vunpack.c.h.b16 %v468
      %v1254 = vunpack.c.l.b16 %v469
      %v1255 = vunpack.c.h.b16 %v469
      %v1256 = vunpack.c.l.b16 %v470
      %v1257 = vunpack.c.h.b16 %v470
      %v1258 = vunpack.c.l.b16 %v471
      %v1259 = vunpack.c.h.b16 %v471
      %v1260 = vunpack.c.l.b16 %v472
      %v1261 = vunpack.c.h.b16 %v472
      %v1262 = vunpack.c.l.b16 %v473
      %v1263 = vunpack.c.h.b16 %v473
      %v1264 = vunpack.c.l.b16 %v474
      %v1265 = vunpack.c.h.b16 %v474
      %v1266 = vunpack.c.l.b16 %v475
      %v1267 = vunpack.c.h.b16 %v475
      %v1268 = vunpack.c.l.b16 %v476
      %v1269 = vunpack.c.h.b16 %v476
      %v1270 = vunpack.c.l.b16 %v477
      %v1271 = vunpack.c.h.b16 %v477
      %v1272 = vunpack.c.l.b16 %v478
      %v1273 = vunpack.c.h.b16 %v478
      %v1274 = vunpack.c.l.b16 %v479
      %v1275 = vunpack.c.h.b16 %v479
      %v1276 = vunpack.c.l.b16 %v480
      %v1277 = vunpack.c.h.b16 %v480
      %v1278 = vunpack.c.l.b16 %v481
      %v1279 = vunpack.c.h.b16 %v481
      %v1280 = vunpack.c.l.b16 %v482
      %v1281 = vunpack.c.h.b16 %v482
      %v1282 = vunpack.c.l.b16 %v483
      %v1283 = vunpack.c.h.b16 %v483
      %v1284 = vunpack.c.l.b16 %v484
      %v1285 = vunpack.c.h.b16 %v484
      %v1286 = vunpack.c.l.b16 %v485
      %v1287 = vunpack.c.h.b16 %v485
      %v1288 = vunpack.c.l.b16 %v486
      %v1289 = vunpack.c.h.b16 %v486
      %v1290 = vunpack.c.l.b16 %v487
      %v1291 = vunpack.c.h.b16 %v487
      %v1292 = vunpack.c.l.b16 %v488
      %v1293 = vunpack.c.h.b16 %v488
      %v1294 = vunpack.c.l.b16 %v489
      %v1295 = vunpack.c.h.b16 %v489
      %v1296 = vunpack.c.l.b16 %v490
      %v1297 = vunpack.c.h.b16 %v490
      %v1298 = vunpack.c.l.b16 %v491
      %v1299 = vunpack.c.h.b16 %v491
      %v1300 = vunpack.c.l.b16 %v492
      %v1301 = vunpack.c.h.b16 %v492
      %v1302 = vunpack.c.l.b16 %v493
      %v1303 = vunpack.c.h.b16 %v493
      %v1304 = vunpack.c.l.b16 %v494
      %v1305 = vunpack.c.h.b16 %v494
      %v1306 = vunpack.c.l.b16 %v495
      %v1307 = vunpack.c.h.b16 %v495
      %v1308 = vunpack.c.l.b16 %v496
      %v1309 = vunpack.c.h.b16 %v496
      %v1310 = vunpack.c.l.b16 %v497
      %v1311 = vunpack.c.h.b16 %v497
      %v1312 = vunpack.c.l.b16 %v498
      %v1313 = vunpack.c.h.b16 %v498
      %v1314 = vunpack.c.l.b16 %v499
      %v1315 = vunpack.c.h.b16 %v499
      %v1316 = vunpack.c.l.b16 %v500
      %v1317 = vunpack.c.h.b16 %v500
      %v1318 = vunpack.c.l.b16 %v501
      %v1319 = vunpack.c.h.b16 %v501
      %v1320 = vunpack.c.l.b16 %v502
      %v1321 = vunpack.c.h.b16 %v502
      %v1322 = vunpack.c.l.b16 %v503
      %v1323 = vunpack.c.h.b16 %v503
      %v1324 = vunpack.c.l.b16 %v504
      %v1325 = vunpack.c.h.b16 %v504
      %v1326 = vunpack.c.l.b16 %v505
      %v1327 = vunpack.c.h.b16 %v505
      %v1328 = vunpack.c.l.b16 %v506
      %v1329 = vunpack.c.h.b16 %v506
      %v1330 = vunpack.c.l.b16 %v507
      %v1331 = vunpack.c.h.b16 %v507
      %v1332 = vunpack.c.l.b16 %v508
      %v1333 = vunpack.c.h.b16 %v508
      %v1334 = vunpack.c.l.b16 %v509
      %v1335 = vunpack.c.h.b16 %v509
      %v1336 = vunpack.c.l.b16 %v510
      %v1337 = vunpack.c.h.b16 %v510
      %v1338 = vunpack.c.l.b16 %v511
      %v1339 = vunpack.c.h.b16 %v511
      %v1340 = vunpack.c.l.b16 %v512
      %v1341 = vunpack.c.h.b16 %v512
      %v1342 = vunpack.c.l.b16 %v513
      %v1343 = vunpack.c.h.b16 %v513
      %v1344 = vunpack.c.l.b16 %v514
      %v1345 = vunpack.c.h.b16 %v514
      %v1346 = vunpack.c.l.b16 %v515
      %v1347 = vunpack.c.h.b16 %v515
      %v1348 = vunpack.c.l.b16 %v516
      %v1349 = vunpack.c.h.b16 %v516
      %v1350 = vunpack.c.l.b16 %v517
      %v1351 = vunpack.c.h.b16 %v517
      %v1352 = vunpack.c.l.b16 %v518
      %v1353 = vunpack.c.h.b16 %v518
      %v1354 = vunpack.c.l.b16 %v519
      %v1355 = vunpack.c.h.b16 %v519
      %v1356 = vunpack.c.l.b16 %v520
      %v1357 = vunpack.c.h.b16 %v520
      %v1358 = vunpack.c.l.b16 %v521
      %v1359 = vunpack.c.h.b16 %v521
      %v1360 = vunpack.c.l.b16 %v522
      %v1361 = vunpack.c.h.b16 %v522
      %v1362 = vunpack.c.l.b16 %v523
      %v1363 = vunpack.c.h.b16 %v523
      %v1364 = vunpack.c.l.b16 %v524
      %v1365 = vunpack.c.h.b16 %v524
      %v1366 = vunpack.c.l.b16 %v525
      %v1367 = vunpack.c.h.b16 %v525
      %v1368 = vunpack.c.l.b16 %v526
      %v1369 = vunpack.c.h.b16 %v526
      %v1370 = vunpack.c.l.b16 %v527
      %v1371 = vunpack.c.h.b16 %v527
      %v1372 = vunpack.c.l.b16 %v528
      %v1373 = vunpack.c.h.b16 %v528
      %v1374 = vunpack.c.l.b16 %v529
      %v1375 = vunpack.c.h.b16 %v529
      %v1376 = vunpack.c.l.b16 %v530
      %v1377 = vunpack.c.h.b16 %v530
      %v1378 = vunpack.c.l.b16 %v531
      %v1379 = vunpack.c.h.b16 %v531
      %v1380 = vunpack.c.l.b16 %v532
      %v1381 = vunpack.c.h.b16 %v532
      %v1382 = vunpack.c.l.b16 %v533
      %v1383 = vunpack.c.h.b16 %v533
      %v1384 = vunpack.c.l.b16 %v534
      %v1385 = vunpack.c.h.b16 %v534
      %v1386 = vunpack.c.l.b16 %v535
      %v1387 = vunpack.c.h.b16 %v535
      %v1388 = vunpack.c.l.b16 %v536
      %v1389 = vunpack.c.h.b16 %v536
      %v1390 = vunpack.c.l.b16 %v537
      %v1391 = vunpack.c.h.b16 %v537
      %v1392 = vunpack.c.l.b16 %v538
      %v1393 = vunpack.c.h.b16 %v538
      %v1394 = vunpack.c.l.b16 %v539
      %v1395 = vunpack.c.h.b16 %v539
      %v1396 = vunpack.c.l.b16 %v540
      %v1397 = vunpack.c.h.b16 %v540
      %v1398 = vunpack.c.l.b16 %v541
      %v1399 = vunpack.c.h.b16 %v541
      %v1400 = vunpack.c.l.b16 %v542
      %v1401 = vunpack.c.h.b16 %v542
      %v1402 = vunpack.c.l.b16 %v543
      %v1403 = vunpack.c.h.b16 %v543
      %v1404 = vunpack.c.l.b16 %v544
      %v1405 = vunpack.c.h.b16 %v544
      %v1406 = vunpack.c.l.b16 %v545
      %v1407 = vunpack.c.h.b16 %v545
      %v1408 = vunpack.c.l.b16 %v546
      %v1409 = vunpack.c.h.b16 %v546
      %v1410 = vunpack.c.l.b16 %v547
      %v1411 = vunpack.c.h.b16 %v547
      %v1412 = vunpack.c.l.b16 %v548
      %v1413 = vunpack.c.h.b16 %v548
      %v1414 = vunpack.c.l.b16 %v549
      %v1415 = vunpack.c.h.b16 %v549
      %v1416 = vunpack.c.l.b16 %v550
      %v1417 = vunpack.c.h.b16 %v550
      %v1418 = vunpack.c.l.b16 %v551
      %v1419 = vunpack.c.h.b16 %v551
      %v1420 = vunpack.c.l.b16 %v552
      %v1421 = vunpack.c.h.b16 %v552
      %v1422 = vunpack.c.l.b16 %v553
      %v1423 = vunpack.c.h.b16 %v553
      %v1424 = vunpack.c.l.b16 %v554
      %v1425 = vunpack.c.h.b16 %v554
      %v1426 = vunpack.c.l.b16 %v555
      %v1427 = vunpack.c.h.b16 %v555
      %v1428 = vunpack.c.l.b16 %v556
      %v1429 = vunpack.c.h.b16 %v556
      %v1430 = vunpack.c.l.b16 %v557
      %v1431 = vunpack.c.h.b16 %v557
      %v1432 = vunpack.c.l.b16 %v558
      %v1433 = vunpack.c.h.b16 %v558
      %v1434 = vunpack.c.l.b16 %v559
      %v1435 = vunpack.c.h.b16 %v559
      %v1436 = vunpack.c.l.b16 %v560
      %v1437 = vunpack.c.h.b16 %v560
      %v1438 = vunpack.c.l.b16 %v561
      %v1439 = vunpack.c.h.b16 %v561
      %v1440 = vunpack.c.l.b16 %v562
      %v1441 = vunpack.c.h.b16 %v562
      %v1442 = vunpack.c.l.b16 %v563
      %v1443 = vunpack.c.h.b16 %v563
      %v1444 = vunpack.c.l.b16 %v564
      %v1445 = vunpack.c.h.b16 %v564
      %v1446 = vunpack.c.l.b16 %v565
      %v1447 = vunpack.c.h.b16 %v565
      %v1448 = vunpack.c.l.b16 %v566
      %v1449 = vunpack.c.h.b16 %v566
      %v1450 = vunpack.c.l.b16 %v567
      %v1451 = vunpack.c.h.b16 %v567
      %v1452 = vunpack.c.l.b16 %v568
      %v1453 = vunpack.c.h.b16 %v568
      %v1454 = vunpack.c.l.b16 %v569
      %v1455 = vunpack.c.h.b16 %v569
      %v1456 = vunpack.c.l.b16 %v570
      %v1457 = vunpack.c.h.b16 %v570
      %v1458 = vunpack.c.l.b16 %v571
      %v1459 = vunpack.c.h.b16 %v571
      %v1460 = vunpack.c.l.b16 %v572
      %v1461 = vunpack.c.h.b16 %v572
      %v1462 = vunpack.c.l.b16 %v573
      %v1463 = vunpack.c.h.b16 %v573
      %v1464 = vunpack.c.l.b16 %v574
      %v1465 = vunpack.c.h.b16 %v574
      %v1466 = vunpack.c.l.b16 %v575
      %v1467 = vunpack.c.h.b16 %v575
      %v1468 = vunpack.c.l.b16 %v576
      %v1469 = vunpack.c.h.b16 %v576
      %v1470 = vunpack.c.l.b16 %v577
      %v1471 = vunpack.c.h.b16 %v577
      %v1472 = vunpack.c.l.b16 %v578
      %v1473 = vunpack.c.h.b16 %v578
      %v1474 = vunpack.c.l.b16 %v579
      %v1475 = vunpack.c.h.b16 %v579
      %v1476 = vunpack.c.l.b16 %v580
      %v1477 = vunpack.c.h.b16 %v580
      %v1478 = vunpack.c.l.b16 %v581
      %v1479 = vunpack.c.h.b16 %v581
      %v1480 = vunpack.c.l.b16 %v582
      %v1481 = vunpack.c.h.b16 %v582
      %v1482 = vunpack.c.l.b16 %v583
      %v1483 = vunpack.c.h.b16 %v583
      %v1484 = vunpack.c.l.b16 %v584
      %v1485 = vunpack.c.h.b16 %v584
      %v1486 = vunpack.c.l.b16 %v585
      %v1487 = vunpack.c.h.b16 %v585
      %v1488 = vunpack.c.l.b16 %v586
      %v1489 = vunpack.c.h.b16 %v586
      %v1490 = vunpack.c.l.b16 %v587
      %v1491 = vunpack.c.h.b16 %v587
      %v1492 = vunpack.c.l.b16 %v588
      %v1493 = vunpack.c.h.b16 %v588
      %v1494 = vunpack.c.l.b16 %v589
      %v1495 = vunpack.c.h.b16 %v589
      %v1496 = vunpack.c.l.b16 %v590
      %v1497 = vunpack.c.h.b16 %v590
      %v1498 = vunpack.c.l.b16 %v591
      %v1499 = vunpack.c.h.b16 %v591
      %v1500 = vunpack.c.l.b16 %v592
      %v1501 = vunpack.c.h.b16 %v592
      %v1502 = vunpack.c.l.b16 %v593
      %v1503 = vunpack.c.h.b16 %v593
      %v1504 = vunpack.c.l.b16 %v594
      %v1505 = vunpack.c.h.b16 %v594
      %v1506 = vunpack.c.l.b16 %v595
      %v1507 = vunpack.c.h.b16 %v595
      %v1508 = vunpack.c.l.b16 %v596
      %v1509 = vunpack.c.h.b16 %v596
      %v1510 = vunpack.c.l.b16 %v597
      %v1511 = vunpack.c.h.b16 %v597
      %v1512 = vunpack.c.l.b16 %v598
      %v1513 = vunpack.c.h.b16 %v598
      %v1514 = vunpack.c.l.b16 %v599
      %v1515 = vunpack.c.h.b16 %v599
      %v1516 = vunpack.c.l.b16 %v600
      %v1517 = vunpack.c.h.b16 %v600
      %v1518 = vunpack.c.l.b16 %v601
      %v1519 = vunpack.c.h.b16 %v601
      %v1520 = vunpack.c.l.b16 %v602
      %v1521 = vunpack.c.h.b16 %v602
      %v1522 = vunpack.c.l.b16 %v603
      %v1523 = vunpack.c.h.b16 %v603
      %v1524 = vunpack.c.l.b16 %v604
      %v1525 = vunpack.c.h.b16 %v604
      %v1526 = vunpack.c.l.b16 %v605
      %v1527 = vunpack.c.h.b16 %v605
      %v1528 = vunpack.c.l.b16 %v606
      %v1529 = vunpack.c.h.b16 %v606
      %v1530 = vunpack.c.l.b16 %v607
      %v1531 = vunpack.c.h.b16 %v607
      %v1532 = vunpack.c.l.b16 %v608
      %v1533 = vunpack.c.h.b16 %v608
      %v1534 = vunpack.c.l.b16 %v609
      %v1535 = vunpack.c.h.b16 %v609
      %v1536 = vunpack.c.l.b16 %v610
      %v1537 = vunpack.c.h.b16 %v610
      %v1538 = vunpack.c.l.b16 %v611
      %v1539 = vunpack.c.h.b16 %v611
      %v1540 = vunpack.c.l.b16 %v612
      %v1541 = vunpack.c.h.b16 %v612
      %v1542 = vunpack.c.l.b16 %v613
      %v1543 = vunpack.c.h.b16 %v613
      %v1544 = vunpack.c.l.b16 %v614
      %v1545 = vunpack.c.h.b16 %v614
      %v1546 = vunpack.c.l.b16 %v615
      %v1547 = vunpack.c.h.b16 %v615
      %v1548 = vunpack.c.l.b16 %v616
      %v1549 = vunpack.c.h.b16 %v616
      %v1550 = vunpack.c.l.b16 %v617
      %v1551 = vunpack.c.h.b16 %v617
      %v1552 = vunpack.c.l.b16 %v618
      %v1553 = vunpack.c.h.b16 %v618
      %v1554 = vunpack.c.l.b16 %v619
      %v1555 = vunpack.c.h.b16 %v619
      %v1556 = vunpack.c.l.b16 %v620
      %v1557 = vunpack.c.h.b16 %v620
      %v1558 = vunpack.c.l.b16 %v621
      %v1559 = vunpack.c.h.b16 %v621
      %v1560 = vunpack.c.l.b16 %v622
      %v1561 = vunpack.c.h.b16 %v622
      %v1562 = vunpack.c.l.b16 %v623
      %v1563 = vunpack.c.h.b16 %v623
      %v1564 = vunpack.c.l.b16 %v624
      %v1565 = vunpack.c.h.b16 %v624
      %v1566 = vunpack.c.l.b16 %v625
      %v1567 = vunpack.c.h.b16 %v625
      %v1568 = vunpack.c.l.b16 %v626
      %v1569 = vunpack.c.h.b16 %v626
      %v1570 = vunpack.c.l.b16 %v627
      %v1571 = vunpack.c.h.b16 %v627
      %v1572 = vunpack.c.l.b16 %v628
      %v1573 = vunpack.c.h.b16 %v628
      %v1574 = vunpack.c.l.b16 %v629
      %v1575 = vunpack.c.h.b16 %v629
      %v1576 = vunpack.c.l.b16 %v630
      %v1577 = vunpack.c.h.b16 %v630
      %v1578 = vunpack.c.l.b16 %v631
      %v1579 = vunpack.c.h.b16 %v631
      %v1580 = vunpack.c.l.b16 %v632
      %v1581 = vunpack.c.h.b16 %v632
      %v1582 = vunpack.c.l.b16 %v633
      %v1583 = vunpack.c.h.b16 %v633
      %v1584 = vunpack.c.l.b16 %v634
      %v1585 = vunpack.c.h.b16 %v634
      %v1586 = vunpack.c.l.b16 %v635
      %v1587 = vunpack.c.h.b16 %v635
      %v1588 = vunpack.c.l.b16 %v636
      %v1589 = vunpack.c.h.b16 %v636
      %v1590 = vunpack.c.l.b16 %v637
      %v1591 = vunpack.c.h.b16 %v637
      %v1592 = vunpack.c.l.b16 %v638
      %v1593 = vunpack.c.h.b16 %v638
      %v1594 = vunpack.c.l.b16 %v639
      %v1595 = vunpack.c.h.b16 %v639
      %v1596 = vunpack.c.l.b16 %v640
      %v1597 = vunpack.c.h.b16 %v640
      %v1598 = vunpack.c.l.b16 %v641
      %v1599 = vunpack.c.h.b16 %v641
      %v1600 = vunpack.c.l.b16 %v642
      %v1601 = vunpack.c.h.b16 %v642
      %v1602 = vunpack.c.l.b16 %v643
      %v1603 = vunpack.c.h.b16 %v643
      %v1604 = vpack.c.b16 %v968, %v964
      %v1605 = vpack.c.b16 %v969, %v965
      %v1606 = vpack.c.b16 %v970, %v966
      %v1607 = vpack.c.b16 %v971, %v967
      %v1608 = vpack.c.b16 %v976, %v972
      %v1609 = vpack.c.b16 %v977, %v973
      %v1610 = vpack.c.b16 %v978, %v974
      %v1611 = vpack.c.b16 %v979, %v975
      %v1612 = vpack.c.b16 %v984, %v980
      %v1613 = vpack.c.b16 %v985, %v981
      %v1614 = vpack.c.b16 %v986, %v982
      %v1615 = vpack.c.b16 %v987, %v983
      %v1616 = vpack.c.b16 %v992, %v988
      %v1617 = vpack.c.b16 %v993, %v989
      %v1618 = vpack.c.b16 %v994, %v990
      %v1619 = vpack.c.b16 %v995, %v991
      %v1620 = vpack.c.b16 %v1000, %v996
      %v1621 = vpack.c.b16 %v1001, %v997
      %v1622 = vpack.c.b16 %v1002, %v998
      %v1623 = vpack.c.b16 %v1003, %v999
      %v1624 = vpack.c.b16 %v1008, %v1004
      %v1625 = vpack.c.b16 %v1009, %v1005
      %v1626 = vpack.c.b16 %v1010, %v1006
      %v1627 = vpack.c.b16 %v1011, %v1007
      %v1628 = vpack.c.b16 %v1016, %v1012
      %v1629 = vpack.c.b16 %v1017, %v1013
      %v1630 = vpack.c.b16 %v1018, %v1014
      %v1631 = vpack.c.b16 %v1019, %v1015
      %v1632 = vpack.c.b16 %v1024, %v1020
      %v1633 = vpack.c.b16 %v1025, %v1021
      %v1634 = vpack.c.b16 %v1026, %v1022
      %v1635 = vpack.c.b16 %v1027, %v1023
      %v1636 = vpack.c.b16 %v1032, %v1028
      %v1637 = vpack.c.b16 %v1033, %v1029
      %v1638 = vpack.c.b16 %v1034, %v1030
      %v1639 = vpack.c.b16 %v1035, %v1031
      %v1640 = vpack.c.b16 %v1040, %v1036
      %v1641 = vpack.c.b16 %v1041, %v1037
      %v1642 = vpack.c.b16 %v1042, %v1038
      %v1643 = vpack.c.b16 %v1043, %v1039
      %v1644 = vpack.c.b16 %v1048, %v1044
      %v1645 = vpack.c.b16 %v1049, %v1045
      %v1646 = vpack.c.b16 %v1050, %v1046
      %v1647 = vpack.c.b16 %v1051, %v1047
      %v1648 = vpack.c.b16 %v1056, %v1052
      %v1649 = vpack.c.b16 %v1057, %v1053
      %v1650 = vpack.c.b16 %v1058, %v1054
      %v1651 = vpack.c.b16 %v1059, %v1055
      %v1652 = vpack.c.b16 %v1064, %v1060
      %v1653 = vpack.c.b16 %v1065, %v1061
      %v1654 = vpack.c.b16 %v1066, %v1062
      %v1655 = vpack.c.b16 %v1067, %v1063
      %v1656 = vpack.c.b16 %v1072, %v1068
      %v1657 = vpack.c.b16 %v1073, %v1069
      %v1658 = vpack.c.b16 %v1074, %v1070
      %v1659 = vpack.c.b16 %v1075, %v1071
      %v1660 = vpack.c.b16 %v1080, %v1076
      %v1661 = vpack.c.b16 %v1081, %v1077
      %v1662 = vpack.c.b16 %v1082, %v1078
      %v1663 = vpack.c.b16 %v1083, %v1079
      %v1664 = vpack.c.b16 %v1088, %v1084
      %v1665 = vpack.c.b16 %v1089, %v1085
      %v1666 = vpack.c.b16 %v1090, %v1086
      %v1667 = vpack.c.b16 %v1091, %v1087
      %v1668 = vpack.c.b16 %v1096, %v1092
      %v1669 = vpack.c.b16 %v1097, %v1093
      %v1670 = vpack.c.b16 %v1098, %v1094
      %v1671 = vpack.c.b16 %v1099, %v1095
      %v1672 = vpack.c.b16 %v1104, %v1100
      %v1673 = vpack.c.b16 %v1105, %v1101
      %v1674 = vpack.c.b16 %v1106, %v1102
      %v1675 = vpack.c.b16 %v1107, %v1103
      %v1676 = vpack.c.b16 %v1112, %v1108
      %v1677 = vpack.c.b16 %v1113, %v1109
      %v1678 = vpack.c.b16 %v1114, %v1110
      %v1679 = vpack.c.b16 %v1115, %v1111
      %v1680 = vpack.c.b16 %v1120, %v1116
      %v1681 = vpack.c.b16 %v1121, %v1117
      %v1682 = vpack.c.b16 %v1122, %v1118
      %v1683 = vpack.c.b16 %v1123, %v1119
      %v1684 = vpack.c.b16 %v1128, %v1124
      %v1685 = vpack.c.b16 %v1129, %v1125
      %v1686 = vpack.c.b16 %v1130, %v1126
      %v1687 = vpack.c.b16 %v1131, %v1127
      %v1688 = vpack.c.b16 %v1136, %v1132
      %v1689 = vpack.c.b16 %v1137, %v1133
      %v1690 = vpack.c.b16 %v1138, %v1134
      %v1691 = vpack.c.b16 %v1139, %v1135
      %v1692 = vpack.c.b16 %v1144, %v1140
      %v1693 = vpack.c.b16 %v1145, %v1141
      %v1694 = vpack.c.b16 %v1146, %v1142
      %v1695 = vpack.c.b16 %v1147, %v1143
      %v1696 = vpack.c.b16 %v1152, %v1148
      %v1697 = vpack.c.b16 %v1153, %v1149
      %v1698 = vpack.c.b16 %v1154, %v1150
      %v1699 = vpack.c.b16 %v1155, %v1151
      %v1700 = vpack.c.b16 %v1160, %v1156
      %v1701 = vpack.c.b16 %v1161, %v1157
      %v1702 = vpack.c.b16 %v1162, %v1158
      %v1703 = vpack.c.b16 %v1163, %v1159
      %v1704 = vpack.c.b16 %v1168, %v1164
      %v1705 = vpack.c.b16 %v1169, %v1165
      %v1706 = vpack.c.b16 %v1170, %v1166
      %v1707 = vpack.c.b16 %v1171, %v1167
      %v1708 = vpack.c.b16 %v1176, %v1172
      %v1709 = vpack.c.b16 %v1177, %v1173
      %v1710 = vpack.c.b16 %v1178, %v1174
      %v1711 = vpack.c.b16 %v1179, %v1175
      %v1712 = vpack.c.b16 %v1184, %v1180
      %v1713 = vpack.c.b16 %v1185, %v1181
      %v1714 = vpack.c.b16 %v1186, %v1182
      %v1715 = vpack.c.b16 %v1187, %v1183
      %v1716 = vpack.c.b16 %v1192, %v1188
      %v1717 = vpack.c.b16 %v1193, %v1189
      %v1718 = vpack.c.b16 %v1194, %v1190
      %v1719 = vpack.c.b16 %v1195, %v1191
      %v1720 = vpack.c.b16 %v1200, %v1196
      %v1721 = vpack.c.b16 %v1201, %v1197
      %v1722 = vpack.c.b16 %v1202, %v1198
      %v1723 = vpack.c.b16 %v1203, %v1199
      %v1724 = vpack.c.b16 %v1208, %v1204
      %v1725 = vpack.c.b16 %v1209, %v1205
      %v1726 = vpack.c.b16 %v1210, %v1206
      %v1727 = vpack.c.b16 %v1211, %v1207
      %v1728 = vpack.c.b16 %v1216, %v1212
      %v1729 = vpack.c.b16 %v1217, %v1213
      %v1730 = vpack.c.b16 %v1218, %v1214
      %v1731 = vpack.c.b16 %v1219, %v1215
      %v1732 = vpack.c.b16 %v1224, %v1220
      %v1733 = vpack.c.b16 %v1225, %v1221
      %v1734 = vpack.c.b16 %v1226, %v1222
      %v1735 = vpack.c.b16 %v1227, %v1223
      %v1736 = vpack.c.b16 %v1232, %v1228
      %v1737 = vpack.c.b16 %v1233, %v1229
      %v1738 = vpack.c.b16 %v1234, %v1230
      %v1739 = vpack.c.b16 %v1235, %v1231
      %v1740 = vpack.c.b16 %v1240, %v1236
      %v1741 = vpack.c.b16 %v1241, %v1237
      %v1742 = vpack.c.b16 %v1242, %v1238
      %v1743 = vpack.c.b16 %v1243, %v1239
      %v1744 = vpack.c.b16 %v1248, %v1244
      %v1745 = vpack.c.b16 %v1249, %v1245
      %v1746 = vpack.c.b16 %v1250, %v1246
      %v1747 = vpack.c.b16 %v1251, %v1247
      %v1748 = vpack.c.b16 %v1256, %v1252
      %v1749 = vpack.c.b16 %v1257, %v1253
      %v1750 = vpack.c.b16 %v1258, %v1254
      %v1751 = vpack.c.b16 %v1259, %v1255
      %v1752 = vpack.c.b16 %v1264, %v1260
      %v1753 = vpack.c.b16 %v1265, %v1261
      %v1754 = vpack.c.b16 %v1266, %v1262
      %v1755 = vpack.c.b16 %v1267, %v1263
      %v1756 = vpack.c.b16 %v1272, %v1268
      %v1757 = vpack.c.b16 %v1273, %v1269
      %v1758 = vpack.c.b16 %v1274, %v1270
      %v1759 = vpack.c.b16 %v1275, %v1271
      %v1760 = vpack.c.b16 %v1280, %v1276
      %v1761 = vpack.c.b16 %v1281, %v1277
      %v1762 = vpack.c.b16 %v1282, %v1278
      %v1763 = vpack.c.b16 %v1283, %v1279
      %v1764 = vpack.c.b16 %v1288, %v1284
      %v1765 = vpack.c.b16 %v1289, %v1285
      %v1766 = vpack.c.b16 %v1290, %v1286
      %v1767 = vpack.c.b16 %v1291, %v1287
      %v1768 = vpack.c.b16 %v1296, %v1292
      %v1769 = vpack.c.b16 %v1297, %v1293
      %v1770 = vpack.c.b16 %v1298, %v1294
      %v1771 = vpack.c.b16 %v1299, %v1295
      %v1772 = vpack.c.b16 %v1304, %v1300
      %v1773 = vpack.c.b16 %v1305, %v1301
      %v1774 = vpack.c.b16 %v1306, %v1302
      %v1775 = vpack.c.b16 %v1307, %v1303
      %v1776 = vpack.c.b16 %v1312, %v1308
      %v1777 = vpack.c.b16 %v1313, %v1309
      %v1778 = vpack.c.b16 %v1314, %v1310
      %v1779 = vpack.c.b16 %v1315, %v1311
      %v1780 = vpack.c.b16 %v1320, %v1316
      %v1781 = vpack.c.b16 %v1321, %v1317
      %v1782 = vpack.c.b16 %v1322, %v1318
      %v1783 = vpack.c.b16 %v1323, %v1319
      %v1784 = vpack.c.b16 %v1328, %v1324
      %v1785 = vpack.c.b16 %v1329, %v1325
      %v1786 = vpack.c.b16 %v1330, %v1326
      %v1787 = vpack.c.b16 %v1331, %v1327
      %v1788 = vpack.c.b16 %v1336, %v1332
      %v1789 = vpack.c.b16 %v1337, %v1333
      %v1790 = vpack.c.b16 %v1338, %v1334
      %v1791 = vpack.c.b16 %v1339, %v1335
      %v1792 = vpack.c.b16 %v1344, %v1340
      %v1793 = vpack.c.b16 %v1345, %v1341
      %v1794 = vpack.c.b16 %v1346, %v1342
      %v1795 = vpack.c.b16 %v1347, %v1343
      %v1796 = vpack.c.b16 %v1352, %v1348
      %v1797 = vpack.c.b16 %v1353, %v1349
      %v1798 = vpack.c.b16 %v1354, %v1350
      %v1799 = vpack.c.b16 %v1355, %v1351
      %v1800 = vpack.c.b16 %v1360, %v1356
      %v1801 = vpack.c.b16 %v1361, %v1357
      %v1802 = vpack.c.b16 %v1362, %v1358
      %v1803 = vpack.c.b16 %v1363, %v1359
      %v1804 = vpack.c.b16 %v1368, %v1364
      %v1805 = vpack.c.b16 %v1369, %v1365
      %v1806 = vpack.c.b16 %v1370, %v1366
      %v1807 = vpack.c.b16 %v1371, %v1367
      %v1808 = vpack.c.b16 %v1376, %v1372
      %v1809 = vpack.c.b16 %v1377, %v1373
      %v1810 = vpack.c.b16 %v1378, %v1374
      %v1811 = vpack.c.b16 %v1379, %v1375
      %v1812 = vpack.c.b16 %v1384, %v1380
      %v1813 = vpack.c.b16 %v1385, %v1381
      %v1814 = vpack.c.b16 %v1386, %v1382
      %v1815 = vpack.c.b16 %v1387, %v1383
      %v1816 = vpack.c.b16 %v1392, %v1388
      %v1817 = vpack.c.b16 %v1393, %v1389
      %v1818 = vpack.c.b16 %v1394, %v1390
      %v1819 = vpack.c.b16 %v1395, %v1391
      %v1820 = vpack.c.b16 %v1400, %v1396
      %v1821 = vpack.c.b16 %v1401, %v1397
      %v1822 = vpack.c.b16 %v1402, %v1398
      %v1823 = vpack.c.b16 %v1403, %v1399
      %v1824 = vpack.c.b16 %v1408, %v1404
      %v1825 = vpack.c.b16 %v1409, %v1405
      %v1826 = vpack.c.b16 %v1410, %v1406
      %v1827 = vpack.c.b16 %v1411, %v1407
      %v1828 = vpack.c.b16 %v1416, %v1412
      %v1829 = vpack.c.b16 %v1417, %v1413
      %v1830 = vpack.c.b16 %v1418, %v1414
      %v1831 = vpack.c.b16 %v1419, %v1415
      %v1832 = vpack.c.b16 %v1424, %v1420
      %v1833 = vpack.c.b16 %v1425, %v1421
      %v1834 = vpack.c.b16 %v1426, %v1422
      %v1835 = vpack.c.b16 %v1427, %v1423
      %v1836 = vpack.c.b16 %v1432, %v1428
      %v1837 = vpack.c.b16 %v1433, %v1429
      %v1838 = vpack.c.b16 %v1434, %v1430
      %v1839 = vpack.c.b16 %v1435, %v1431
      %v1840 = vpack.c.b16 %v1440, %v1436
      %v1841 = vpack.c.b16 %v1441, %v1437
      %v1842 = vpack.c.b16 %v1442, %v1438
      %v1843 = vpack.c.b16 %v1443, %v1439
      %v1844 = vpack.c.b16 %v1448, %v1444
      %v1845 = vpack.c.b16 %v1449, %v1445
      %v1846 = vpack.c.b16 %v1450, %v1446
      %v1847 = vpack.c.b16 %v1451, %v1447
      %v1848 = vpack.c.b16 %v1456, %v1452
      %v1849 = vpack.c.b16 %v1457, %v1453
      %v1850 = vpack.c.b16 %v1458, %v1454
      %v1851 = vpack.c.b16 %v1459, %v1455
      %v1852 = vpack.c.b16 %v1464, %v1460
      %v1853 = vpack.c.b16 %v1465, %v1461
      %v1854 = vpack.c.b16 %v1466, %v1462
      %v1855 = vpack.c.b16 %v1467, %v1463
      %v1856 = vpack.c.b16 %v1472, %v1468
      %v1857 = vpack.c.b16 %v1473, %v1469
      %v1858 = vpack.c.b16 %v1474, %v1470
      %v1859 = vpack.c.b16 %v1475, %v1471
      %v1860 = vpack.c.b16 %v1480, %v1476
      %v1861 = vpack.c.b16 %v1481, %v1477
      %v1862 = vpack.c.b16 %v1482, %v1478
      %v1863 = vpack.c.b16 %v1483, %v1479
      %v1864 = vpack.c.b16 %v1488, %v1484
      %v1865 = vpack.c.b16 %v1489, %v1485
      %v1866 = vpack.c.b16 %v1490, %v1486
      %v1867 = vpack.c.b16 %v1491, %v1487
      %v1868 = vpack.c.b16 %v1496, %v1492
      %v1869 = vpack.c.b16 %v1497, %v1493
      %v1870 = vpack.c.b16 %v1498, %v1494
      %v1871 = vpack.c.b16 %v1499, %v1495
      %v1872 = vpack.c.b16 %v1504, %v1500
      %v1873 = vpack.c.b16 %v1505, %v1501
      %v1874 = vpack.c.b16 %v1506, %v1502
      %v1875 = vpack.c.b16 %v1507, %v1503
      %v1876 = vpack.c.b16 %v1512, %v1508
      %v1877 = vpack.c.b16 %v1513, %v1509
      %v1878 = vpack.c.b16 %v1514, %v1510
      %v1879 = vpack.c.b16 %v1515, %v1511
      %v1880 = vpack.c.b16 %v1520, %v1516
      %v1881 = vpack.c.b16 %v1521, %v1517
      %v1882 = vpack.c.b16 %v1522, %v1518
      %v1883 = vpack.c.b16 %v1523, %v1519
      %v1884 = vpack.c.b16 %v1528, %v1524
      %v1885 = vpack.c.b16 %v1529, %v1525
      %v1886 = vpack.c.b16 %v1530, %v1526
      %v1887 = vpack.c.b16 %v1531, %v1527
      %v1888 = vpack.c.b16 %v1536, %v1532
      %v1889 = vpack.c.b16 %v1537, %v1533
      %v1890 = vpack.c.b16 %v1538, %v1534
      %v1891 = vpack.c.b16 %v1539, %v1535
      %v1892 = vpack.c.b16 %v1544, %v1540
      %v1893 = vpack.c.b16 %v1545, %v1541
      %v1894 = vpack.c.b16 %v1546, %v1542
      %v1895 = vpack.c.b16 %v1547, %v1543
      %v1896 = vpack.c.b16 %v1552, %v1548
      %v1897 = vpack.c.b16 %v1553, %v1549
      %v1898 = vpack.c.b16 %v1554, %v1550
      %v1899 = vpack.c.b16 %v1555, %v1551
      %v1900 = vpack.c.b16 %v1560, %v1556
      %v1901 = vpack.c.b16 %v1561, %v1557
      %v1902 = vpack.c.b16 %v1562, %v1558
      %v1903 = vpack.c.b16 %v1563, %v1559
      %v1904 = vpack.c.b16 %v1568, %v1564
      %v1905 = vpack.c.b16 %v1569, %v1565
      %v1906 = vpack.c.b16 %v1570, %v1566
      %v1907 = vpack.c.b16 %v1571, %v1567
      %v1908 = vpack.c.b16 %v1576, %v1572
      %v1909 = vpack.c.b16 %v1577, %v1573
      %v1910 = vpack.c.b16 %v1578, %v1574
      %v1911 = vpack.c.b16 %v1579, %v1575
      %v1912 = vpack.c.b16 %v1584, %v1580
      %v1913 = vpack.c.b16 %v1585, %v1581
      %v1914 = vpack.c.b16 %v1586, %v1582
      %v1915 = vpack.c.b16 %v1587, %v1583
      %v1916 = vpack.c.b16 %v1592, %v1588
      %v1917 = vpack.c.b16 %v1593, %v1589
      %v1918 = vpack.c.b16 %v1594, %v1590
      %v1919 = vpack.c.b16 %v1595, %v1591
      %v1920 = vpack.c.b16 %v1600, %v1596
      %v1921 = vpack.c.b16 %v1601, %v1597
      %v1922 = vpack.c.b16 %v1602, %v1598
      %v1923 = vpack.c.b16 %v1603, %v1599
      %2244 = vmatprep.subr.bf16.mxu0 %v1605
      %2245 = vmatpush1.bf16.msra.mxu0 %v1604
      %2246 = vmatprep.subr.bf16.mxu0 %v1609
      %2247 = vmatpush1.bf16.msra.mxu0 %v1608
      %2248 = vmatprep.subr.bf16.mxu0 %v1613
      %2249 = vmatpush1.bf16.msra.mxu0 %v1612
      %2250 = vmatprep.subr.bf16.mxu0 %v1617
      %2251 = vmatpush1.bf16.msra.mxu0 %v1616
      %2252 = vmatprep.subr.bf16.mxu0 %v1621
      %2253 = vmatpush1.bf16.msra.mxu0 %v1620
      %2254 = vmatprep.subr.bf16.mxu0 %v1625
      %2255 = vmatpush1.bf16.msra.mxu0 %v1624
      %2256 = vmatprep.subr.bf16.mxu0 %v1629
      %2257 = vmatpush1.bf16.msra.mxu0 %v1628
      %2258 = vmatprep.subr.bf16.mxu0 %v1633
      %2259 = vmatpush1.bf16.msra.mxu0 %v1632
      %2260 = vmatprep.subr.bf16.mxu0 %v1637
      %2261 = vmatpush1.bf16.msra.mxu0 %v1636
      %2262 = vmatprep.subr.bf16.mxu0 %v1641
      %2263 = vmatpush1.bf16.msra.mxu0 %v1640
      %2264 = vmatprep.subr.bf16.mxu0 %v1645
      %2265 = vmatpush1.bf16.msra.mxu0 %v1644
      %2266 = vmatprep.subr.bf16.mxu0 %v1649
      %2267 = vmatpush1.bf16.msra.mxu0 %v1648
      %2268 = vmatprep.subr.bf16.mxu0 %v1653
      %2269 = vmatpush1.bf16.msra.mxu0 %v1652
      %2270 = vmatprep.subr.bf16.mxu0 %v1657
      %2271 = vmatpush1.bf16.msra.mxu0 %v1656
      %2272 = vmatprep.subr.bf16.mxu0 %v1661
      %2273 = vmatpush1.bf16.msra.mxu0 %v1660
      %2274 = vmatprep.subr.bf16.mxu0 %v1665
      %2275 = vmatpush1.bf16.msra.mxu0 %v1664
      %2276 = vmatprep.mubr.bf16.mxu0 %v315
      %2277 = vmatmul.mubr.bf16.gmra.mrb[0].mxu0 %v314
      %v2278 = vpop.f32.mrb[0].mxu0
      %v2279 = vadd.f32 0.0, %v2278
      %v2280 = vpop.f32.mrb[0].mxu0
      %v2281 = vadd.f32 0.0, %v2280
      %v2282 = vpop.f32.mrb[0].mxu0
      %v2283 = vpop.f32.mrb[0].mxu0
      %2284 = vdwg.mxu0
      %2285 = vmatprep.subr.bf16.mxu0 %v1669
      %2286 = vmatpush1.bf16.msra.mxu0 %v1668
      %2287 = vmatprep.subr.bf16.mxu0 %v1673
      %2288 = vmatpush1.bf16.msra.mxu0 %v1672
      %2289 = vmatprep.subr.bf16.mxu0 %v1677
      %2290 = vmatpush1.bf16.msra.mxu0 %v1676
      %2291 = vmatprep.subr.bf16.mxu0 %v1681
      %2292 = vmatpush1.bf16.msra.mxu0 %v1680
      %2293 = vmatprep.subr.bf16.mxu0 %v1685
      %2294 = vmatpush1.bf16.msra.mxu0 %v1684
      %2295 = vmatprep.subr.bf16.mxu0 %v1689
      %2296 = vmatpush1.bf16.msra.mxu0 %v1688
      %2297 = vmatprep.subr.bf16.mxu0 %v1693
      %2298 = vmatpush1.bf16.msra.mxu0 %v1692
      %2299 = vmatprep.subr.bf16.mxu0 %v1697
      %2300 = vmatpush1.bf16.msra.mxu0 %v1696
      %2301 = vmatprep.subr.bf16.mxu0 %v1701
      %2302 = vmatpush1.bf16.msra.mxu0 %v1700
      %2303 = vmatprep.subr.bf16.mxu0 %v1705
      %2304 = vmatpush1.bf16.msra.mxu0 %v1704
      %2305 = vmatprep.subr.bf16.mxu0 %v1709
      %2306 = vmatpush1.bf16.msra.mxu0 %v1708
      %2307 = vmatprep.subr.bf16.mxu0 %v1713
      %2308 = vmatpush1.bf16.msra.mxu0 %v1712
      %2309 = vmatprep.subr.bf16.mxu0 %v1717
      %2310 = vmatpush1.bf16.msra.mxu0 %v1716
      %2311 = vmatprep.subr.bf16.mxu0 %v1721
      %2312 = vmatpush1.bf16.msra.mxu0 %v1720
      %2313 = vmatprep.subr.bf16.mxu0 %v1725
      %2314 = vmatpush1.bf16.msra.mxu0 %v1724
      %2315 = vmatprep.subr.bf16.mxu0 %v1729
      %2316 = vmatpush1.bf16.msra.mxu0 %v1728
      %2317 = vmatprep.mubr.bf16.mxu0 %v317
      %2318 = vmatmul.mubr.bf16.gmra.mrb[0].mxu0 %v316
      %v2319 = vpop.f32.mrb[0].mxu0
      %v2320 = vadd.f32 %v2279, %v2319
      %v2321 = vpop.f32.mrb[0].mxu0
      %v2322 = vadd.f32 %v2281, %v2321
      %v2323 = vpop.f32.mrb[0].mxu0
      %v2324 = vpop.f32.mrb[0].mxu0
      %2325 = vdwg.mxu0
      %2326 = vmatprep.subr.bf16.mxu0 %v1733
      %2327 = vmatpush1.bf16.msra.mxu0 %v1732
      %2328 = vmatprep.subr.bf16.mxu0 %v1737
      %2329 = vmatpush1.bf16.msra.mxu0 %v1736
      %2330 = vmatprep.subr.bf16.mxu0 %v1741
      %2331 = vmatpush1.bf16.msra.mxu0 %v1740
      %2332 = vmatprep.subr.bf16.mxu0 %v1745
      %2333 = vmatpush1.bf16.msra.mxu0 %v1744
      %2334 = vmatprep.subr.bf16.mxu0 %v1749
      %2335 = vmatpush1.bf16.msra.mxu0 %v1748
      %2336 = vmatprep.subr.bf16.mxu0 %v1753
      %2337 = vmatpush1.bf16.msra.mxu0 %v1752
      %2338 = vmatprep.subr.bf16.mxu0 %v1757
      %2339 = vmatpush1.bf16.msra.mxu0 %v1756
      %2340 = vmatprep.subr.bf16.mxu0 %v1761
      %2341 = vmatpush1.bf16.msra.mxu0 %v1760
      %2342 = vmatprep.subr.bf16.mxu0 %v1765
      %2343 = vmatpush1.bf16.msra.mxu0 %v1764
      %2344 = vmatprep.subr.bf16.mxu0 %v1769
      %2345 = vmatpush1.bf16.msra.mxu0 %v1768
      %2346 = vmatprep.subr.bf16.mxu0 %v1773
      %2347 = vmatpush1.bf16.msra.mxu0 %v1772
      %2348 = vmatprep.subr.bf16.mxu0 %v1777
      %2349 = vmatpush1.bf16.msra.mxu0 %v1776
      %2350 = vmatprep.subr.bf16.mxu0 %v1781
      %2351 = vmatpush1.bf16.msra.mxu0 %v1780
      %2352 = vmatprep.subr.bf16.mxu0 %v1785
      %2353 = vmatpush1.bf16.msra.mxu0 %v1784
      %2354 = vmatprep.subr.bf16.mxu0 %v1789
      %2355 = vmatpush1.bf16.msra.mxu0 %v1788
      %2356 = vmatprep.subr.bf16.mxu0 %v1793
      %2357 = vmatpush1.bf16.msra.mxu0 %v1792
      %2358 = vmatprep.mubr.bf16.mxu0 %v319
      %2359 = vmatmul.mubr.bf16.gmra.mrb[0].mxu0 %v318
      %v2360 = vpop.f32.mrb[0].mxu0
      %v2361 = vadd.f32 %v2320, %v2360
      %v2362 = vpop.f32.mrb[0].mxu0
      %v2363 = vadd.f32 %v2322, %v2362
      %v2364 = vpop.f32.mrb[0].mxu0
      %v2365 = vpop.f32.mrb[0].mxu0
      %2366 = vdwg.mxu0
      %2367 = vmatprep.subr.bf16.mxu0 %v1797
      %2368 = vmatpush1.bf16.msra.mxu0 %v1796
      %2369 = vmatprep.subr.bf16.mxu0 %v1801
      %2370 = vmatpush1.bf16.msra.mxu0 %v1800
      %2371 = vmatprep.subr.bf16.mxu0 %v1805
      %2372 = vmatpush1.bf16.msra.mxu0 %v1804
      %2373 = vmatprep.subr.bf16.mxu0 %v1809
      %2374 = vmatpush1.bf16.msra.mxu0 %v1808
      %2375 = vmatprep.subr.bf16.mxu0 %v1813
      %2376 = vmatpush1.bf16.msra.mxu0 %v1812
      %2377 = vmatprep.subr.bf16.mxu0 %v1817
      %2378 = vmatpush1.bf16.msra.mxu0 %v1816
      %2379 = vmatprep.subr.bf16.mxu0 %v1821
      %2380 = vmatpush1.bf16.msra.mxu0 %v1820
      %2381 = vmatprep.subr.bf16.mxu0 %v1825
      %2382 = vmatpush1.bf16.msra.mxu0 %v1824
      %2383 = vmatprep.subr.bf16.mxu0 %v1829
      %2384 = vmatpush1.bf16.msra.mxu0 %v1828
      %2385 = vmatprep.subr.bf16.mxu0 %v1833
      %2386 = vmatpush1.bf16.msra.mxu0 %v1832
      %2387 = vmatprep.subr.bf16.mxu0 %v1837
      %2388 = vmatpush1.bf16.msra.mxu0 %v1836
      %2389 = vmatprep.subr.bf16.mxu0 %v1841
      %2390 = vmatpush1.bf16.msra.mxu0 %v1840
      %2391 = vmatprep.subr.bf16.mxu0 %v1845
      %2392 = vmatpush1.bf16.msra.mxu0 %v1844
      %2393 = vmatprep.subr.bf16.mxu0 %v1849
      %2394 = vmatpush1.bf16.msra.mxu0 %v1848
      %2395 = vmatprep.subr.bf16.mxu0 %v1853
      %2396 = vmatpush1.bf16.msra.mxu0 %v1852
      %2397 = vmatprep.subr.bf16.mxu0 %v1857
      %2398 = vmatpush1.bf16.msra.mxu0 %v1856
      %2399 = vmatprep.mubr.bf16.mxu0 %v321
      %2400 = vmatmul.mubr.bf16.gmra.mrb[0].mxu0 %v320
      %v2401 = vpop.f32.mrb[0].mxu0
      %v2402 = vadd.f32 %v2361, %v2401
      %v2403 = vpop.f32.mrb[0].mxu0
      %v2404 = vadd.f32 %v2363, %v2403
      %v2405 = vpop.f32.mrb[0].mxu0
      %v2406 = vpop.f32.mrb[0].mxu0
      %2407 = vdwg.mxu0
      %2408 = vmatprep.subr.bf16.mxu0 %v1861
      %2409 = vmatpush1.bf16.msra.mxu0 %v1860
      %2410 = vmatprep.subr.bf16.mxu0 %v1865
      %2411 = vmatpush1.bf16.msra.mxu0 %v1864
      %2412 = vmatprep.subr.bf16.mxu0 %v1869
      %2413 = vmatpush1.bf16.msra.mxu0 %v1868
      %2414 = vmatprep.subr.bf16.mxu0 %v1873
      %2415 = vmatpush1.bf16.msra.mxu0 %v1872
      %2416 = vmatprep.subr.bf16.mxu0 %v1877
      %2417 = vmatpush1.bf16.msra.mxu0 %v1876
      %2418 = vmatprep.subr.bf16.mxu0 %v1881
      %2419 = vmatpush1.bf16.msra.mxu0 %v1880
      %2420 = vmatprep.subr.bf16.mxu0 %v1885
      %2421 = vmatpush1.bf16.msra.mxu0 %v1884
      %2422 = vmatprep.subr.bf16.mxu0 %v1889
      %2423 = vmatpush1.bf16.msra.mxu0 %v1888
      %2424 = vmatprep.subr.bf16.mxu0 %v1893
      %2425 = vmatpush1.bf16.msra.mxu0 %v1892
      %2426 = vmatprep.subr.bf16.mxu0 %v1897
      %2427 = vmatpush1.bf16.msra.mxu0 %v1896
      %2428 = vmatprep.subr.bf16.mxu0 %v1901
      %2429 = vmatpush1.bf16.msra.mxu0 %v1900
      %2430 = vmatprep.subr.bf16.mxu0 %v1905
      %2431 = vmatpush1.bf16.msra.mxu0 %v1904
      %2432 = vmatprep.subr.bf16.mxu0 %v1909
      %2433 = vmatpush1.bf16.msra.mxu0 %v1908
      %2434 = vmatprep.subr.bf16.mxu0 %v1913
      %2435 = vmatpush1.bf16.msra.mxu0 %v1912
      %2436 = vmatprep.subr.bf16.mxu0 %v1917
      %2437 = vmatpush1.bf16.msra.mxu0 %v1916
      %2438 = vmatprep.subr.bf16.mxu0 %v1921
      %2439 = vmatpush1.bf16.msra.mxu0 %v1920
      %2440 = vmatprep.mubr.bf16.mxu0 %v323
      %2441 = vmatmul.mubr.bf16.gmra.mrb[0].mxu0 %v322
      %v2442 = vpop.f32.mrb[0].mxu0
      %v2443 = vadd.f32 %v2402, %v2442
      %v2444 = vpop.f32.mrb[0].mxu0
      %v2445 = vadd.f32 %v2404, %v2444
      %v2446 = vpop.f32.mrb[0].mxu0
      %v2447 = vpop.f32.mrb[0].mxu0
      %2448 = vdwg.mxu0
      %2449 = vmatprep.subr.bf16.mxu0 %v1607
      %2450 = vmatpush1.bf16.msra.mxu0 %v1606
      %2451 = vmatprep.subr.bf16.mxu0 %v1611
      %2452 = vmatpush1.bf16.msra.mxu0 %v1610
      %2453 = vmatprep.subr.bf16.mxu0 %v1615
      %2454 = vmatpush1.bf16.msra.mxu0 %v1614
      %2455 = vmatprep.subr.bf16.mxu0 %v1619
      %2456 = vmatpush1.bf16.msra.mxu0 %v1618
      %2457 = vmatprep.subr.bf16.mxu0 %v1623
      %2458 = vmatpush1.bf16.msra.mxu0 %v1622
      %2459 = vmatprep.subr.bf16.mxu0 %v1627
      %2460 = vmatpush1.bf16.msra.mxu0 %v1626
      %2461 = vmatprep.subr.bf16.mxu0 %v1631
      %2462 = vmatpush1.bf16.msra.mxu0 %v1630
      %2463 = vmatprep.subr.bf16.mxu0 %v1635
      %2464 = vmatpush1.bf16.msra.mxu0 %v1634
      %2465 = vmatprep.subr.bf16.mxu0 %v1639
      %2466 = vmatpush1.bf16.msra.mxu0 %v1638
      %2467 = vmatprep.subr.bf16.mxu0 %v1643
      %2468 = vmatpush1.bf16.msra.mxu0 %v1642
      %2469 = vmatprep.subr.bf16.mxu0 %v1647
      %2470 = vmatpush1.bf16.msra.mxu0 %v1646
      %2471 = vmatprep.subr.bf16.mxu0 %v1651
      %2472 = vmatpush1.bf16.msra.mxu0 %v1650
      %2473 = vmatprep.subr.bf16.mxu0 %v1655
      %2474 = vmatpush1.bf16.msra.mxu0 %v1654
      %2475 = vmatprep.subr.bf16.mxu0 %v1659
      %2476 = vmatpush1.bf16.msra.mxu0 %v1658
      %2477 = vmatprep.subr.bf16.mxu0 %v1663
      %2478 = vmatpush1.bf16.msra.mxu0 %v1662
      %2479 = vmatprep.subr.bf16.mxu0 %v1667
      %2480 = vmatpush1.bf16.msra.mxu0 %v1666
      %2481 = vmatprep.mubr.bf16.mxu0 %v315
      %2482 = vmatmul.mubr.bf16.gmra.mrb[0].mxu0 %v314
      %v2483 = vpop.f32.mrb[0].mxu0
      %v2484 = vadd.f32 0.0, %v2483
      %v2485 = vpop.f32.mrb[0].mxu0
      %v2486 = vadd.f32 0.0, %v2485
      %v2487 = vpop.f32.mrb[0].mxu0
      %v2488 = vpop.f32.mrb[0].mxu0
      %2489 = vdwg.mxu0
      %2490 = vmatprep.subr.bf16.mxu0 %v1671
      %2491 = vmatpush1.bf16.msra.mxu0 %v1670
      %2492 = vmatprep.subr.bf16.mxu0 %v1675
      %2493 = vmatpush1.bf16.msra.mxu0 %v1674
      %2494 = vmatprep.subr.bf16.mxu0 %v1679
      %2495 = vmatpush1.bf16.msra.mxu0 %v1678
      %2496 = vmatprep.subr.bf16.mxu0 %v1683
      %2497 = vmatpush1.bf16.msra.mxu0 %v1682
      %2498 = vmatprep.subr.bf16.mxu0 %v1687
      %2499 = vmatpush1.bf16.msra.mxu0 %v1686
      %2500 = vmatprep.subr.bf16.mxu0 %v1691
      %2501 = vmatpush1.bf16.msra.mxu0 %v1690
      %2502 = vmatprep.subr.bf16.mxu0 %v1695
      %2503 = vmatpush1.bf16.msra.mxu0 %v1694
      %2504 = vmatprep.subr.bf16.mxu0 %v1699
      %2505 = vmatpush1.bf16.msra.mxu0 %v1698
      %2506 = vmatprep.subr.bf16.mxu0 %v1703
      %2507 = vmatpush1.bf16.msra.mxu0 %v1702
      %2508 = vmatprep.subr.bf16.mxu0 %v1707
      %2509 = vmatpush1.bf16.msra.mxu0 %v1706
      %2510 = vmatprep.subr.bf16.mxu0 %v1711
      %2511 = vmatpush1.bf16.msra.mxu0 %v1710
      %2512 = vmatprep.subr.bf16.mxu0 %v1715
      %2513 = vmatpush1.bf16.msra.mxu0 %v1714
      %2514 = vmatprep.subr.bf16.mxu0 %v1719
      %2515 = vmatpush1.bf16.msra.mxu0 %v1718
      %2516 = vmatprep.subr.bf16.mxu0 %v1723
      %2517 = vmatpush1.bf16.msra.mxu0 %v1722
      %2518 = vmatprep.subr.bf16.mxu0 %v1727
      %2519 = vmatpush1.bf16.msra.mxu0 %v1726
      %2520 = vmatprep.subr.bf16.mxu0 %v1731
      %2521 = vmatpush1.bf16.msra.mxu0 %v1730
      %2522 = vmatprep.mubr.bf16.mxu0 %v317
      %2523 = vmatmul.mubr.bf16.gmra.mrb[0].mxu0 %v316
      %v2524 = vpop.f32.mrb[0].mxu0
      %v2525 = vadd.f32 %v2484, %v2524
      %v2526 = vpop.f32.mrb[0].mxu0
      %v2527 = vadd.f32 %v2486, %v2526
      %v2528 = vpop.f32.mrb[0].mxu0
      %v2529 = vpop.f32.mrb[0].mxu0
      %2530 = vdwg.mxu0
      %2531 = vmatprep.subr.bf16.mxu0 %v1735
      %2532 = vmatpush1.bf16.msra.mxu0 %v1734
      %2533 = vmatprep.subr.bf16.mxu0 %v1739
      %2534 = vmatpush1.bf16.msra.mxu0 %v1738
      %2535 = vmatprep.subr.bf16.mxu0 %v1743
      %2536 = vmatpush1.bf16.msra.mxu0 %v1742
      %2537 = vmatprep.subr.bf16.mxu0 %v1747
      %2538 = vmatpush1.bf16.msra.mxu0 %v1746
      %2539 = vmatprep.subr.bf16.mxu0 %v1751
      %2540 = vmatpush1.bf16.msra.mxu0 %v1750
      %2541 = vmatprep.subr.bf16.mxu0 %v1755
      %2542 = vmatpush1.bf16.msra.mxu0 %v1754
      %2543 = vmatprep.subr.bf16.mxu0 %v1759
      %2544 = vmatpush1.bf16.msra.mxu0 %v1758
      %2545 = vmatprep.subr.bf16.mxu0 %v1763
      %2546 = vmatpush1.bf16.msra.mxu0 %v1762
      %2547 = vmatprep.subr.bf16.mxu0 %v1767
      %2548 = vmatpush1.bf16.msra.mxu0 %v1766
      %2549 = vmatprep.subr.bf16.mxu0 %v1771
      %2550 = vmatpush1.bf16.msra.mxu0 %v1770
      %2551 = vmatprep.subr.bf16.mxu0 %v1775
      %2552 = vmatpush1.bf16.msra.mxu0 %v1774
      %2553 = vmatprep.subr.bf16.mxu0 %v1779
      %2554 = vmatpush1.bf16.msra.mxu0 %v1778
      %2555 = vmatprep.subr.bf16.mxu0 %v1783
      %2556 = vmatpush1.bf16.msra.mxu0 %v1782
      %2557 = vmatprep.subr.bf16.mxu0 %v1787
      %2558 = vmatpush1.bf16.msra.mxu0 %v1786
      %2559 = vmatprep.subr.bf16.mxu0 %v1791
      %2560 = vmatpush1.bf16.msra.mxu0 %v1790
      %2561 = vmatprep.subr.bf16.mxu0 %v1795
      %2562 = vmatpush1.bf16.msra.mxu0 %v1794
      %2563 = vmatprep.mubr.bf16.mxu0 %v319
      %2564 = vmatmul.mubr.bf16.gmra.mrb[0].mxu0 %v318
      %v2565 = vpop.f32.mrb[0].mxu0
      %v2566 = vadd.f32 %v2525, %v2565
      %v2567 = vpop.f32.mrb[0].mxu0
      %v2568 = vadd.f32 %v2527, %v2567
      %v2569 = vpop.f32.mrb[0].mxu0
      %v2570 = vpop.f32.mrb[0].mxu0
      %2571 = vdwg.mxu0
      %2572 = vmatprep.subr.bf16.mxu0 %v1799
      %2573 = vmatpush1.bf16.msra.mxu0 %v1798
      %2574 = vmatprep.subr.bf16.mxu0 %v1803
      %2575 = vmatpush1.bf16.msra.mxu0 %v1802
      %2576 = vmatprep.subr.bf16.mxu0 %v1807
      %2577 = vmatpush1.bf16.msra.mxu0 %v1806
      %2578 = vmatprep.subr.bf16.mxu0 %v1811
      %2579 = vmatpush1.bf16.msra.mxu0 %v1810
      %2580 = vmatprep.subr.bf16.mxu0 %v1815
      %2581 = vmatpush1.bf16.msra.mxu0 %v1814
      %2582 = vmatprep.subr.bf16.mxu0 %v1819
      %2583 = vmatpush1.bf16.msra.mxu0 %v1818
      %2584 = vmatprep.subr.bf16.mxu0 %v1823
      %2585 = vmatpush1.bf16.msra.mxu0 %v1822
      %2586 = vmatprep.subr.bf16.mxu0 %v1827
      %2587 = vmatpush1.bf16.msra.mxu0 %v1826
      %2588 = vmatprep.subr.bf16.mxu0 %v1831
      %2589 = vmatpush1.bf16.msra.mxu0 %v1830
      %2590 = vmatprep.subr.bf16.mxu0 %v1835
      %2591 = vmatpush1.bf16.msra.mxu0 %v1834
      %2592 = vmatprep.subr.bf16.mxu0 %v1839
      %2593 = vmatpush1.bf16.msra.mxu0 %v1838
      %2594 = vmatprep.subr.bf16.mxu0 %v1843
      %2595 = vmatpush1.bf16.msra.mxu0 %v1842
      %2596 = vmatprep.subr.bf16.mxu0 %v1847
      %2597 = vmatpush1.bf16.msra.mxu0 %v1846
      %2598 = vmatprep.subr.bf16.mxu0 %v1851
      %2599 = vmatpush1.bf16.msra.mxu0 %v1850
      %2600 = vmatprep.subr.bf16.mxu0 %v1855
      %2601 = vmatpush1.bf16.msra.mxu0 %v1854
      %2602 = vmatprep.subr.bf16.mxu0 %v1859
      %2603 = vmatpush1.bf16.msra.mxu0 %v1858
      %2604 = vmatprep.mubr.bf16.mxu0 %v321
      %2605 = vmatmul.mubr.bf16.gmra.mrb[0].mxu0 %v320
      %v2606 = vpop.f32.mrb[0].mxu0
      %v2607 = vadd.f32 %v2566, %v2606
      %v2608 = vpop.f32.mrb[0].mxu0
      %v2609 = vadd.f32 %v2568, %v2608
      %v2610 = vpop.f32.mrb[0].mxu0
      %v2611 = vpop.f32.mrb[0].mxu0
      %2612 = vdwg.mxu0
      %2613 = vmatprep.subr.bf16.mxu0 %v1863
      %2614 = vmatpush1.bf16.msra.mxu0 %v1862
      %2615 = vmatprep.subr.bf16.mxu0 %v1867
      %2616 = vmatpush1.bf16.msra.mxu0 %v1866
      %2617 = vmatprep.subr.bf16.mxu0 %v1871
      %2618 = vmatpush1.bf16.msra.mxu0 %v1870
      %2619 = vmatprep.subr.bf16.mxu0 %v1875
      %2620 = vmatpush1.bf16.msra.mxu0 %v1874
      %2621 = vmatprep.subr.bf16.mxu0 %v1879
      %2622 = vmatpush1.bf16.msra.mxu0 %v1878
      %2623 = vmatprep.subr.bf16.mxu0 %v1883
      %2624 = vmatpush1.bf16.msra.mxu0 %v1882
      %2625 = vmatprep.subr.bf16.mxu0 %v1887
      %2626 = vmatpush1.bf16.msra.mxu0 %v1886
      %2627 = vmatprep.subr.bf16.mxu0 %v1891
      %2628 = vmatpush1.bf16.msra.mxu0 %v1890
      %2629 = vmatprep.subr.bf16.mxu0 %v1895
      %2630 = vmatpush1.bf16.msra.mxu0 %v1894
      %2631 = vmatprep.subr.bf16.mxu0 %v1899
      %2632 = vmatpush1.bf16.msra.mxu0 %v1898
      %2633 = vmatprep.subr.bf16.mxu0 %v1903
      %2634 = vmatpush1.bf16.msra.mxu0 %v1902
      %2635 = vmatprep.subr.bf16.mxu0 %v1907
      %2636 = vmatpush1.bf16.msra.mxu0 %v1906
      %2637 = vmatprep.subr.bf16.mxu0 %v1911
      %2638 = vmatpush1.bf16.msra.mxu0 %v1910
      %2639 = vmatprep.subr.bf16.mxu0 %v1915
      %2640 = vmatpush1.bf16.msra.mxu0 %v1914
      %2641 = vmatprep.subr.bf16.mxu0 %v1919
      %2642 = vmatpush1.bf16.msra.mxu0 %v1918
      %2643 = vmatprep.subr.bf16.mxu0 %v1923
      %2644 = vmatpush1.bf16.msra.mxu0 %v1922
      %2645 = vmatprep.mubr.bf16.mxu0 %v323
      %2646 = vmatmul.mubr.bf16.gmra.mrb[0].mxu0 %v322
      %v2647 = vpop.f32.mrb[0].mxu0
      %v2648 = vadd.f32 %v2607, %v2647
      %v2649 = vpop.f32.mrb[0].mxu0
      %v2650 = vadd.f32 %v2609, %v2649
      %v2651 = vpop.f32.mrb[0].mxu0
      %v2652 = vpop.f32.mrb[0].mxu0
      %2653 = vdwg.mxu0
      %v2654 = vadd.f32 %v300, %v2443
      %v2655 = vadd.f32 %v301, %v2445
      %v2656 = vadd.f32 %v302, %v2648
      %v2657 = vadd.f32 %v303, %v2650
      %2658 = vst [vmem:[#allocation2] sm:$0xff] %v2654
      %2659 = vst [vmem:[#allocation2 + $0x8] sm:$0xff] %v2655
      %2660 = vst [vmem:[#allocation2 + $0x10] sm:$0xff] %v2656
      %2661 = vst [vmem:[#allocation2 + $0x18] sm:$0xff] %v2657
      %p2662 = scmp.eq.s32.totalorder %s18, 4
      // Predicated region
      $region53: #{qnetwork_forward.5} parent=47 // pred_check
        %p2663 = pneg %p2662
      $region54: #{qnetwork_forward.5} parent=47 // pred_check_branch
        %2665 = sbr.rel (%p2663) target = $region56
      $region55: #{qnetwork_forward.5} parent=47 // pred_region
        %v2666 = vld [vmem:[#allocation2] sm:$0xff]
        %v2667 = vld [vmem:[#allocation2 + $0x8] sm:$0xff]
        %v2668 = vld [vmem:[#allocation2 + $0x10] sm:$0xff]
        %v2669 = vld [vmem:[#allocation2 + $0x18] sm:$0xff]
        %v2670 = vld [vmem:[%s2] sm:$0xf]
        %v2672 = vlaneseq
        %v2673 = vshrl.u32 %v2672, 7
        %v2674 = vsub.s32 0, %v2673
        %v2675 = vrot.slane %v2670, %v2674
        %v2676 = vlaneseq
        %v2677 = vshrl.u32 %v2676, 7
        %v2678 = vsub.s32 1, %v2677
        %v2679 = vrot.slane %v2670, %v2678
        %v2680 = vlaneseq
        %v2681 = vshrl.u32 %v2680, 7
        %v2682 = vsub.s32 2, %v2681
        %v2683 = vrot.slane %v2670, %v2682
        %v2684 = vlaneseq
        %v2685 = vshrl.u32 %v2684, 7
        %v2686 = vsub.s32 3, %v2685
        %v2687 = vrot.slane %v2670, %v2686
        %v2692 = vadd.f32 %v2666, %v2675
        %v2693 = vadd.f32 %v2667, %v2679
        %v2694 = vadd.f32 %v2668, %v2683
        %v2695 = vadd.f32 %v2669, %v2687
        %v2696 = vmax.f32 %v2692, 0.0
        %v2697 = vmax.f32 %v2693, 0.0
        %v2698 = vmax.f32 %v2694, 0.0
        %v2699 = vmax.f32 %v2695, 0.0
        %v2700 = vpack.c.bf16 %v2696, %v2696
        %v2701 = vpack.c.bf16 %v2697, %v2697
        %v2702 = vpack.c.bf16 %v2698, %v2698
        %v2703 = vpack.c.bf16 %v2699, %v2699
        %v2704 = vld [vmem:[%s3] sm:$0xff]
        %v2705 = vld [vmem:[%s3 + $0x8] sm:$0xff]
        %v2706 = vld [vmem:[%s3 + $0x10] sm:$0xff]
        %v2707 = vld [vmem:[%s3 + $0x18] sm:$0xff]
        %v2708 = vld [vmem:[%s3 + $0x20] sm:$0xff]
        %v2709 = vld [vmem:[%s3 + $0x28] sm:$0xff]
        %v2710 = vld [vmem:[%s3 + $0x30] sm:$0xff]
        %v2711 = vld [vmem:[%s3 + $0x38] sm:$0xff]
        %v2712 = vld [vmem:[%s3 + $0x40] sm:$0xff]
        %v2713 = vld [vmem:[%s3 + $0x48] sm:$0xff]
        %v2714 = vld [vmem:[%s3 + $0x50] sm:$0xff]
        %v2715 = vld [vmem:[%s3 + $0x58] sm:$0xff]
        %v2716 = vld [vmem:[%s3 + $0x60] sm:$0xff]
        %v2717 = vld [vmem:[%s3 + $0x68] sm:$0xff]
        %v2718 = vld [vmem:[%s3 + $0x70] sm:$0xff]
        %v2719 = vld [vmem:[%s3 + $0x78] sm:$0xff]
        %v2720 = vld [vmem:[%s3 + $0x80] sm:$0xff]
        %v2721 = vld [vmem:[%s3 + $0x88] sm:$0xff]
        %v2722 = vld [vmem:[%s3 + $0x90] sm:$0xff]
        %v2723 = vld [vmem:[%s3 + $0x98] sm:$0xff]
        %v2724 = vld [vmem:[%s3 + $0xa0] sm:$0xff]
        %v2725 = vld [vmem:[%s3 + $0xa8] sm:$0xff]
        %v2726 = vld [vmem:[%s3 + $0xb0] sm:$0xff]
        %v2727 = vld [vmem:[%s3 + $0xb8] sm:$0xff]
        %v2728 = vld [vmem:[%s3 + $0xc0] sm:$0xff]
        %v2729 = vld [vmem:[%s3 + $0xc8] sm:$0xff]
        %v2730 = vld [vmem:[%s3 + $0xd0] sm:$0xff]
        %v2731 = vld [vmem:[%s3 + $0xd8] sm:$0xff]
        %v2732 = vld [vmem:[%s3 + $0xe0] sm:$0xff]
        %v2733 = vld [vmem:[%s3 + $0xe8] sm:$0xff]
        %v2734 = vld [vmem:[%s3 + $0xf0] sm:$0xff]
        %v2735 = vld [vmem:[%s3 + $0xf8] sm:$0xff]
        %v2736 = vld [vmem:[%s3 + $0x100] sm:$0xff]
        %v2737 = vld [vmem:[%s3 + $0x108] sm:$0xff]
        %v2738 = vld [vmem:[%s3 + $0x110] sm:$0xff]
        %v2739 = vld [vmem:[%s3 + $0x118] sm:$0xff]
        %v2740 = vld [vmem:[%s3 + $0x120] sm:$0xff]
        %v2741 = vld [vmem:[%s3 + $0x128] sm:$0xff]
        %v2742 = vld [vmem:[%s3 + $0x130] sm:$0xff]
        %v2743 = vld [vmem:[%s3 + $0x138] sm:$0xff]
        %v2744 = vld [vmem:[%s3 + $0x140] sm:$0xff]
        %v2745 = vld [vmem:[%s3 + $0x148] sm:$0xff]
        %v2746 = vld [vmem:[%s3 + $0x150] sm:$0xff]
        %v2747 = vld [vmem:[%s3 + $0x158] sm:$0xff]
        %v2748 = vld [vmem:[%s3 + $0x160] sm:$0xff]
        %v2749 = vld [vmem:[%s3 + $0x168] sm:$0xff]
        %v2750 = vld [vmem:[%s3 + $0x170] sm:$0xff]
        %v2751 = vld [vmem:[%s3 + $0x178] sm:$0xff]
        %v2752 = vld [vmem:[%s3 + $0x180] sm:$0xff]
        %v2753 = vld [vmem:[%s3 + $0x188] sm:$0xff]
        %v2754 = vld [vmem:[%s3 + $0x190] sm:$0xff]
        %v2755 = vld [vmem:[%s3 + $0x198] sm:$0xff]
        %v2756 = vld [vmem:[%s3 + $0x1a0] sm:$0xff]
        %v2757 = vld [vmem:[%s3 + $0x1a8] sm:$0xff]
        %v2758 = vld [vmem:[%s3 + $0x1b0] sm:$0xff]
        %v2759 = vld [vmem:[%s3 + $0x1b8] sm:$0xff]
        %v2760 = vld [vmem:[%s3 + $0x1c0] sm:$0xff]
        %v2761 = vld [vmem:[%s3 + $0x1c8] sm:$0xff]
        %v2762 = vld [vmem:[%s3 + $0x1d0] sm:$0xff]
        %v2763 = vld [vmem:[%s3 + $0x1d8] sm:$0xff]
        %v2764 = vld [vmem:[%s3 + $0x1e0] sm:$0xff]
        %v2765 = vld [vmem:[%s3 + $0x1e8] sm:$0xff]
        %v2766 = vld [vmem:[%s3 + $0x1f0] sm:$0xff]
        %v2767 = vld [vmem:[%s3 + $0x1f8] sm:$0xff]
        %v2768 = vld [vmem:[%s4] sm:$0x3]
        %v2770 = vlaneseq
        %v2771 = vshrl.u32 %v2770, 7
        %v2772 = vsub.s32 0, %v2771
        %v2773 = vrot.slane %v2768, %v2772
        %v2774 = vlaneseq
        %v2775 = vshrl.u32 %v2774, 7
        %v2776 = vsub.s32 1, %v2775
        %v2777 = vrot.slane %v2768, %v2776
        %v2844 = vunpack.c.l.b16 %v2704
        %v2845 = vunpack.c.h.b16 %v2704
        %v2846 = vunpack.c.l.b16 %v2705
        %v2847 = vunpack.c.h.b16 %v2705
        %v2848 = vunpack.c.l.b16 %v2706
        %v2849 = vunpack.c.h.b16 %v2706
        %v2850 = vunpack.c.l.b16 %v2707
        %v2851 = vunpack.c.h.b16 %v2707
        %v2852 = vunpack.c.l.b16 %v2708
        %v2853 = vunpack.c.h.b16 %v2708
        %v2854 = vunpack.c.l.b16 %v2709
        %v2855 = vunpack.c.h.b16 %v2709
        %v2856 = vunpack.c.l.b16 %v2710
        %v2857 = vunpack.c.h.b16 %v2710
        %v2858 = vunpack.c.l.b16 %v2711
        %v2859 = vunpack.c.h.b16 %v2711
        %v2860 = vunpack.c.l.b16 %v2712
        %v2861 = vunpack.c.h.b16 %v2712
        %v2862 = vunpack.c.l.b16 %v2713
        %v2863 = vunpack.c.h.b16 %v2713
        %v2864 = vunpack.c.l.b16 %v2714
        %v2865 = vunpack.c.h.b16 %v2714
        %v2866 = vunpack.c.l.b16 %v2715
        %v2867 = vunpack.c.h.b16 %v2715
        %v2868 = vunpack.c.l.b16 %v2716
        %v2869 = vunpack.c.h.b16 %v2716
        %v2870 = vunpack.c.l.b16 %v2717
        %v2871 = vunpack.c.h.b16 %v2717
        %v2872 = vunpack.c.l.b16 %v2718
        %v2873 = vunpack.c.h.b16 %v2718
        %v2874 = vunpack.c.l.b16 %v2719
        %v2875 = vunpack.c.h.b16 %v2719
        %v2876 = vunpack.c.l.b16 %v2720
        %v2877 = vunpack.c.h.b16 %v2720
        %v2878 = vunpack.c.l.b16 %v2721
        %v2879 = vunpack.c.h.b16 %v2721
        %v2880 = vunpack.c.l.b16 %v2722
        %v2881 = vunpack.c.h.b16 %v2722
        %v2882 = vunpack.c.l.b16 %v2723
        %v2883 = vunpack.c.h.b16 %v2723
        %v2884 = vunpack.c.l.b16 %v2724
        %v2885 = vunpack.c.h.b16 %v2724
        %v2886 = vunpack.c.l.b16 %v2725
        %v2887 = vunpack.c.h.b16 %v2725
        %v2888 = vunpack.c.l.b16 %v2726
        %v2889 = vunpack.c.h.b16 %v2726
        %v2890 = vunpack.c.l.b16 %v2727
        %v2891 = vunpack.c.h.b16 %v2727
        %v2892 = vunpack.c.l.b16 %v2728
        %v2893 = vunpack.c.h.b16 %v2728
        %v2894 = vunpack.c.l.b16 %v2729
        %v2895 = vunpack.c.h.b16 %v2729
        %v2896 = vunpack.c.l.b16 %v2730
        %v2897 = vunpack.c.h.b16 %v2730
        %v2898 = vunpack.c.l.b16 %v2731
        %v2899 = vunpack.c.h.b16 %v2731
        %v2900 = vunpack.c.l.b16 %v2732
        %v2901 = vunpack.c.h.b16 %v2732
        %v2902 = vunpack.c.l.b16 %v2733
        %v2903 = vunpack.c.h.b16 %v2733
        %v2904 = vunpack.c.l.b16 %v2734
        %v2905 = vunpack.c.h.b16 %v2734
        %v2906 = vunpack.c.l.b16 %v2735
        %v2907 = vunpack.c.h.b16 %v2735
        %v2908 = vunpack.c.l.b16 %v2736
        %v2909 = vunpack.c.h.b16 %v2736
        %v2910 = vunpack.c.l.b16 %v2737
        %v2911 = vunpack.c.h.b16 %v2737
        %v2912 = vunpack.c.l.b16 %v2738
        %v2913 = vunpack.c.h.b16 %v2738
        %v2914 = vunpack.c.l.b16 %v2739
        %v2915 = vunpack.c.h.b16 %v2739
        %v2916 = vunpack.c.l.b16 %v2740
        %v2917 = vunpack.c.h.b16 %v2740
        %v2918 = vunpack.c.l.b16 %v2741
        %v2919 = vunpack.c.h.b16 %v2741
        %v2920 = vunpack.c.l.b16 %v2742
        %v2921 = vunpack.c.h.b16 %v2742
        %v2922 = vunpack.c.l.b16 %v2743
        %v2923 = vunpack.c.h.b16 %v2743
        %v2924 = vunpack.c.l.b16 %v2744
        %v2925 = vunpack.c.h.b16 %v2744
        %v2926 = vunpack.c.l.b16 %v2745
        %v2927 = vunpack.c.h.b16 %v2745
        %v2928 = vunpack.c.l.b16 %v2746
        %v2929 = vunpack.c.h.b16 %v2746
        %v2930 = vunpack.c.l.b16 %v2747
        %v2931 = vunpack.c.h.b16 %v2747
        %v2932 = vunpack.c.l.b16 %v2748
        %v2933 = vunpack.c.h.b16 %v2748
        %v2934 = vunpack.c.l.b16 %v2749
        %v2935 = vunpack.c.h.b16 %v2749
        %v2936 = vunpack.c.l.b16 %v2750
        %v2937 = vunpack.c.h.b16 %v2750
        %v2938 = vunpack.c.l.b16 %v2751
        %v2939 = vunpack.c.h.b16 %v2751
        %v2940 = vunpack.c.l.b16 %v2752
        %v2941 = vunpack.c.h.b16 %v2752
        %v2942 = vunpack.c.l.b16 %v2753
        %v2943 = vunpack.c.h.b16 %v2753
        %v2944 = vunpack.c.l.b16 %v2754
        %v2945 = vunpack.c.h.b16 %v2754
        %v2946 = vunpack.c.l.b16 %v2755
        %v2947 = vunpack.c.h.b16 %v2755
        %v2948 = vunpack.c.l.b16 %v2756
        %v2949 = vunpack.c.h.b16 %v2756
        %v2950 = vunpack.c.l.b16 %v2757
        %v2951 = vunpack.c.h.b16 %v2757
        %v2952 = vunpack.c.l.b16 %v2758
        %v2953 = vunpack.c.h.b16 %v2758
        %v2954 = vunpack.c.l.b16 %v2759
        %v2955 = vunpack.c.h.b16 %v2759
        %v2956 = vunpack.c.l.b16 %v2760
        %v2957 = vunpack.c.h.b16 %v2760
        %v2958 = vunpack.c.l.b16 %v2761
        %v2959 = vunpack.c.h.b16 %v2761
        %v2960 = vunpack.c.l.b16 %v2762
        %v2961 = vunpack.c.h.b16 %v2762
        %v2962 = vunpack.c.l.b16 %v2763
        %v2963 = vunpack.c.h.b16 %v2763
        %v2964 = vunpack.c.l.b16 %v2764
        %v2965 = vunpack.c.h.b16 %v2764
        %v2966 = vunpack.c.l.b16 %v2765
        %v2967 = vunpack.c.h.b16 %v2765
        %v2968 = vunpack.c.l.b16 %v2766
        %v2969 = vunpack.c.h.b16 %v2766
        %v2970 = vunpack.c.l.b16 %v2767
        %v2971 = vunpack.c.h.b16 %v2767
        %v2972 = vpack.c.b16 %v2846, %v2844
        %v2973 = vpack.c.b16 %v2847, %v2845
        %v2974 = vpack.c.b16 %v2850, %v2848
        %v2975 = vpack.c.b16 %v2851, %v2849
        %v2976 = vpack.c.b16 %v2854, %v2852
        %v2977 = vpack.c.b16 %v2855, %v2853
        %v2978 = vpack.c.b16 %v2858, %v2856
        %v2979 = vpack.c.b16 %v2859, %v2857
        %v2980 = vpack.c.b16 %v2862, %v2860
        %v2981 = vpack.c.b16 %v2863, %v2861
        %v2982 = vpack.c.b16 %v2866, %v2864
        %v2983 = vpack.c.b16 %v2867, %v2865
        %v2984 = vpack.c.b16 %v2870, %v2868
        %v2985 = vpack.c.b16 %v2871, %v2869
        %v2986 = vpack.c.b16 %v2874, %v2872
        %v2987 = vpack.c.b16 %v2875, %v2873
        %v2988 = vpack.c.b16 %v2878, %v2876
        %v2989 = vpack.c.b16 %v2879, %v2877
        %v2990 = vpack.c.b16 %v2882, %v2880
        %v2991 = vpack.c.b16 %v2883, %v2881
        %v2992 = vpack.c.b16 %v2886, %v2884
        %v2993 = vpack.c.b16 %v2887, %v2885
        %v2994 = vpack.c.b16 %v2890, %v2888
        %v2995 = vpack.c.b16 %v2891, %v2889
        %v2996 = vpack.c.b16 %v2894, %v2892
        %v2997 = vpack.c.b16 %v2895, %v2893
        %v2998 = vpack.c.b16 %v2898, %v2896
        %v2999 = vpack.c.b16 %v2899, %v2897
        %v3000 = vpack.c.b16 %v2902, %v2900
        %v3001 = vpack.c.b16 %v2903, %v2901
        %v3002 = vpack.c.b16 %v2906, %v2904
        %v3003 = vpack.c.b16 %v2907, %v2905
        %v3004 = vpack.c.b16 %v2910, %v2908
        %v3005 = vpack.c.b16 %v2911, %v2909
        %v3006 = vpack.c.b16 %v2914, %v2912
        %v3007 = vpack.c.b16 %v2915, %v2913
        %v3008 = vpack.c.b16 %v2918, %v2916
        %v3009 = vpack.c.b16 %v2919, %v2917
        %v3010 = vpack.c.b16 %v2922, %v2920
        %v3011 = vpack.c.b16 %v2923, %v2921
        %v3012 = vpack.c.b16 %v2926, %v2924
        %v3013 = vpack.c.b16 %v2927, %v2925
        %v3014 = vpack.c.b16 %v2930, %v2928
        %v3015 = vpack.c.b16 %v2931, %v2929
        %v3016 = vpack.c.b16 %v2934, %v2932
        %v3017 = vpack.c.b16 %v2935, %v2933
        %v3018 = vpack.c.b16 %v2938, %v2936
        %v3019 = vpack.c.b16 %v2939, %v2937
        %v3020 = vpack.c.b16 %v2942, %v2940
        %v3021 = vpack.c.b16 %v2943, %v2941
        %v3022 = vpack.c.b16 %v2946, %v2944
        %v3023 = vpack.c.b16 %v2947, %v2945
        %v3024 = vpack.c.b16 %v2950, %v2948
        %v3025 = vpack.c.b16 %v2951, %v2949
        %v3026 = vpack.c.b16 %v2954, %v2952
        %v3027 = vpack.c.b16 %v2955, %v2953
        %v3028 = vpack.c.b16 %v2958, %v2956
        %v3029 = vpack.c.b16 %v2959, %v2957
        %v3030 = vpack.c.b16 %v2962, %v2960
        %v3031 = vpack.c.b16 %v2963, %v2961
        %v3032 = vpack.c.b16 %v2966, %v2964
        %v3033 = vpack.c.b16 %v2967, %v2965
        %v3034 = vpack.c.b16 %v2970, %v2968
        %v3035 = vpack.c.b16 %v2971, %v2969
        %3100 = vmatprep.subr.bf16.mxu0 %v2973
        %3101 = vmatpush1.bf16.msra.mxu0 %v2972
        %3102 = vmatprep.subr.bf16.mxu0 %v2975
        %3103 = vmatpush1.bf16.msra.mxu0 %v2974
        %3104 = vmatprep.subr.bf16.mxu0 %v2977
        %3105 = vmatpush1.bf16.msra.mxu0 %v2976
        %3106 = vmatprep.subr.bf16.mxu0 %v2979
        %3107 = vmatpush1.bf16.msra.mxu0 %v2978
        %3108 = vmatprep.subr.bf16.mxu0 %v2981
        %3109 = vmatpush1.bf16.msra.mxu0 %v2980
        %3110 = vmatprep.subr.bf16.mxu0 %v2983
        %3111 = vmatpush1.bf16.msra.mxu0 %v2982
        %3112 = vmatprep.subr.bf16.mxu0 %v2985
        %3113 = vmatpush1.bf16.msra.mxu0 %v2984
        %3114 = vmatprep.subr.bf16.mxu0 %v2987
        %3115 = vmatpush1.bf16.msra.mxu0 %v2986
        %3116 = vmatprep.subr.bf16.mxu0 %v2989
        %3117 = vmatpush1.bf16.msra.mxu0 %v2988
        %3118 = vmatprep.subr.bf16.mxu0 %v2991
        %3119 = vmatpush1.bf16.msra.mxu0 %v2990
        %3120 = vmatprep.subr.bf16.mxu0 %v2993
        %3121 = vmatpush1.bf16.msra.mxu0 %v2992
        %3122 = vmatprep.subr.bf16.mxu0 %v2995
        %3123 = vmatpush1.bf16.msra.mxu0 %v2994
        %3124 = vmatprep.subr.bf16.mxu0 %v2997
        %3125 = vmatpush1.bf16.msra.mxu0 %v2996
        %3126 = vmatprep.subr.bf16.mxu0 %v2999
        %3127 = vmatpush1.bf16.msra.mxu0 %v2998
        %3128 = vmatprep.subr.bf16.mxu0 %v3001
        %3129 = vmatpush1.bf16.msra.mxu0 %v3000
        %3130 = vmatprep.subr.bf16.mxu0 %v3003
        %3131 = vmatpush1.bf16.msra.mxu0 %v3002
        %3132 = vmatprep.mubr.bf16.mxu0 %v2701
        %3133 = vmatmul.mubr.bf16.gmra.mrb[0].mxu0 %v2700
        %v3134 = vpop.f32.mrb[0].mxu0
        %v3135 = vadd.f32 %v2773, %v3134
        %v3136 = vpop.f32.mrb[0].mxu0
        %v3137 = vadd.f32 %v2777, %v3136
        %v3138 = vpop.f32.mrb[0].mxu0
        %v3139 = vpop.f32.mrb[0].mxu0
        %3140 = vdwg.mxu0
        %3141 = vmatprep.subr.bf16.mxu0 %v3005
        %3142 = vmatpush1.bf16.msra.mxu0 %v3004
        %3143 = vmatprep.subr.bf16.mxu0 %v3007
        %3144 = vmatpush1.bf16.msra.mxu0 %v3006
        %3145 = vmatprep.subr.bf16.mxu0 %v3009
        %3146 = vmatpush1.bf16.msra.mxu0 %v3008
        %3147 = vmatprep.subr.bf16.mxu0 %v3011
        %3148 = vmatpush1.bf16.msra.mxu0 %v3010
        %3149 = vmatprep.subr.bf16.mxu0 %v3013
        %3150 = vmatpush1.bf16.msra.mxu0 %v3012
        %3151 = vmatprep.subr.bf16.mxu0 %v3015
        %3152 = vmatpush1.bf16.msra.mxu0 %v3014
        %3153 = vmatprep.subr.bf16.mxu0 %v3017
        %3154 = vmatpush1.bf16.msra.mxu0 %v3016
        %3155 = vmatprep.subr.bf16.mxu0 %v3019
        %3156 = vmatpush1.bf16.msra.mxu0 %v3018
        %3157 = vmatprep.subr.bf16.mxu0 %v3021
        %3158 = vmatpush1.bf16.msra.mxu0 %v3020
        %3159 = vmatprep.subr.bf16.mxu0 %v3023
        %3160 = vmatpush1.bf16.msra.mxu0 %v3022
        %3161 = vmatprep.subr.bf16.mxu0 %v3025
        %3162 = vmatpush1.bf16.msra.mxu0 %v3024
        %3163 = vmatprep.subr.bf16.mxu0 %v3027
        %3164 = vmatpush1.bf16.msra.mxu0 %v3026
        %3165 = vmatprep.subr.bf16.mxu0 %v3029
        %3166 = vmatpush1.bf16.msra.mxu0 %v3028
        %3167 = vmatprep.subr.bf16.mxu0 %v3031
        %3168 = vmatpush1.bf16.msra.mxu0 %v3030
        %3169 = vmatprep.subr.bf16.mxu0 %v3033
        %3170 = vmatpush1.bf16.msra.mxu0 %v3032
        %3171 = vmatprep.subr.bf16.mxu0 %v3035
        %3172 = vmatpush1.bf16.msra.mxu0 %v3034
        %3173 = vmatprep.mubr.bf16.mxu0 %v2703
        %3174 = vmatmul.mubr.bf16.gmra.mrb[0].mxu0 %v2702
        %v3175 = vpop.f32.mrb[0].mxu0
        %v3176 = vadd.f32 %v3135, %v3175
        %v3177 = vpop.f32.mrb[0].mxu0
        %v3178 = vadd.f32 %v3137, %v3177
        %v3179 = vpop.f32.mrb[0].mxu0
        %v3180 = vpop.f32.mrb[0].mxu0
        %3181 = vdwg.mxu0
        %v3182 = vmax.f32 %v3176, 0.0
        %v3183 = vmax.f32 %v3178, 0.0
        %v3184 = vpack.c.bf16 %v3182, %v3182
        %v3185 = vpack.c.bf16 %v3183, %v3183
        %v3186 = vld [vmem:[%s5] sm:$0xf]
        %v3187 = vld [vmem:[%s5 + $0x4] sm:$0xf]
        %v3188 = vld [vmem:[%s5 + $0x8] sm:$0xf]
        %v3189 = vld [vmem:[%s5 + $0xc] sm:$0xf]
        %v3190 = vld [vmem:[%s5 + $0x10] sm:$0xf]
        %v3191 = vld [vmem:[%s5 + $0x14] sm:$0xf]
        %v3192 = vld [vmem:[%s5 + $0x18] sm:$0xf]
        %v3193 = vld [vmem:[%s5 + $0x1c] sm:$0xf]
        %v3194 = vld [vmem:[%s5 + $0x20] sm:$0xf]
        %v3195 = vld [vmem:[%s5 + $0x24] sm:$0xf]
        %v3196 = vld [vmem:[%s5 + $0x28] sm:$0xf]
        %v3197 = vld [vmem:[%s5 + $0x2c] sm:$0xf]
        %v3198 = vld [vmem:[%s5 + $0x30] sm:$0xf]
        %v3199 = vld [vmem:[%s5 + $0x34] sm:$0xf]
        %v3200 = vld [vmem:[%s5 + $0x38] sm:$0xf]
        %v3201 = vld [vmem:[%s5 + $0x3c] sm:$0xf]
        %v3202 = vld [vmem:[%s5 + $0x40] sm:$0xf]
        %v3203 = vld [vmem:[%s5 + $0x44] sm:$0xf]
        %v3204 = vld [vmem:[%s5 + $0x48] sm:$0xf]
        %v3205 = vld [vmem:[%s5 + $0x4c] sm:$0xf]
        %v3206 = vld [vmem:[%s5 + $0x50] sm:$0xf]
        %v3207 = vld [vmem:[%s5 + $0x54] sm:$0xf]
        %v3208 = vld [vmem:[%s5 + $0x58] sm:$0xf]
        %v3209 = vld [vmem:[%s5 + $0x5c] sm:$0xf]
        %v3210 = vld [vmem:[%s5 + $0x60] sm:$0xf]
        %v3211 = vld [vmem:[%s5 + $0x64] sm:$0xf]
        %v3212 = vld [vmem:[%s5 + $0x68] sm:$0xf]
        %v3213 = vld [vmem:[%s5 + $0x6c] sm:$0xf]
        %v3214 = vld [vmem:[%s5 + $0x70] sm:$0xf]
        %v3215 = vld [vmem:[%s5 + $0x74] sm:$0xf]
        %v3216 = vld [vmem:[%s5 + $0x78] sm:$0xf]
        %v3217 = vld [vmem:[%s5 + $0x7c] sm:$0xf]
        %v3218 = vld [vmem:[%s6] sm:$0x1]
        %v3220 = vlaneseq
        %v3221 = vshrl.u32 %v3220, 7
        %v3222 = vsub.s32 0, %v3221
        %v3223 = vrot.slane %v3218, %v3222
        %v3257 = vunpack.c.l.b16 %v3186
        %v3258 = vunpack.c.l.b16 %v3187
        %v3259 = vunpack.c.l.b16 %v3188
        %v3260 = vunpack.c.l.b16 %v3189
        %v3261 = vunpack.c.l.b16 %v3190
        %v3262 = vunpack.c.l.b16 %v3191
        %v3263 = vunpack.c.l.b16 %v3192
        %v3264 = vunpack.c.l.b16 %v3193
        %v3265 = vunpack.c.l.b16 %v3194
        %v3266 = vunpack.c.l.b16 %v3195
        %v3267 = vunpack.c.l.b16 %v3196
        %v3268 = vunpack.c.l.b16 %v3197
        %v3269 = vunpack.c.l.b16 %v3198
        %v3270 = vunpack.c.l.b16 %v3199
        %v3271 = vunpack.c.l.b16 %v3200
        %v3272 = vunpack.c.l.b16 %v3201
        %v3273 = vunpack.c.l.b16 %v3202
        %v3274 = vunpack.c.l.b16 %v3203
        %v3275 = vunpack.c.l.b16 %v3204
        %v3276 = vunpack.c.l.b16 %v3205
        %v3277 = vunpack.c.l.b16 %v3206
        %v3278 = vunpack.c.l.b16 %v3207
        %v3279 = vunpack.c.l.b16 %v3208
        %v3280 = vunpack.c.l.b16 %v3209
        %v3281 = vunpack.c.l.b16 %v3210
        %v3282 = vunpack.c.l.b16 %v3211
        %v3283 = vunpack.c.l.b16 %v3212
        %v3284 = vunpack.c.l.b16 %v3213
        %v3285 = vunpack.c.l.b16 %v3214
        %v3286 = vunpack.c.l.b16 %v3215
        %v3287 = vunpack.c.l.b16 %v3216
        %v3288 = vunpack.c.l.b16 %v3217
        %v3289 = vpack.c.b16 %v3258, %v3257
        %v3290 = vpack.c.b16 %v3260, %v3259
        %v3291 = vpack.c.b16 %v3262, %v3261
        %v3292 = vpack.c.b16 %v3264, %v3263
        %v3293 = vpack.c.b16 %v3266, %v3265
        %v3294 = vpack.c.b16 %v3268, %v3267
        %v3295 = vpack.c.b16 %v3270, %v3269
        %v3296 = vpack.c.b16 %v3272, %v3271
        %v3297 = vpack.c.b16 %v3274, %v3273
        %v3298 = vpack.c.b16 %v3276, %v3275
        %v3299 = vpack.c.b16 %v3278, %v3277
        %v3300 = vpack.c.b16 %v3280, %v3279
        %v3301 = vpack.c.b16 %v3282, %v3281
        %v3302 = vpack.c.b16 %v3284, %v3283
        %v3303 = vpack.c.b16 %v3286, %v3285
        %v3304 = vpack.c.b16 %v3288, %v3287
        %3321 = vmatprep.subr.bf16.mxu0 0
        %3322 = vmatpush1.bf16.msra.mxu0 %v3289
        %3323 = vmatprep.subr.bf16.mxu0 0
        %3324 = vmatpush1.bf16.msra.mxu0 %v3290
        %3325 = vmatprep.subr.bf16.mxu0 0
        %3326 = vmatpush1.bf16.msra.mxu0 %v3291
        %3327 = vmatprep.subr.bf16.mxu0 0
        %3328 = vmatpush1.bf16.msra.mxu0 %v3292
        %3329 = vmatprep.subr.bf16.mxu0 0
        %3330 = vmatpush1.bf16.msra.mxu0 %v3293
        %3331 = vmatprep.subr.bf16.mxu0 0
        %3332 = vmatpush1.bf16.msra.mxu0 %v3294
        %3333 = vmatprep.subr.bf16.mxu0 0
        %3334 = vmatpush1.bf16.msra.mxu0 %v3295
        %3335 = vmatprep.subr.bf16.mxu0 0
        %3336 = vmatpush1.bf16.msra.mxu0 %v3296
        %3337 = vmatprep.subr.bf16.mxu0 0
        %3338 = vmatpush1.bf16.msra.mxu0 %v3297
        %3339 = vmatprep.subr.bf16.mxu0 0
        %3340 = vmatpush1.bf16.msra.mxu0 %v3298
        %3341 = vmatprep.subr.bf16.mxu0 0
        %3342 = vmatpush1.bf16.msra.mxu0 %v3299
        %3343 = vmatprep.subr.bf16.mxu0 0
        %3344 = vmatpush1.bf16.msra.mxu0 %v3300
        %3345 = vmatprep.subr.bf16.mxu0 0
        %3346 = vmatpush1.bf16.msra.mxu0 %v3301
        %3347 = vmatprep.subr.bf16.mxu0 0
        %3348 = vmatpush1.bf16.msra.mxu0 %v3302
        %3349 = vmatprep.subr.bf16.mxu0 0
        %3350 = vmatpush1.bf16.msra.mxu0 %v3303
        %3351 = vmatprep.subr.bf16.mxu0 0
        %3352 = vmatpush1.bf16.msra.mxu0 %v3304
        %3353 = vmatprep.mubr.bf16.mxu0 %v3185
        %3354 = vmatmul.mubr.bf16.gmra.mrb[0].mxu0 %v3184
        %v3355 = vpop.f32.mrb[0].mxu0
        %v3356 = vadd.f32 %v3223, %v3355
        %v3357 = vpop.f32.mrb[0].mxu0
        %v3358 = vpop.f32.mrb[0].mxu0
        %v3359 = vpop.f32.mrb[0].mxu0
        %3360 = vdwg.mxu0
        %3361 = vst [vmem:[%s7] sm:$0xff] %v3356
      $region56: #{qnetwork_forward.5} parent=47 // pred_fallthru
        _
      // Predicated region
      $region57: #{qnetwork_forward.5} parent=47 // pred_check
        %p3362 = pneg %p188
      $region58: #{qnetwork_forward.5} parent=47 // pred_check_branch
        %3364 = sbr.rel (%p3362) target = $region60
      $region59: #{qnetwork_forward.5} parent=47 // pred_region
        _
      $region60: #{qnetwork_forward.5} parent=47 // pred_fallthru
        _
      // Predicated region
      $region61: #{qnetwork_forward.5} parent=47 // pred_check
        %p3365 = pneg %p188
      $region62: #{qnetwork_forward.5} parent=47 // pred_check_branch
        %3367 = sbr.rel (%p3365) target = $region64
      $region63: #{qnetwork_forward.5} parent=47 // pred_region
        _
      $region64: #{qnetwork_forward.5} parent=47 // pred_fallthru
        _
    $region48: #{qnetwork_forward.5} parent=5 // pred_fallthru
      _
    %p3368 = scmp.le.s32.totalorder 2, %s13
    // Predicated region
    $region65: #{qnetwork_forward.5} parent=5 // pred_check
      %p3369 = pneg %p3368
    $region66: #{qnetwork_forward.5} parent=5 // pred_check_branch
      %3371 = sbr.rel (%p3369) target = $region68
    $region67: #{qnetwork_forward.5} parent=5 // pred_region
      %s3372 = ssub.s32 %s13, 2
    $region68: #{qnetwork_forward.5} parent=5 // pred_fallthru
      _
  $region6: #{qnetwork_forward.5} parent=0 // loop_footer
    %s17 = sadd.s32 1, %s13
  $region7: #{qnetwork_forward.5} parent=0 // loop_footer_branch
    %12 = sbr.rel target = $region3
  $region8: #{qnetwork_forward.5} parent=0 // loop_exit
    _

</llo_original>
